<compile_context>
chip_gen: v6e
topology: v6e:2x2x1
jax: 0.10.0
libtpu: 0.0.40
codegen_flags: <defaults>
</compile_context>

<pallas_src>
import jax
import jax.numpy as jnp
import numpy as np
from jax.experimental import pallas as pl
from jax.experimental.pallas import tpu as pltpu

NEG_SLOPE = 0.01  # nn.LeakyReLU default negative_slope


def _leaky(v):
    return jnp.where(v > 0, v, NEG_SLOPE * v)


def down_kernel(x_ref, w1_ref, b1_ref, w2_ref, b2_ref, o_ref):
    # x_ref : (B, H, W, Cin)     block of B images
    # w1_ref: (3, 3, Cin, Cmid)  ; b1_ref: (1, Cmid)
    # w2_ref: (3, 3, Cmid, Cout) ; b2_ref: (1, Cout)
    # o_ref : (B, H//2, W, Cout)
    B, H, W, Cin = x_ref.shape
    Cmid = w1_ref.shape[3]
    Cout = w2_ref.shape[3]
    Hp = H // 2
    M = B * Hp * W

    # ---- MaxPool2d((2, 1)): pairwise max over adjacent rows (vectorized) ----
    xr = x_ref[...].reshape(B, Hp, 2, W, Cin)
    pooled = jnp.maximum(xr[:, :, 0], xr[:, :, 1])          # (B, Hp, W, Cin)

    # ---- zero-padding helper (pad H and W by 1 each side, value-level) ----
    def pad_hw(t):
        c = t.shape[-1]
        zrow = jnp.zeros((B, 1, W, c), t.dtype)
        t = jnp.concatenate([zrow, t, zrow], axis=1)        # (B, Hp+2, W,   c)
        zcol = jnp.zeros((B, Hp + 2, 1, c), t.dtype)
        return jnp.concatenate([zcol, t, zcol], axis=2)     # (B, Hp+2, W+2, c)

    # ---- 3x3 conv as 9 whole-block MXU matmuls of (M, Ci) @ (Ci, Co) ----
    def conv3x3(p, w_ref, ci, co):
        acc = jnp.zeros((M, co), jnp.float32)
        for dy in range(3):
            for dx in range(3):
                win = p[:, dy:dy + Hp, dx:dx + W, :].reshape(M, ci)
                acc = acc + jnp.dot(win, w_ref[dy, dx],
                                    preferred_element_type=jnp.float32)
        return acc

    b1 = b1_ref[...]                                        # (1, Cmid), hoisted
    b2 = b2_ref[...]                                        # (1, Cout), hoisted

    y1 = _leaky(conv3x3(pad_hw(pooled), w1_ref, Cin, Cmid) + b1)          # (M, Cmid)
    y2 = _leaky(conv3x3(pad_hw(y1.reshape(B, Hp, W, Cmid)), w2_ref,
                        Cmid, Cout) + b2)                                 # (M, Cout)

    o_ref[...] = y2.reshape(B, Hp, W, Cout).astype(o_ref.dtype)


def down_forward(x_nchw, w1_hwio, b1, w2_hwio, b2, *, images_per_step=1):
    """Forward pass of `Down`. x_nchw: (N, Cin, H, W) float32."""
    x = jnp.transpose(x_nchw, (0, 2, 3, 1)).astype(jnp.float32)   # NCHW -> NHWC
    N, H, W, Cin = x.shape
    assert H % 2 == 0, "MaxPool2d((2,1)) expects even H"
    assert N % images_per_step == 0
    Cmid = w1_hwio.shape[3]
    Cout = w2_hwio.shape[3]
    Hp = H // 2
    B = images_per_step
    b1_2d = b1.reshape(1, Cmid).astype(jnp.float32)
    b2_2d = b2.reshape(1, Cout).astype(jnp.float32)

    out_nhwc = pl.pallas_call(
        down_kernel,
        out_shape=jax.ShapeDtypeStruct((N, Hp, W, Cout), jnp.float32),
        grid_spec=pltpu.PrefetchScalarGridSpec(
            num_scalar_prefetch=0,
            grid=(N // B,),
            in_specs=[
                pl.BlockSpec((B, H, W, Cin), lambda n: (n, 0, 0, 0)),
                pl.BlockSpec((3, 3, Cin, Cmid), lambda n: (0, 0, 0, 0)),
                pl.BlockSpec((1, Cmid), lambda n: (0, 0)),
                pl.BlockSpec((3, 3, Cmid, Cout), lambda n: (0, 0, 0, 0)),
                pl.BlockSpec((1, Cout), lambda n: (0, 0)),
            ],
            out_specs=pl.BlockSpec((B, Hp, W, Cout), lambda n: (n, 0, 0, 0)),
        ),
        compiler_params=pltpu.CompilerParams(
            # batch axis has no cross-step dependence -> megacore-shardable
            dimension_semantics=("parallel",)),
    )(x, w1_hwio.astype(jnp.float32), b1_2d, w2_hwio.astype(jnp.float32), b2_2d)

    return jnp.transpose(out_nhwc, (0, 3, 1, 2))                  # NHWC -> NCHW


def _reference(x_nchw, w1_hwio, b1, w2_hwio, b2):
    """Pure-JAX reference of the same forward pass (for validation)."""
    x = jnp.transpose(x_nchw, (0, 2, 3, 1))
    pooled = jnp.maximum(x[:, 0::2], x[:, 1::2])                  # MaxPool2d((2,1))
    dn = ("NHWC", "HWIO", "NHWC")
    y = jax.lax.conv_general_dilated(pooled, w1_hwio, (1, 1), "SAME",
                                     dimension_numbers=dn) + b1
    y = jnp.where(y > 0, y, NEG_SLOPE * y)
    y = jax.lax.conv_general_dilated(y, w2_hwio, (1, 1), "SAME",
                                     dimension_numbers=dn) + b2
    y = jnp.where(y > 0, y, NEG_SLOPE * y)
    return jnp.transpose(y, (0, 3, 1, 2))


if __name__ == "__main__":
    # Small shapes consistent with the module: Down(in_channels=4, out_channels=8)
    N, Cin, H, W = 2, 4, 16, 16
    Cout = 8
    Cmid = Cout  # DoubleConv default: mid_channels = out_channels

    key = jax.random.PRNGKey(0)
    kx, kw1, kb1, kw2, kb2 = jax.random.split(key, 5)

    x = jax.random.normal(kx, (N, Cin, H, W), dtype=jnp.float32)
    # Deterministic synthetic parameters (HWIO layout); PyTorch shapes would be
    # (Cmid, Cin, 3, 3) / (Cout, Cmid, 3, 3) — equivalent up to transpose.
    w1 = jax.random.normal(kw1, (3, 3, Cin, Cmid), dtype=jnp.float32) * 0.1
    b1 = jax.random.normal(kb1, (Cmid,), dtype=jnp.float32) * 0.1
    w2 = jax.random.normal(kw2, (3, 3, Cmid, Cout), dtype=jnp.float32) * 0.1
    b2 = jax.random.normal(kb2, (Cout,), dtype=jnp.float32) * 0.1

    out = down_forward(x, w1, b1, w2, b2)
    out = jax.block_until_ready(out)

    ref = jax.block_until_ready(_reference(x, w1, b1, w2, b2))
    assert out.shape == (N, Cout, H // 2, W), out.shape
    np.testing.assert_allclose(np.asarray(out), np.asarray(ref),
                               rtol=1e-4, atol=1e-4)

    print("KERNEL_OK")
</pallas_src>

<mosaic_0001>
module attributes {stable_mosaic.version = 11 : i64} {
  func.func @down_kernel(%arg0: i32, %arg1: memref<1x16x16x4xf32, #tpu.memory_space<vmem>>, %arg2: memref<3x3x4x8xf32, #tpu.memory_space<vmem>>, %arg3: memref<1x8xf32, #tpu.memory_space<vmem>>, %arg4: memref<3x3x8x8xf32, #tpu.memory_space<vmem>>, %arg5: memref<1x8xf32, #tpu.memory_space<vmem>>, %arg6: memref<1x8x16x8xf32, #tpu.memory_space<vmem>>) attributes {dimension_semantics = [#tpu.dimension_semantics<parallel>], iteration_bounds = array<i64: 2>, scalar_prefetch = 0 : i64, scratch_operands = 0 : i64, tpu.core_type = #tpu.core_type<tc>, window_params = [{transform_indices = @transform_0, window_bounds = array<i64: 1, 16, 16, 4>}, {pipeline_mode = #tpu.pipeline_mode<synchronous>, transform_indices = @transform_1, window_bounds = array<i64: 3, 3, 4, 8>}, {pipeline_mode = #tpu.pipeline_mode<synchronous>, transform_indices = @transform_2, window_bounds = array<i64: 1, 8>}, {pipeline_mode = #tpu.pipeline_mode<synchronous>, transform_indices = @transform_3, window_bounds = array<i64: 3, 3, 8, 8>}, {pipeline_mode = #tpu.pipeline_mode<synchronous>, transform_indices = @transform_4, window_bounds = array<i64: 1, 8>}, {transform_indices = @transform_5, window_bounds = array<i64: 1, 8, 16, 8>}]} {
    %c0 = arith.constant 0 : index
    %c0_0 = arith.constant 0 : index
    %c0_1 = arith.constant 0 : index
    %c0_2 = arith.constant 0 : index
    %0 = vector.load %arg1[%c0, %c0_0, %c0_1, %c0_2] : memref<1x16x16x4xf32, #tpu.memory_space<vmem>>, vector<1x16x16x4xf32>
    %1 = vector.shape_cast %0 : vector<1x16x16x4xf32> to vector<1x8x2x16x4xf32>
    %2 = vector.extract_strided_slice %1 {offsets = [0, 0, 0, 0, 0], sizes = [1, 8, 1, 16, 4], strides = [1, 1, 1, 1, 1]} : vector<1x8x2x16x4xf32> to vector<1x8x1x16x4xf32>
    %3 = vector.shape_cast %2 : vector<1x8x1x16x4xf32> to vector<1x8x16x4xf32>
    %4 = vector.extract_strided_slice %1 {offsets = [0, 0, 1, 0, 0], sizes = [1, 8, 1, 16, 4], strides = [1, 1, 1, 1, 1]} : vector<1x8x2x16x4xf32> to vector<1x8x1x16x4xf32>
    %5 = vector.shape_cast %4 : vector<1x8x1x16x4xf32> to vector<1x8x16x4xf32>
    %6 = arith.maximumf %3, %5 : vector<1x8x16x4xf32>
    %c0_3 = arith.constant 0 : index
    %c0_4 = arith.constant 0 : index
    %7 = vector.load %arg3[%c0_3, %c0_4] : memref<1x8xf32, #tpu.memory_space<vmem>>, vector<1x8xf32>
    %c0_5 = arith.constant 0 : index
    %c0_6 = arith.constant 0 : index
    %8 = vector.load %arg5[%c0_5, %c0_6] : memref<1x8xf32, #tpu.memory_space<vmem>>, vector<1x8xf32>
    %cst = arith.constant 0.000000e+00 : f32
    %9 = vector.broadcast %cst : f32 to vector<1x1x16x4xf32>
    %10 = tpu.concatenate %9, %6, %9 in 1 : vector<1x1x16x4xf32>, vector<1x8x16x4xf32>, vector<1x1x16x4xf32> -> vector<1x10x16x4xf32>
    %cst_7 = arith.constant 0.000000e+00 : f32
    %11 = vector.broadcast %cst_7 : f32 to vector<1x10x1x4xf32>
    %12 = tpu.concatenate %11, %10, %11 in 2 : vector<1x10x1x4xf32>, vector<1x10x16x4xf32>, vector<1x10x1x4xf32> -> vector<1x10x18x4xf32>
    %cst_8 = arith.constant 0.000000e+00 : f32
    %13 = vector.broadcast %cst_8 : f32 to vector<128x8xf32>
    %14 = vector.extract_strided_slice %12 {offsets = [0, 0, 0, 0], sizes = [1, 8, 16, 4], strides = [1, 1, 1, 1]} : vector<1x10x18x4xf32> to vector<1x8x16x4xf32>
    %15 = vector.shape_cast %14 : vector<1x8x16x4xf32> to vector<128x4xf32>
    %c0_9 = arith.constant 0 : index
    %c0_10 = arith.constant 0 : index
    %c0_11 = arith.constant 0 : index
    %c0_12 = arith.constant 0 : index
    %16 = vector.load %arg2[%c0_9, %c0_10, %c0_11, %c0_12] : memref<3x3x4x8xf32, #tpu.memory_space<vmem>>, vector<1x1x4x8xf32>
    %17 = vector.shape_cast %16 : vector<1x1x4x8xf32> to vector<4x8xf32>
    %cst_13 = arith.constant dense<0.000000e+00> : vector<128x8xf32>
    %18 = tpu.matmul %15, %17, %cst_13 {dimension_numbers = #tpu.dot_dimension_numbers<[1], [0], [0], [1], [0, 0, 1, 1], [], []>} : vector<128x4xf32>, vector<4x8xf32>, vector<128x8xf32> -> vector<128x8xf32>
    %19 = arith.addf %13, %18 : vector<128x8xf32>
    %20 = vector.extract_strided_slice %12 {offsets = [0, 0, 1, 0], sizes = [1, 8, 16, 4], strides = [1, 1, 1, 1]} : vector<1x10x18x4xf32> to vector<1x8x16x4xf32>
    %21 = vector.shape_cast %20 : vector<1x8x16x4xf32> to vector<128x4xf32>
    %c0_14 = arith.constant 0 : index
    %c1 = arith.constant 1 : index
    %c0_15 = arith.constant 0 : index
    %c0_16 = arith.constant 0 : index
    %22 = vector.load %arg2[%c0_14, %c1, %c0_15, %c0_16] : memref<3x3x4x8xf32, #tpu.memory_space<vmem>>, vector<1x1x4x8xf32>
    %23 = vector.shape_cast %22 : vector<1x1x4x8xf32> to vector<4x8xf32>
    %cst_17 = arith.constant dense<0.000000e+00> : vector<128x8xf32>
    %24 = tpu.matmul %21, %23, %cst_17 {dimension_numbers = #tpu.dot_dimension_numbers<[1], [0], [0], [1], [0, 0, 1, 1], [], []>} : vector<128x4xf32>, vector<4x8xf32>, vector<128x8xf32> -> vector<128x8xf32>
    %25 = arith.addf %19, %24 : vector<128x8xf32>
    %26 = vector.extract_strided_slice %12 {offsets = [0, 0, 2, 0], sizes = [1, 8, 16, 4], strides = [1, 1, 1, 1]} : vector<1x10x18x4xf32> to vector<1x8x16x4xf32>
    %27 = vector.shape_cast %26 : vector<1x8x16x4xf32> to vector<128x4xf32>
    %c0_18 = arith.constant 0 : index
    %c2 = arith.constant 2 : index
    %c0_19 = arith.constant 0 : index
    %c0_20 = arith.constant 0 : index
    %28 = vector.load %arg2[%c0_18, %c2, %c0_19, %c0_20] : memref<3x3x4x8xf32, #tpu.memory_space<vmem>>, vector<1x1x4x8xf32>
    %29 = vector.shape_cast %28 : vector<1x1x4x8xf32> to vector<4x8xf32>
    %cst_21 = arith.constant dense<0.000000e+00> : vector<128x8xf32>
    %30 = tpu.matmul %27, %29, %cst_21 {dimension_numbers = #tpu.dot_dimension_numbers<[1], [0], [0], [1], [0, 0, 1, 1], [], []>} : vector<128x4xf32>, vector<4x8xf32>, vector<128x8xf32> -> vector<128x8xf32>
    %31 = arith.addf %25, %30 : vector<128x8xf32>
    %32 = vector.extract_strided_slice %12 {offsets = [0, 1, 0, 0], sizes = [1, 8, 16, 4], strides = [1, 1, 1, 1]} : vector<1x10x18x4xf32> to vector<1x8x16x4xf32>
    %33 = vector.shape_cast %32 : vector<1x8x16x4xf32> to vector<128x4xf32>
    %c1_22 = arith.constant 1 : index
    %c0_23 = arith.constant 0 : index
    %c0_24 = arith.constant 0 : index
    %c0_25 = arith.constant 0 : index
    %34 = vector.load %arg2[%c1_22, %c0_23, %c0_24, %c0_25] : memref<3x3x4x8xf32, #tpu.memory_space<vmem>>, vector<1x1x4x8xf32>
    %35 = vector.shape_cast %34 : vector<1x1x4x8xf32> to vector<4x8xf32>
    %cst_26 = arith.constant dense<0.000000e+00> : vector<128x8xf32>
    %36 = tpu.matmul %33, %35, %cst_26 {dimension_numbers = #tpu.dot_dimension_numbers<[1], [0], [0], [1], [0, 0, 1, 1], [], []>} : vector<128x4xf32>, vector<4x8xf32>, vector<128x8xf32> -> vector<128x8xf32>
    %37 = arith.addf %31, %36 : vector<128x8xf32>
    %38 = vector.extract_strided_slice %12 {offsets = [0, 1, 1, 0], sizes = [1, 8, 16, 4], strides = [1, 1, 1, 1]} : vector<1x10x18x4xf32> to vector<1x8x16x4xf32>
    %39 = vector.shape_cast %38 : vector<1x8x16x4xf32> to vector<128x4xf32>
    %c1_27 = arith.constant 1 : index
    %c1_28 = arith.constant 1 : index
    %c0_29 = arith.constant 0 : index
    %c0_30 = arith.constant 0 : index
    %40 = vector.load %arg2[%c1_27, %c1_28, %c0_29, %c0_30] : memref<3x3x4x8xf32, #tpu.memory_space<vmem>>, vector<1x1x4x8xf32>
    %41 = vector.shape_cast %40 : vector<1x1x4x8xf32> to vector<4x8xf32>
    %cst_31 = arith.constant dense<0.000000e+00> : vector<128x8xf32>
    %42 = tpu.matmul %39, %41, %cst_31 {dimension_numbers = #tpu.dot_dimension_numbers<[1], [0], [0], [1], [0, 0, 1, 1], [], []>} : vector<128x4xf32>, vector<4x8xf32>, vector<128x8xf32> -> vector<128x8xf32>
    %43 = arith.addf %37, %42 : vector<128x8xf32>
    %44 = vector.extract_strided_slice %12 {offsets = [0, 1, 2, 0], sizes = [1, 8, 16, 4], strides = [1, 1, 1, 1]} : vector<1x10x18x4xf32> to vector<1x8x16x4xf32>
    %45 = vector.shape_cast %44 : vector<1x8x16x4xf32> to vector<128x4xf32>
    %c1_32 = arith.constant 1 : index
    %c2_33 = arith.constant 2 : index
    %c0_34 = arith.constant 0 : index
    %c0_35 = arith.constant 0 : index
    %46 = vector.load %arg2[%c1_32, %c2_33, %c0_34, %c0_35] : memref<3x3x4x8xf32, #tpu.memory_space<vmem>>, vector<1x1x4x8xf32>
    %47 = vector.shape_cast %46 : vector<1x1x4x8xf32> to vector<4x8xf32>
    %cst_36 = arith.constant dense<0.000000e+00> : vector<128x8xf32>
    %48 = tpu.matmul %45, %47, %cst_36 {dimension_numbers = #tpu.dot_dimension_numbers<[1], [0], [0], [1], [0, 0, 1, 1], [], []>} : vector<128x4xf32>, vector<4x8xf32>, vector<128x8xf32> -> vector<128x8xf32>
    %49 = arith.addf %43, %48 : vector<128x8xf32>
    %50 = vector.extract_strided_slice %12 {offsets = [0, 2, 0, 0], sizes = [1, 8, 16, 4], strides = [1, 1, 1, 1]} : vector<1x10x18x4xf32> to vector<1x8x16x4xf32>
    %51 = vector.shape_cast %50 : vector<1x8x16x4xf32> to vector<128x4xf32>
    %c2_37 = arith.constant 2 : index
    %c0_38 = arith.constant 0 : index
    %c0_39 = arith.constant 0 : index
    %c0_40 = arith.constant 0 : index
    %52 = vector.load %arg2[%c2_37, %c0_38, %c0_39, %c0_40] : memref<3x3x4x8xf32, #tpu.memory_space<vmem>>, vector<1x1x4x8xf32>
    %53 = vector.shape_cast %52 : vector<1x1x4x8xf32> to vector<4x8xf32>
    %cst_41 = arith.constant dense<0.000000e+00> : vector<128x8xf32>
    %54 = tpu.matmul %51, %53, %cst_41 {dimension_numbers = #tpu.dot_dimension_numbers<[1], [0], [0], [1], [0, 0, 1, 1], [], []>} : vector<128x4xf32>, vector<4x8xf32>, vector<128x8xf32> -> vector<128x8xf32>
    %55 = arith.addf %49, %54 : vector<128x8xf32>
    %56 = vector.extract_strided_slice %12 {offsets = [0, 2, 1, 0], sizes = [1, 8, 16, 4], strides = [1, 1, 1, 1]} : vector<1x10x18x4xf32> to vector<1x8x16x4xf32>
    %57 = vector.shape_cast %56 : vector<1x8x16x4xf32> to vector<128x4xf32>
    %c2_42 = arith.constant 2 : index
    %c1_43 = arith.constant 1 : index
    %c0_44 = arith.constant 0 : index
    %c0_45 = arith.constant 0 : index
    %58 = vector.load %arg2[%c2_42, %c1_43, %c0_44, %c0_45] : memref<3x3x4x8xf32, #tpu.memory_space<vmem>>, vector<1x1x4x8xf32>
    %59 = vector.shape_cast %58 : vector<1x1x4x8xf32> to vector<4x8xf32>
    %cst_46 = arith.constant dense<0.000000e+00> : vector<128x8xf32>
    %60 = tpu.matmul %57, %59, %cst_46 {dimension_numbers = #tpu.dot_dimension_numbers<[1], [0], [0], [1], [0, 0, 1, 1], [], []>} : vector<128x4xf32>, vector<4x8xf32>, vector<128x8xf32> -> vector<128x8xf32>
    %61 = arith.addf %55, %60 : vector<128x8xf32>
    %62 = vector.extract_strided_slice %12 {offsets = [0, 2, 2, 0], sizes = [1, 8, 16, 4], strides = [1, 1, 1, 1]} : vector<1x10x18x4xf32> to vector<1x8x16x4xf32>
    %63 = vector.shape_cast %62 : vector<1x8x16x4xf32> to vector<128x4xf32>
    %c2_47 = arith.constant 2 : index
    %c2_48 = arith.constant 2 : index
    %c0_49 = arith.constant 0 : index
    %c0_50 = arith.constant 0 : index
    %64 = vector.load %arg2[%c2_47, %c2_48, %c0_49, %c0_50] : memref<3x3x4x8xf32, #tpu.memory_space<vmem>>, vector<1x1x4x8xf32>
    %65 = vector.shape_cast %64 : vector<1x1x4x8xf32> to vector<4x8xf32>
    %cst_51 = arith.constant dense<0.000000e+00> : vector<128x8xf32>
    %66 = tpu.matmul %63, %65, %cst_51 {dimension_numbers = #tpu.dot_dimension_numbers<[1], [0], [0], [1], [0, 0, 1, 1], [], []>} : vector<128x4xf32>, vector<4x8xf32>, vector<128x8xf32> -> vector<128x8xf32>
    %67 = arith.addf %61, %66 : vector<128x8xf32>
    %68 = vector.broadcast %7 : vector<1x8xf32> to vector<128x8xf32>
    %69 = arith.addf %67, %68 : vector<128x8xf32>
    %cst_52 = arith.constant 0.000000e+00 : f32
    %70 = vector.broadcast %cst_52 : f32 to vector<128x8xf32>
    %71 = arith.cmpf ogt, %69, %70 : vector<128x8xf32>
    %cst_53 = arith.constant 0.00999999977 : f32
    %72 = vector.broadcast %cst_53 : f32 to vector<128x8xf32>
    %73 = arith.mulf %72, %69 : vector<128x8xf32>
    %74 = arith.select %71, %69, %73 : vector<128x8xi1>, vector<128x8xf32>
    %75 = vector.shape_cast %74 : vector<128x8xf32> to vector<1x8x16x8xf32>
    %cst_54 = arith.constant 0.000000e+00 : f32
    %76 = vector.broadcast %cst_54 : f32 to vector<1x1x16x8xf32>
    %77 = tpu.concatenate %76, %75, %76 in 1 : vector<1x1x16x8xf32>, vector<1x8x16x8xf32>, vector<1x1x16x8xf32> -> vector<1x10x16x8xf32>
    %cst_55 = arith.constant 0.000000e+00 : f32
    %78 = vector.broadcast %cst_55 : f32 to vector<1x10x1x8xf32>
    %79 = tpu.concatenate %78, %77, %78 in 2 : vector<1x10x1x8xf32>, vector<1x10x16x8xf32>, vector<1x10x1x8xf32> -> vector<1x10x18x8xf32>
    %cst_56 = arith.constant 0.000000e+00 : f32
    %80 = vector.broadcast %cst_56 : f32 to vector<128x8xf32>
    %81 = vector.extract_strided_slice %79 {offsets = [0, 0, 0, 0], sizes = [1, 8, 16, 8], strides = [1, 1, 1, 1]} : vector<1x10x18x8xf32> to vector<1x8x16x8xf32>
    %82 = vector.shape_cast %81 : vector<1x8x16x8xf32> to vector<128x8xf32>
    %c0_57 = arith.constant 0 : index
    %c0_58 = arith.constant 0 : index
    %c0_59 = arith.constant 0 : index
    %c0_60 = arith.constant 0 : index
    %83 = vector.load %arg4[%c0_57, %c0_58, %c0_59, %c0_60] : memref<3x3x8x8xf32, #tpu.memory_space<vmem>>, vector<1x1x8x8xf32>
    %84 = vector.shape_cast %83 : vector<1x1x8x8xf32> to vector<8x8xf32>
    %cst_61 = arith.constant dense<0.000000e+00> : vector<128x8xf32>
    %85 = tpu.matmul %82, %84, %cst_61 {dimension_numbers = #tpu.dot_dimension_numbers<[1], [0], [0], [1], [0, 0, 1, 1], [], []>} : vector<128x8xf32>, vector<8x8xf32>, vector<128x8xf32> -> vector<128x8xf32>
    %86 = arith.addf %80, %85 : vector<128x8xf32>
    %87 = vector.extract_strided_slice %79 {offsets = [0, 0, 1, 0], sizes = [1, 8, 16, 8], strides = [1, 1, 1, 1]} : vector<1x10x18x8xf32> to vector<1x8x16x8xf32>
    %88 = vector.shape_cast %87 : vector<1x8x16x8xf32> to vector<128x8xf32>
    %c0_62 = arith.constant 0 : index
    %c1_63 = arith.constant 1 : index
    %c0_64 = arith.constant 0 : index
    %c0_65 = arith.constant 0 : index
    %89 = vector.load %arg4[%c0_62, %c1_63, %c0_64, %c0_65] : memref<3x3x8x8xf32, #tpu.memory_space<vmem>>, vector<1x1x8x8xf32>
    %90 = vector.shape_cast %89 : vector<1x1x8x8xf32> to vector<8x8xf32>
    %cst_66 = arith.constant dense<0.000000e+00> : vector<128x8xf32>
    %91 = tpu.matmul %88, %90, %cst_66 {dimension_numbers = #tpu.dot_dimension_numbers<[1], [0], [0], [1], [0, 0, 1, 1], [], []>} : vector<128x8xf32>, vector<8x8xf32>, vector<128x8xf32> -> vector<128x8xf32>
    %92 = arith.addf %86, %91 : vector<128x8xf32>
    %93 = vector.extract_strided_slice %79 {offsets = [0, 0, 2, 0], sizes = [1, 8, 16, 8], strides = [1, 1, 1, 1]} : vector<1x10x18x8xf32> to vector<1x8x16x8xf32>
    %94 = vector.shape_cast %93 : vector<1x8x16x8xf32> to vector<128x8xf32>
    %c0_67 = arith.constant 0 : index
    %c2_68 = arith.constant 2 : index
    %c0_69 = arith.constant 0 : index
    %c0_70 = arith.constant 0 : index
    %95 = vector.load %arg4[%c0_67, %c2_68, %c0_69, %c0_70] : memref<3x3x8x8xf32, #tpu.memory_space<vmem>>, vector<1x1x8x8xf32>
    %96 = vector.shape_cast %95 : vector<1x1x8x8xf32> to vector<8x8xf32>
    %cst_71 = arith.constant dense<0.000000e+00> : vector<128x8xf32>
    %97 = tpu.matmul %94, %96, %cst_71 {dimension_numbers = #tpu.dot_dimension_numbers<[1], [0], [0], [1], [0, 0, 1, 1], [], []>} : vector<128x8xf32>, vector<8x8xf32>, vector<128x8xf32> -> vector<128x8xf32>
    %98 = arith.addf %92, %97 : vector<128x8xf32>
    %99 = vector.extract_strided_slice %79 {offsets = [0, 1, 0, 0], sizes = [1, 8, 16, 8], strides = [1, 1, 1, 1]} : vector<1x10x18x8xf32> to vector<1x8x16x8xf32>
    %100 = vector.shape_cast %99 : vector<1x8x16x8xf32> to vector<128x8xf32>
    %c1_72 = arith.constant 1 : index
    %c0_73 = arith.constant 0 : index
    %c0_74 = arith.constant 0 : index
    %c0_75 = arith.constant 0 : index
    %101 = vector.load %arg4[%c1_72, %c0_73, %c0_74, %c0_75] : memref<3x3x8x8xf32, #tpu.memory_space<vmem>>, vector<1x1x8x8xf32>
    %102 = vector.shape_cast %101 : vector<1x1x8x8xf32> to vector<8x8xf32>
    %cst_76 = arith.constant dense<0.000000e+00> : vector<128x8xf32>
    %103 = tpu.matmul %100, %102, %cst_76 {dimension_numbers = #tpu.dot_dimension_numbers<[1], [0], [0], [1], [0, 0, 1, 1], [], []>} : vector<128x8xf32>, vector<8x8xf32>, vector<128x8xf32> -> vector<128x8xf32>
    %104 = arith.addf %98, %103 : vector<128x8xf32>
    %105 = vector.extract_strided_slice %79 {offsets = [0, 1, 1, 0], sizes = [1, 8, 16, 8], strides = [1, 1, 1, 1]} : vector<1x10x18x8xf32> to vector<1x8x16x8xf32>
    %106 = vector.shape_cast %105 : vector<1x8x16x8xf32> to vector<128x8xf32>
    %c1_77 = arith.constant 1 : index
    %c1_78 = arith.constant 1 : index
    %c0_79 = arith.constant 0 : index
    %c0_80 = arith.constant 0 : index
    %107 = vector.load %arg4[%c1_77, %c1_78, %c0_79, %c0_80] : memref<3x3x8x8xf32, #tpu.memory_space<vmem>>, vector<1x1x8x8xf32>
    %108 = vector.shape_cast %107 : vector<1x1x8x8xf32> to vector<8x8xf32>
    %cst_81 = arith.constant dense<0.000000e+00> : vector<128x8xf32>
    %109 = tpu.matmul %106, %108, %cst_81 {dimension_numbers = #tpu.dot_dimension_numbers<[1], [0], [0], [1], [0, 0, 1, 1], [], []>} : vector<128x8xf32>, vector<8x8xf32>, vector<128x8xf32> -> vector<128x8xf32>
    %110 = arith.addf %104, %109 : vector<128x8xf32>
    %111 = vector.extract_strided_slice %79 {offsets = [0, 1, 2, 0], sizes = [1, 8, 16, 8], strides = [1, 1, 1, 1]} : vector<1x10x18x8xf32> to vector<1x8x16x8xf32>
    %112 = vector.shape_cast %111 : vector<1x8x16x8xf32> to vector<128x8xf32>
    %c1_82 = arith.constant 1 : index
    %c2_83 = arith.constant 2 : index
    %c0_84 = arith.constant 0 : index
    %c0_85 = arith.constant 0 : index
    %113 = vector.load %arg4[%c1_82, %c2_83, %c0_84, %c0_85] : memref<3x3x8x8xf32, #tpu.memory_space<vmem>>, vector<1x1x8x8xf32>
    %114 = vector.shape_cast %113 : vector<1x1x8x8xf32> to vector<8x8xf32>
    %cst_86 = arith.constant dense<0.000000e+00> : vector<128x8xf32>
    %115 = tpu.matmul %112, %114, %cst_86 {dimension_numbers = #tpu.dot_dimension_numbers<[1], [0], [0], [1], [0, 0, 1, 1], [], []>} : vector<128x8xf32>, vector<8x8xf32>, vector<128x8xf32> -> vector<128x8xf32>
    %116 = arith.addf %110, %115 : vector<128x8xf32>
    %117 = vector.extract_strided_slice %79 {offsets = [0, 2, 0, 0], sizes = [1, 8, 16, 8], strides = [1, 1, 1, 1]} : vector<1x10x18x8xf32> to vector<1x8x16x8xf32>
    %118 = vector.shape_cast %117 : vector<1x8x16x8xf32> to vector<128x8xf32>
    %c2_87 = arith.constant 2 : index
    %c0_88 = arith.constant 0 : index
    %c0_89 = arith.constant 0 : index
    %c0_90 = arith.constant 0 : index
    %119 = vector.load %arg4[%c2_87, %c0_88, %c0_89, %c0_90] : memref<3x3x8x8xf32, #tpu.memory_space<vmem>>, vector<1x1x8x8xf32>
    %120 = vector.shape_cast %119 : vector<1x1x8x8xf32> to vector<8x8xf32>
    %cst_91 = arith.constant dense<0.000000e+00> : vector<128x8xf32>
    %121 = tpu.matmul %118, %120, %cst_91 {dimension_numbers = #tpu.dot_dimension_numbers<[1], [0], [0], [1], [0, 0, 1, 1], [], []>} : vector<128x8xf32>, vector<8x8xf32>, vector<128x8xf32> -> vector<128x8xf32>
    %122 = arith.addf %116, %121 : vector<128x8xf32>
    %123 = vector.extract_strided_slice %79 {offsets = [0, 2, 1, 0], sizes = [1, 8, 16, 8], strides = [1, 1, 1, 1]} : vector<1x10x18x8xf32> to vector<1x8x16x8xf32>
    %124 = vector.shape_cast %123 : vector<1x8x16x8xf32> to vector<128x8xf32>
    %c2_92 = arith.constant 2 : index
    %c1_93 = arith.constant 1 : index
    %c0_94 = arith.constant 0 : index
    %c0_95 = arith.constant 0 : index
    %125 = vector.load %arg4[%c2_92, %c1_93, %c0_94, %c0_95] : memref<3x3x8x8xf32, #tpu.memory_space<vmem>>, vector<1x1x8x8xf32>
    %126 = vector.shape_cast %125 : vector<1x1x8x8xf32> to vector<8x8xf32>
    %cst_96 = arith.constant dense<0.000000e+00> : vector<128x8xf32>
    %127 = tpu.matmul %124, %126, %cst_96 {dimension_numbers = #tpu.dot_dimension_numbers<[1], [0], [0], [1], [0, 0, 1, 1], [], []>} : vector<128x8xf32>, vector<8x8xf32>, vector<128x8xf32> -> vector<128x8xf32>
    %128 = arith.addf %122, %127 : vector<128x8xf32>
    %129 = vector.extract_strided_slice %79 {offsets = [0, 2, 2, 0], sizes = [1, 8, 16, 8], strides = [1, 1, 1, 1]} : vector<1x10x18x8xf32> to vector<1x8x16x8xf32>
    %130 = vector.shape_cast %129 : vector<1x8x16x8xf32> to vector<128x8xf32>
    %c2_97 = arith.constant 2 : index
    %c2_98 = arith.constant 2 : index
    %c0_99 = arith.constant 0 : index
    %c0_100 = arith.constant 0 : index
    %131 = vector.load %arg4[%c2_97, %c2_98, %c0_99, %c0_100] : memref<3x3x8x8xf32, #tpu.memory_space<vmem>>, vector<1x1x8x8xf32>
    %132 = vector.shape_cast %131 : vector<1x1x8x8xf32> to vector<8x8xf32>
    %cst_101 = arith.constant dense<0.000000e+00> : vector<128x8xf32>
    %133 = tpu.matmul %130, %132, %cst_101 {dimension_numbers = #tpu.dot_dimension_numbers<[1], [0], [0], [1], [0, 0, 1, 1], [], []>} : vector<128x8xf32>, vector<8x8xf32>, vector<128x8xf32> -> vector<128x8xf32>
    %134 = arith.addf %128, %133 : vector<128x8xf32>
    %135 = vector.broadcast %8 : vector<1x8xf32> to vector<128x8xf32>
    %136 = arith.addf %134, %135 : vector<128x8xf32>
    %cst_102 = arith.constant 0.000000e+00 : f32
    %137 = vector.broadcast %cst_102 : f32 to vector<128x8xf32>
    %138 = arith.cmpf ogt, %136, %137 : vector<128x8xf32>
    %cst_103 = arith.constant 0.00999999977 : f32
    %139 = vector.broadcast %cst_103 : f32 to vector<128x8xf32>
    %140 = arith.mulf %139, %136 : vector<128x8xf32>
    %141 = arith.select %138, %136, %140 : vector<128x8xi1>, vector<128x8xf32>
    %142 = vector.shape_cast %141 : vector<128x8xf32> to vector<1x8x16x8xf32>
    %c0_104 = arith.constant 0 : index
    %c0_105 = arith.constant 0 : index
    %c0_106 = arith.constant 0 : index
    %c0_107 = arith.constant 0 : index
    %143 = vector.load %arg6[%c0_104, %c0_105, %c0_106, %c0_107] : memref<1x8x16x8xf32, #tpu.memory_space<vmem>>, vector<1x8x16x8xf32>
    tpu.vector_store %arg6[%c0_104, %c0_105, %c0_106, %c0_107], %142 {strides = array<i32>} : memref<1x8x16x8xf32, #tpu.memory_space<vmem>>, vector<1x8x16x8xf32>,
    return
  }
  func.func @transform_0(%arg0: i32) -> (i32, i32, i32, i32) {
    %c0_i32 = arith.constant 0 : i32
    %c0_i32_0 = arith.constant 0 : i32
    %c0_i32_1 = arith.constant 0 : i32
    %c0_i32_2 = arith.constant 0 : i32
    return %arg0, %c0_i32, %c0_i32_0, %c0_i32_1 : i32, i32, i32, i32
  }
  func.func @transform_1(%arg0: i32) -> (i32, i32, i32, i32) {
    %c0_i32 = arith.constant 0 : i32
    %c0_i32_0 = arith.constant 0 : i32
    %c0_i32_1 = arith.constant 0 : i32
    %c0_i32_2 = arith.constant 0 : i32
    %c0_i32_3 = arith.constant 0 : i32
    return %c0_i32, %c0_i32_0, %c0_i32_1, %c0_i32_2 : i32, i32, i32, i32
  }
  func.func @transform_2(%arg0: i32) -> (i32, i32) {
    %c0_i32 = arith.constant 0 : i32
    %c0_i32_0 = arith.constant 0 : i32
    %c0_i32_1 = arith.constant 0 : i32
    return %c0_i32, %c0_i32_0 : i32, i32
  }
  func.func @transform_3(%arg0: i32) -> (i32, i32, i32, i32) {
    %c0_i32 = arith.constant 0 : i32
    %c0_i32_0 = arith.constant 0 : i32
    %c0_i32_1 = arith.constant 0 : i32
    %c0_i32_2 = arith.constant 0 : i32
    %c0_i32_3 = arith.constant 0 : i32
    return %c0_i32, %c0_i32_0, %c0_i32_1, %c0_i32_2 : i32, i32, i32, i32
  }
  func.func @transform_4(%arg0: i32) -> (i32, i32) {
    %c0_i32 = arith.constant 0 : i32
    %c0_i32_0 = arith.constant 0 : i32
    %c0_i32_1 = arith.constant 0 : i32
    return %c0_i32, %c0_i32_0 : i32, i32
  }
  func.func @transform_5(%arg0: i32) -> (i32, i32, i32, i32) {
    %c0_i32 = arith.constant 0 : i32
    %c0_i32_0 = arith.constant 0 : i32
    %c0_i32_1 = arith.constant 0 : i32
    %c0_i32_2 = arith.constant 0 : i32
    return %arg0, %c0_i32, %c0_i32_0, %c0_i32_1 : i32, i32, i32, i32
  }
}

</mosaic_0001>

<llo_original>
// kernel: tpu_custom_call.1
$region0: #{tpu_custom_call.1}
  #allocation0 [shape = 'u32[]', space=smem, size = 0x4, offset = 0x4, fixed_abs, tag = 'smem constant byte address 0x4 - core index']
  #allocation1 [shape = 'u32[144,128]{1,0:T(1,128)}', space=vmem, size = 0x12000, scoped, tag = 'internal scratch']
  %s0 = inlined_call_operand.vmem [shape: f32[2,16,16,4], index: 0, kind: input, shape index: {}]
  %s1 = inlined_call_operand.vmem [shape: f32[3,3,4,8], index: 1, kind: input, shape index: {}]
  %s2 = inlined_call_operand.vmem [shape: f32[1,8], index: 2, kind: input, shape index: {}]
  %s3 = inlined_call_operand.vmem [shape: f32[3,3,8,8], index: 3, kind: input, shape index: {}]
  %s4 = inlined_call_operand.vmem [shape: f32[1,8], index: 4, kind: input, shape index: {}]
  %s5 = inlined_call_operand.vmem [shape: f32[2,8,16,8], index: 5, kind: output, shape index: {}]
  %s6 = sld [smem:[#allocation0]]
  $region53: #{tpu_custom_call.1} parent=0
    _
  %s8 = ssub.s32 1, %s6
  %s9 = scalar_select 0, %s8, %s6
  loop: start=0, step=1, limit=4
  $region2: #{tpu_custom_call.1} parent=0 // loop_pre_header
    _
  $region3: #{tpu_custom_call.1} parent=0 // loop_header
    %s11 = sphi 0, %s15
    %p12 = scmp.ge.s32.totalorder %s11, 4
    %s21 = sphi 0, %s23
    %s24 = sphi 0, %s21
    %s25 = sphi 0, %s24
    %s41 = sphi 0, %s25
    %s45 = sphi 0, %s45
    %s47 = sphi 0, %s45
    %s48 = sphi 0, %s47
    %s62 = sphi 0, %s48
    %s66 = sphi 0, %s66
    %s68 = sphi 0, %s66
    %s69 = sphi 0, %s68
    %s83 = sphi 0, %s69
    %s87 = sphi 0, %s87
    %s89 = sphi 0, %s87
    %s90 = sphi 0, %s89
    %s104 = sphi 0, %s90
    %s108 = sphi 0, %s108
    %s110 = sphi 0, %s108
    %s111 = sphi 0, %s110
    %s125 = sphi 0, %s111
    %s131 = sphi 0, %s133
    %s134 = sphi 0, %s131
    %s135 = sphi 0, %s134
    %s151 = sphi 0, %s135
  $region4: #{tpu_custom_call.1} parent=0 // loop_header_branch
    %14 = sbr.rel (%p12) target = $region8
  $region5: #{tpu_custom_call.1} parent=0 // loop_body
    %s16 = ssub.s32 %s11, 1
    %s17 = ssub.s32 %s11, 2
    %s18 = sadd.s32 %s11, 1
    %s19 = ssub.s32 %s11, %s18
    %p20 = scmp.eq.s32.totalorder %s19, 0
    %s22 = sadd.s32 %s21, 1
    %s23 = scalar_select %p20, %s21, %s22
    %p26 = pneg %p20
    %p27 = scmp.eq.s32.totalorder %s11, 1
    %p28 = por %p26, %p27
    %p29 = scmp.ne.s32.totalorder %s21, %s24
    %p30 = scmp.eq.s32.totalorder %s11, 0
    %p31 = por %p29, %p30
    %p32 = scmp.ne.s32.totalorder %s21, %s24
    %p33 = scmp.eq.s32.totalorder %s16, 1
    %p34 = por %p32, %p33
    %p35 = scmp.ne.s32.totalorder %s24, %s25
    %p36 = scmp.eq.s32.totalorder %s16, 0
    %p37 = por %p35, %p36
    %p38 = scmp.ne.s32.totalorder %s24, %s25
    %p39 = scmp.eq.s32.totalorder %s17, 1
    %p40 = por %p38, %p39
    %p42 = scmp.ne.s32.totalorder %s25, %s41
    %p43 = scmp.eq.s32.totalorder %s17, 0
    %p44 = por %p42, %p43
    %s46 = sadd.s32 %s45, 1
    %p49 = scmp.eq.s32.totalorder %s11, 1
    %p50 = scmp.ne.s32.totalorder %s45, %s47
    %p51 = scmp.eq.s32.totalorder %s11, 0
    %p52 = por %p50, %p51
    %p53 = scmp.ne.s32.totalorder %s45, %s47
    %p54 = scmp.eq.s32.totalorder %s16, 1
    %p55 = por %p53, %p54
    %p56 = scmp.ne.s32.totalorder %s47, %s48
    %p57 = scmp.eq.s32.totalorder %s16, 0
    %p58 = por %p56, %p57
    %p59 = scmp.ne.s32.totalorder %s47, %s48
    %p60 = scmp.eq.s32.totalorder %s17, 1
    %p61 = por %p59, %p60
    %p63 = scmp.ne.s32.totalorder %s48, %s62
    %p64 = scmp.eq.s32.totalorder %s17, 0
    %p65 = por %p63, %p64
    %s67 = sadd.s32 %s66, 1
    %p70 = scmp.eq.s32.totalorder %s11, 1
    %p71 = scmp.ne.s32.totalorder %s66, %s68
    %p72 = scmp.eq.s32.totalorder %s11, 0
    %p73 = por %p71, %p72
    %p74 = scmp.ne.s32.totalorder %s66, %s68
    %p75 = scmp.eq.s32.totalorder %s16, 1
    %p76 = por %p74, %p75
    %p77 = scmp.ne.s32.totalorder %s68, %s69
    %p78 = scmp.eq.s32.totalorder %s16, 0
    %p79 = por %p77, %p78
    %p80 = scmp.ne.s32.totalorder %s68, %s69
    %p81 = scmp.eq.s32.totalorder %s17, 1
    %p82 = por %p80, %p81
    %p84 = scmp.ne.s32.totalorder %s69, %s83
    %p85 = scmp.eq.s32.totalorder %s17, 0
    %p86 = por %p84, %p85
    %s88 = sadd.s32 %s87, 1
    %p91 = scmp.eq.s32.totalorder %s11, 1
    %p92 = scmp.ne.s32.totalorder %s87, %s89
    %p93 = scmp.eq.s32.totalorder %s11, 0
    %p94 = por %p92, %p93
    %p95 = scmp.ne.s32.totalorder %s87, %s89
    %p96 = scmp.eq.s32.totalorder %s16, 1
    %p97 = por %p95, %p96
    %p98 = scmp.ne.s32.totalorder %s89, %s90
    %p99 = scmp.eq.s32.totalorder %s16, 0
    %p100 = por %p98, %p99
    %p101 = scmp.ne.s32.totalorder %s89, %s90
    %p102 = scmp.eq.s32.totalorder %s17, 1
    %p103 = por %p101, %p102
    %p105 = scmp.ne.s32.totalorder %s90, %s104
    %p106 = scmp.eq.s32.totalorder %s17, 0
    %p107 = por %p105, %p106
    %s109 = sadd.s32 %s108, 1
    %p112 = scmp.eq.s32.totalorder %s11, 1
    %p113 = scmp.ne.s32.totalorder %s108, %s110
    %p114 = scmp.eq.s32.totalorder %s11, 0
    %p115 = por %p113, %p114
    %p116 = scmp.ne.s32.totalorder %s108, %s110
    %p117 = scmp.eq.s32.totalorder %s16, 1
    %p118 = por %p116, %p117
    %p119 = scmp.ne.s32.totalorder %s110, %s111
    %p120 = scmp.eq.s32.totalorder %s16, 0
    %p121 = por %p119, %p120
    %p122 = scmp.ne.s32.totalorder %s110, %s111
    %p123 = scmp.eq.s32.totalorder %s17, 1
    %p124 = por %p122, %p123
    %p126 = scmp.ne.s32.totalorder %s111, %s125
    %p127 = scmp.eq.s32.totalorder %s17, 0
    %p128 = por %p126, %p127
    %s129 = ssub.s32 %s11, %s18
    %p130 = scmp.eq.s32.totalorder %s129, 0
    %s132 = sadd.s32 %s131, 1
    %s133 = scalar_select %p130, %s131, %s132
    %p136 = pneg %p130
    %p137 = scmp.eq.s32.totalorder %s11, 1
    %p138 = por %p136, %p137
    %p139 = scmp.ne.s32.totalorder %s131, %s134
    %p140 = scmp.eq.s32.totalorder %s11, 0
    %p141 = por %p139, %p140
    %p142 = scmp.ne.s32.totalorder %s131, %s134
    %p143 = scmp.eq.s32.totalorder %s16, 1
    %p144 = por %p142, %p143
    %p145 = scmp.ne.s32.totalorder %s134, %s135
    %p146 = scmp.eq.s32.totalorder %s16, 0
    %p147 = por %p145, %p146
    %p148 = scmp.ne.s32.totalorder %s134, %s135
    %p149 = scmp.eq.s32.totalorder %s17, 1
    %p150 = por %p148, %p149
    %p152 = scmp.ne.s32.totalorder %s135, %s151
    %p153 = scmp.eq.s32.totalorder %s17, 0
    %p154 = por %p152, %p153
    %p155 = scmp.le.s32.totalorder 1, %s11
    %p156 = scmp.lt.s32.totalorder %s11, 3
    %p157 = pnand %p155, %p156
    %p158 = pneg %p157
    // Predicated region
    $region9: #{tpu_custom_call.1} parent=5 // pred_check
      _
    $region10: #{tpu_custom_call.1} parent=5 // pred_check_branch
      %160 = sbr.rel (%p157) target = $region12
    $region11: #{tpu_custom_call.1} parent=5 // pred_region
      %s161 = ssub.s32 %s11, 1
      // Predicated region
      $region13: #{tpu_custom_call.1} parent=11 // pred_check
        %p162 = pneg %p58
      $region14: #{tpu_custom_call.1} parent=11 // pred_check_branch
        %164 = sbr.rel (%p162) target = $region16
      $region15: #{tpu_custom_call.1} parent=11 // pred_region
        _
      $region16: #{tpu_custom_call.1} parent=11 // pred_fallthru
        _
      // Predicated region
      $region17: #{tpu_custom_call.1} parent=11 // pred_check
        %p165 = pneg %p79
      $region18: #{tpu_custom_call.1} parent=11 // pred_check_branch
        %167 = sbr.rel (%p165) target = $region20
      $region19: #{tpu_custom_call.1} parent=11 // pred_region
        _
      $region20: #{tpu_custom_call.1} parent=11 // pred_fallthru
        _
      // Predicated region
      $region21: #{tpu_custom_call.1} parent=11 // pred_check
        %p168 = pneg %p100
      $region22: #{tpu_custom_call.1} parent=11 // pred_check_branch
        %170 = sbr.rel (%p168) target = $region24
      $region23: #{tpu_custom_call.1} parent=11 // pred_region
        _
      $region24: #{tpu_custom_call.1} parent=11 // pred_fallthru
        _
      // Predicated region
      $region25: #{tpu_custom_call.1} parent=11 // pred_check
        %p171 = pneg %p121
      $region26: #{tpu_custom_call.1} parent=11 // pred_check_branch
        %173 = sbr.rel (%p171) target = $region28
      $region27: #{tpu_custom_call.1} parent=11 // pred_region
        _
      $region28: #{tpu_custom_call.1} parent=11 // pred_fallthru
        _
    $region12: #{tpu_custom_call.1} parent=5 // pred_fallthru
      _
    %p174 = scmp.lt.s32.totalorder %s11, 2
    // Predicated region
    $region29: #{tpu_custom_call.1} parent=5 // pred_check
      %p175 = pneg %p174
    $region30: #{tpu_custom_call.1} parent=5 // pred_check_branch
      %177 = sbr.rel (%p175) target = $region32
    $region31: #{tpu_custom_call.1} parent=5 // pred_region
      // Predicated region
      $region33: #{tpu_custom_call.1} parent=31 // pred_check
        %p178 = pneg %p31
      $region34: #{tpu_custom_call.1} parent=31 // pred_check_branch
        %180 = sbr.rel (%p178) target = $region36
      $region35: #{tpu_custom_call.1} parent=31 // pred_region
        %p181 = scmp.lt.s32.totalorder %s11, 1
        %s182 = scalar_select %p181, %s11, 1
        %s183 = smul.addr %s182, 32
        %s184 = smul.addr %s183, 8
        %s185 = scalar_lea.vmem %s0, %s184
      $region36: #{tpu_custom_call.1} parent=31 // pred_fallthru
        _
    $region32: #{tpu_custom_call.1} parent=5 // pred_fallthru
      _
    %p186 = scmp.le.s32.totalorder 1, %s11
    %p187 = scmp.lt.s32.totalorder %s11, 3
    %p188 = pnand %p186, %p187
    %p189 = pneg %p188
    // Predicated region
    $region37: #{tpu_custom_call.1} parent=5 // pred_check
      _
    $region38: #{tpu_custom_call.1} parent=5 // pred_check_branch
      %191 = sbr.rel (%p188) target = $region40
    $region39: #{tpu_custom_call.1} parent=5 // pred_region
      %s192 = ssub.s32 %s11, 1
      %p193 = scmp.lt.s32.totalorder %s16, 1
      %s194 = scalar_select %p193, %s16, 1
      %s195 = smul.addr %s194, 32
      %s196 = smul.addr %s195, 8
      %s197 = scalar_lea.vmem %s0, %s196
      %p198 = pneg %p37
      %p199 = pneg %p34
      %p200 = pneg %p58
      %p201 = pneg %p55
      %p202 = pneg %p79
      %p203 = pneg %p76
      %p204 = pneg %p100
      %p205 = pneg %p97
      %p206 = pneg %p121
      %p207 = pneg %p118
      %p208 = pneg %p147
      %p209 = pneg %p144
      %p210 = scmp.lt.s32.totalorder %s16, 1
      %s211 = scalar_select %p210, %s16, 1
      %s212 = smul.addr %s211, 16
      %s213 = smul.addr %s212, 8
      %s214 = scalar_lea.vmem %s5, %s213
      %p215 = scmp.lt.s32.totalorder %s16, 1
      %s216 = scalar_select %p215, %s16, 1
      %s217 = smul.addr %s216, 32
      %s218 = smul.addr %s217, 8
      %s219 = scalar_lea.vmem %s0, %s218
      %p220 = scmp.lt.s32.totalorder %s16, 1
      %s221 = scalar_select %p220, %s16, 1
      %s222 = smul.addr %s221, 16
      %s223 = smul.addr %s222, 8
      %s224 = scalar_lea.vmem %s5, %s223
      %v225 = vld [vmem:[%s219] sm:$0xff]
      %v226 = vld [vmem:[%s219 + $0x8] sm:$0xff]
      %v227 = vld [vmem:[%s219 + $0x10] sm:$0xff]
      %v228 = vld [vmem:[%s219 + $0x18] sm:$0xff]
      %v229 = vld [vmem:[%s219 + $0x20] sm:$0xff]
      %v230 = vld [vmem:[%s219 + $0x28] sm:$0xff]
      %v231 = vld [vmem:[%s219 + $0x30] sm:$0xff]
      %v232 = vld [vmem:[%s219 + $0x38] sm:$0xff]
      %v233 = vld [vmem:[%s219 + $0x40] sm:$0xff]
      %v234 = vld [vmem:[%s219 + $0x48] sm:$0xff]
      %v235 = vld [vmem:[%s219 + $0x50] sm:$0xff]
      %v236 = vld [vmem:[%s219 + $0x58] sm:$0xff]
      %v237 = vld [vmem:[%s219 + $0x60] sm:$0xff]
      %v238 = vld [vmem:[%s219 + $0x68] sm:$0xff]
      %v239 = vld [vmem:[%s219 + $0x70] sm:$0xff]
      %v240 = vld [vmem:[%s219 + $0x78] sm:$0xff]
      %v241 = vld [vmem:[%s219 + $0x80] sm:$0xff]
      %v242 = vld [vmem:[%s219 + $0x88] sm:$0xff]
      %v243 = vld [vmem:[%s219 + $0x90] sm:$0xff]
      %v244 = vld [vmem:[%s219 + $0x98] sm:$0xff]
      %v245 = vld [vmem:[%s219 + $0xa0] sm:$0xff]
      %v246 = vld [vmem:[%s219 + $0xa8] sm:$0xff]
      %v247 = vld [vmem:[%s219 + $0xb0] sm:$0xff]
      %v248 = vld [vmem:[%s219 + $0xb8] sm:$0xff]
      %v249 = vld [vmem:[%s219 + $0xc0] sm:$0xff]
      %v250 = vld [vmem:[%s219 + $0xc8] sm:$0xff]
      %v251 = vld [vmem:[%s219 + $0xd0] sm:$0xff]
      %v252 = vld [vmem:[%s219 + $0xd8] sm:$0xff]
      %v253 = vld [vmem:[%s219 + $0xe0] sm:$0xff]
      %v254 = vld [vmem:[%s219 + $0xe8] sm:$0xff]
      %v255 = vld [vmem:[%s219 + $0xf0] sm:$0xff]
      %v256 = vld [vmem:[%s219 + $0xf8] sm:$0xff]
      %v257 = vmax.f32 %v225, %v227
      %v258 = vmax.f32 %v226, %v228
      %v259 = vmax.f32 %v229, %v231
      %v260 = vmax.f32 %v230, %v232
      %v261 = vmax.f32 %v233, %v235
      %v262 = vmax.f32 %v234, %v236
      %v263 = vmax.f32 %v237, %v239
      %v264 = vmax.f32 %v238, %v240
      %v265 = vmax.f32 %v241, %v243
      %v266 = vmax.f32 %v242, %v244
      %v267 = vmax.f32 %v245, %v247
      %v268 = vmax.f32 %v246, %v248
      %v269 = vmax.f32 %v249, %v251
      %v270 = vmax.f32 %v250, %v252
      %v271 = vmax.f32 %v253, %v255
      %v272 = vmax.f32 %v254, %v256
      %v273 = vld [vmem:[%s2] sm:$0x1]
      %v274 = vld [vmem:[%s4] sm:$0x1]
      %vm292 = vcmask 1040384
      %v293 = vrot.slane 0.0, 7
      %v294 = vsel %vm292, %v293, %v293
      %v295 = vrot.slane %v257, 7
      %v296 = vrot.slane %v258, 7
      %v297 = vsel %vm292, %v295, %v296
      %v298 = vrot.slane %v259, 7
      %v299 = vrot.slane %v260, 7
      %v300 = vsel %vm292, %v298, %v299
      %v301 = vrot.slane %v261, 7
      %v302 = vrot.slane %v262, 7
      %v303 = vsel %vm292, %v301, %v302
      %v304 = vrot.slane %v263, 7
      %v305 = vrot.slane %v264, 7
      %v306 = vsel %vm292, %v304, %v305
      %v307 = vrot.slane %v265, 7
      %v308 = vrot.slane %v266, 7
      %v309 = vsel %vm292, %v307, %v308
      %v310 = vrot.slane %v267, 7
      %v311 = vrot.slane %v268, 7
      %v312 = vsel %vm292, %v310, %v311
      %v313 = vrot.slane %v269, 7
      %v314 = vrot.slane %v270, 7
      %v315 = vsel %vm292, %v313, %v314
      %v316 = vrot.slane %v271, 7
      %v317 = vrot.slane %v272, 7
      %v318 = vsel %vm292, %v316, %v317
      %v336 = vsel %vm292, 0.0, %v293
      %v337 = vsel %vm292, 0.0, %v295
      %v338 = vsel %vm292, 0.0, %v298
      %v339 = vsel %vm292, 0.0, %v301
      %v340 = vsel %vm292, 0.0, %v304
      %v341 = vsel %vm292, 0.0, %v307
      %v342 = vsel %vm292, 0.0, %v310
      %v343 = vsel %vm292, 0.0, %v313
      %v344 = vsel %vm292, 0.0, %v316
      %v345 = vsel %vm292, %v293, 0.0
      %v346 = vsel %vm292, %v296, 0.0
      %v347 = vsel %vm292, %v299, 0.0
      %v348 = vsel %vm292, %v302, 0.0
      %v349 = vsel %vm292, %v305, 0.0
      %v350 = vsel %vm292, %v308, 0.0
      %v351 = vsel %vm292, %v311, 0.0
      %v352 = vsel %vm292, %v314, 0.0
      %v353 = vsel %vm292, %v317, 0.0
      %v354 = vld [vmem:[%s1] sm:$0xf]
      %vm371 = vcmask 1046528
      %v372 = vrot.slane %v336, 1
      %v373 = vrot.slane %v294, 1
      %v374 = vsel %vm371, %v372, %v373
      %v375 = vrot.slane %v345, 1
      %v376 = vsel %vm371, %v373, %v375
      %v377 = vrot.slane %v337, 1
      %v378 = vrot.slane %v297, 1
      %v379 = vsel %vm371, %v377, %v378
      %v380 = vrot.slane %v346, 1
      %v381 = vsel %vm371, %v378, %v380
      %v382 = vrot.slane %v338, 1
      %v383 = vrot.slane %v300, 1
      %v384 = vsel %vm371, %v382, %v383
      %v385 = vrot.slane %v347, 1
      %v386 = vsel %vm371, %v383, %v385
      %v387 = vrot.slane %v339, 1
      %v388 = vrot.slane %v303, 1
      %v389 = vsel %vm371, %v387, %v388
      %v390 = vrot.slane %v348, 1
      %v391 = vsel %vm371, %v388, %v390
      %v392 = vrot.slane %v340, 1
      %v393 = vrot.slane %v306, 1
      %v394 = vsel %vm371, %v392, %v393
      %v395 = vrot.slane %v349, 1
      %v396 = vsel %vm371, %v393, %v395
      %v397 = vrot.slane %v341, 1
      %v398 = vrot.slane %v309, 1
      %v399 = vsel %vm371, %v397, %v398
      %v400 = vrot.slane %v350, 1
      %v401 = vsel %vm371, %v398, %v400
      %v402 = vrot.slane %v342, 1
      %v403 = vrot.slane %v312, 1
      %v404 = vsel %vm371, %v402, %v403
      %v405 = vrot.slane %v351, 1
      %v406 = vsel %vm371, %v403, %v405
      %v407 = vrot.slane %v343, 1
      %v408 = vrot.slane %v315, 1
      %v409 = vsel %vm371, %v407, %v408
      %v410 = vrot.slane %v352, 1
      %v411 = vsel %vm371, %v408, %v410
      %s412 = scalar_lea.vmem %s1, 4
      %v413 = vld [vmem:[%s412] sm:$0xf]
      %vm414 = vcmask 31744
      %v415 = vsel %vm414, %v374, 0
      %v417 = vsel %vm414, %v376, 0
      %v419 = vsel %vm414, %v379, 0
      %v421 = vsel %vm414, %v381, 0
      %v423 = vsel %vm414, %v384, 0
      %v425 = vsel %vm414, %v386, 0
      %v427 = vsel %vm414, %v389, 0
      %v429 = vsel %vm414, %v391, 0
      %v431 = vsel %vm414, %v394, 0
      %v433 = vsel %vm414, %v396, 0
      %v435 = vsel %vm414, %v399, 0
      %v437 = vsel %vm414, %v401, 0
      %v439 = vsel %vm414, %v404, 0
      %v441 = vsel %vm414, %v406, 0
      %v443 = vsel %vm414, %v409, 0
      %v445 = vsel %vm414, %v411, 0
      %vm447 = vcmask 1043456
      %v449 = vsel %vm447, %v413, 0
      %451 = vmatprep.subr.mxu0 0.0
      %452 = vmatpush1.msra.mxu0 0.0
      %453 = vmatprep.subr.mxu0 0.0
      %454 = vmatpush1.msra.mxu0 0.0
      %455 = vmatprep.subr.mxu0 0.0
      %456 = vmatpush1.msra.mxu0 0.0
      %457 = vmatprep.subr.mxu0 0.0
      %458 = vmatpush1.msra.mxu0 0.0
      %459 = vmatprep.subr.mxu0 0.0
      %460 = vmatpush1.msra.mxu0 0.0
      %461 = vmatprep.subr.mxu0 0.0
      %462 = vmatpush1.msra.mxu0 0.0
      %463 = vmatprep.subr.mxu0 0.0
      %464 = vmatpush1.msra.mxu0 0.0
      %465 = vmatprep.subr.mxu0 0.0
      %466 = vmatpush1.msra.mxu0 0.0
      %467 = vmatprep.subr.mxu0 0.0
      %468 = vmatpush1.msra.mxu0 0.0
      %469 = vmatprep.subr.mxu0 0.0
      %470 = vmatpush1.msra.mxu0 0.0
      %471 = vmatprep.subr.mxu0 0.0
      %472 = vmatpush1.msra.mxu0 0.0
      %473 = vmatprep.subr.mxu0 0.0
      %474 = vmatpush1.msra.mxu0 0.0
      %475 = vmatprep.subr.mxu0 0.0
      %476 = vmatpush1.msra.mxu0 0.0
      %477 = vmatprep.subr.mxu0 0.0
      %478 = vmatpush1.msra.mxu0 0.0
      %479 = vmatprep.subr.mxu0 0.0
      %480 = vmatpush1.msra.mxu0 0.0
      %481 = vmatprep.subr.mxu0 0.0
      %482 = vmatpush1.msra.mxu0 %v449
      %483 = vmatprep.subr.mxu0 0.0
      %484 = vmatpush2.msra.mxu0 0.0
      %485 = vmatprep.subr.mxu0 0.0
      %486 = vmatpush2.msra.mxu0 0.0
      %487 = vmatprep.subr.mxu0 0.0
      %488 = vmatpush2.msra.mxu0 0.0
      %489 = vmatprep.subr.mxu0 0.0
      %490 = vmatpush2.msra.mxu0 0.0
      %491 = vmatprep.subr.mxu0 0.0
      %492 = vmatpush2.msra.mxu0 0.0
      %493 = vmatprep.subr.mxu0 0.0
      %494 = vmatpush2.msra.mxu0 0.0
      %495 = vmatprep.subr.mxu0 0.0
      %496 = vmatpush2.msra.mxu0 0.0
      %497 = vmatprep.subr.mxu0 0.0
      %498 = vmatpush2.msra.mxu0 0.0
      %499 = vmatprep.subr.mxu0 0.0
      %500 = vmatpush2.msra.mxu0 0.0
      %501 = vmatprep.subr.mxu0 0.0
      %502 = vmatpush2.msra.mxu0 0.0
      %503 = vmatprep.subr.mxu0 0.0
      %504 = vmatpush2.msra.mxu0 0.0
      %505 = vmatprep.subr.mxu0 0.0
      %506 = vmatpush2.msra.mxu0 0.0
      %507 = vmatprep.subr.mxu0 0.0
      %508 = vmatpush2.msra.mxu0 0.0
      %509 = vmatprep.subr.mxu0 0.0
      %510 = vmatpush2.msra.mxu0 0.0
      %511 = vmatprep.subr.mxu0 0.0
      %512 = vmatpush2.msra.mxu0 0.0
      %513 = vmatprep.subr.mxu0 0.0
      %514 = vmatpush2.msra.mxu0 0.0
      %515 = vmatprep.mubr.f32.mxu0 0.0
      %516 = vmatmul.mubr.f32.gmra.mxu0 %v415
      %v517 = vpop.f32.mrf.mxu0
      %v518 = vadd.f32 0.0, %v517
      %v519 = vpop.f32.mrf.mxu0
      %520 = vmatprep.mubr.f32.mxu0 0.0
      %521 = vmatmul.mubr.f32.gmra.mxu0 %v417
      %v522 = vpop.f32.mrf.mxu0
      %v523 = vadd.f32 0.0, %v522
      %v524 = vpop.f32.mrf.mxu0
      %525 = vmatprep.mubr.f32.mxu0 0.0
      %526 = vmatmul.mubr.f32.gmra.mxu0 %v419
      %v527 = vpop.f32.mrf.mxu0
      %v528 = vadd.f32 0.0, %v527
      %v529 = vpop.f32.mrf.mxu0
      %530 = vmatprep.mubr.f32.mxu0 0.0
      %531 = vmatmul.mubr.f32.gmra.mxu0 %v421
      %v532 = vpop.f32.mrf.mxu0
      %v533 = vadd.f32 0.0, %v532
      %v534 = vpop.f32.mrf.mxu0
      %535 = vmatprep.mubr.f32.mxu0 0.0
      %536 = vmatmul.mubr.f32.gmra.mxu0 %v423
      %v537 = vpop.f32.mrf.mxu0
      %v538 = vadd.f32 0.0, %v537
      %v539 = vpop.f32.mrf.mxu0
      %540 = vmatprep.mubr.f32.mxu0 0.0
      %541 = vmatmul.mubr.f32.gmra.mxu0 %v425
      %v542 = vpop.f32.mrf.mxu0
      %v543 = vadd.f32 0.0, %v542
      %v544 = vpop.f32.mrf.mxu0
      %545 = vmatprep.mubr.f32.mxu0 0.0
      %546 = vmatmul.mubr.f32.gmra.mxu0 %v427
      %v547 = vpop.f32.mrf.mxu0
      %v548 = vadd.f32 0.0, %v547
      %v549 = vpop.f32.mrf.mxu0
      %550 = vmatprep.mubr.f32.mxu0 0.0
      %551 = vmatmul.mubr.f32.gmra.mxu0 %v429
      %v552 = vpop.f32.mrf.mxu0
      %v553 = vadd.f32 0.0, %v552
      %v554 = vpop.f32.mrf.mxu0
      %555 = vmatprep.mubr.f32.mxu0 0.0
      %556 = vmatmul.mubr.f32.gmra.mxu0 %v431
      %v557 = vpop.f32.mrf.mxu0
      %v558 = vadd.f32 0.0, %v557
      %v559 = vpop.f32.mrf.mxu0
      %560 = vmatprep.mubr.f32.mxu0 0.0
      %561 = vmatmul.mubr.f32.gmra.mxu0 %v433
      %v562 = vpop.f32.mrf.mxu0
      %v563 = vadd.f32 0.0, %v562
      %v564 = vpop.f32.mrf.mxu0
      %565 = vmatprep.mubr.f32.mxu0 0.0
      %566 = vmatmul.mubr.f32.gmra.mxu0 %v435
      %v567 = vpop.f32.mrf.mxu0
      %v568 = vadd.f32 0.0, %v567
      %v569 = vpop.f32.mrf.mxu0
      %570 = vmatprep.mubr.f32.mxu0 0.0
      %571 = vmatmul.mubr.f32.gmra.mxu0 %v437
      %v572 = vpop.f32.mrf.mxu0
      %v573 = vadd.f32 0.0, %v572
      %v574 = vpop.f32.mrf.mxu0
      %575 = vmatprep.mubr.f32.mxu0 0.0
      %576 = vmatmul.mubr.f32.gmra.mxu0 %v439
      %v577 = vpop.f32.mrf.mxu0
      %v578 = vadd.f32 0.0, %v577
      %v579 = vpop.f32.mrf.mxu0
      %580 = vmatprep.mubr.f32.mxu0 0.0
      %581 = vmatmul.mubr.f32.gmra.mxu0 %v441
      %v582 = vpop.f32.mrf.mxu0
      %v583 = vadd.f32 0.0, %v582
      %v584 = vpop.f32.mrf.mxu0
      %585 = vmatprep.mubr.f32.mxu0 0.0
      %586 = vmatmul.mubr.f32.gmra.mxu0 %v443
      %v587 = vpop.f32.mrf.mxu0
      %v588 = vadd.f32 0.0, %v587
      %v589 = vpop.f32.mrf.mxu0
      %590 = vmatprep.mubr.f32.mxu0 0.0
      %591 = vmatmul.mubr.f32.gmra.mxu0 %v445
      %v592 = vpop.f32.mrf.mxu0
      %v593 = vadd.f32 0.0, %v592
      %v594 = vpop.f32.mrf.mxu0
      %595 = vdwg.mxu0
      %v596 = vsel %vm414, %v336, 0
      %v598 = vsel %vm414, %v294, 0
      %v600 = vsel %vm414, %v337, 0
      %v602 = vsel %vm414, %v297, 0
      %v604 = vsel %vm414, %v338, 0
      %v606 = vsel %vm414, %v300, 0
      %v608 = vsel %vm414, %v339, 0
      %v610 = vsel %vm414, %v303, 0
      %v612 = vsel %vm414, %v340, 0
      %v614 = vsel %vm414, %v306, 0
      %v616 = vsel %vm414, %v341, 0
      %v618 = vsel %vm414, %v309, 0
      %v620 = vsel %vm414, %v342, 0
      %v622 = vsel %vm414, %v312, 0
      %v624 = vsel %vm414, %v343, 0
      %v626 = vsel %vm414, %v315, 0
      %v629 = vsel %vm447, %v354, 0
      %631 = vmatprep.subr.mxu0 0.0
      %632 = vmatpush1.msra.mxu0 0.0
      %633 = vmatprep.subr.mxu0 0.0
      %634 = vmatpush1.msra.mxu0 0.0
      %635 = vmatprep.subr.mxu0 0.0
      %636 = vmatpush1.msra.mxu0 0.0
      %637 = vmatprep.subr.mxu0 0.0
      %638 = vmatpush1.msra.mxu0 0.0
      %639 = vmatprep.subr.mxu0 0.0
      %640 = vmatpush1.msra.mxu0 0.0
      %641 = vmatprep.subr.mxu0 0.0
      %642 = vmatpush1.msra.mxu0 0.0
      %643 = vmatprep.subr.mxu0 0.0
      %644 = vmatpush1.msra.mxu0 0.0
      %645 = vmatprep.subr.mxu0 0.0
      %646 = vmatpush1.msra.mxu0 0.0
      %647 = vmatprep.subr.mxu0 0.0
      %648 = vmatpush1.msra.mxu0 0.0
      %649 = vmatprep.subr.mxu0 0.0
      %650 = vmatpush1.msra.mxu0 0.0
      %651 = vmatprep.subr.mxu0 0.0
      %652 = vmatpush1.msra.mxu0 0.0
      %653 = vmatprep.subr.mxu0 0.0
      %654 = vmatpush1.msra.mxu0 0.0
      %655 = vmatprep.subr.mxu0 0.0
      %656 = vmatpush1.msra.mxu0 0.0
      %657 = vmatprep.subr.mxu0 0.0
      %658 = vmatpush1.msra.mxu0 0.0
      %659 = vmatprep.subr.mxu0 0.0
      %660 = vmatpush1.msra.mxu0 0.0
      %661 = vmatprep.subr.mxu0 0.0
      %662 = vmatpush1.msra.mxu0 %v629
      %663 = vmatprep.subr.mxu0 0.0
      %664 = vmatpush2.msra.mxu0 0.0
      %665 = vmatprep.subr.mxu0 0.0
      %666 = vmatpush2.msra.mxu0 0.0
      %667 = vmatprep.subr.mxu0 0.0
      %668 = vmatpush2.msra.mxu0 0.0
      %669 = vmatprep.subr.mxu0 0.0
      %670 = vmatpush2.msra.mxu0 0.0
      %671 = vmatprep.subr.mxu0 0.0
      %672 = vmatpush2.msra.mxu0 0.0
      %673 = vmatprep.subr.mxu0 0.0
      %674 = vmatpush2.msra.mxu0 0.0
      %675 = vmatprep.subr.mxu0 0.0
      %676 = vmatpush2.msra.mxu0 0.0
      %677 = vmatprep.subr.mxu0 0.0
      %678 = vmatpush2.msra.mxu0 0.0
      %679 = vmatprep.subr.mxu0 0.0
      %680 = vmatpush2.msra.mxu0 0.0
      %681 = vmatprep.subr.mxu0 0.0
      %682 = vmatpush2.msra.mxu0 0.0
      %683 = vmatprep.subr.mxu0 0.0
      %684 = vmatpush2.msra.mxu0 0.0
      %685 = vmatprep.subr.mxu0 0.0
      %686 = vmatpush2.msra.mxu0 0.0
      %687 = vmatprep.subr.mxu0 0.0
      %688 = vmatpush2.msra.mxu0 0.0
      %689 = vmatprep.subr.mxu0 0.0
      %690 = vmatpush2.msra.mxu0 0.0
      %691 = vmatprep.subr.mxu0 0.0
      %692 = vmatpush2.msra.mxu0 0.0
      %693 = vmatprep.subr.mxu0 0.0
      %694 = vmatpush2.msra.mxu0 0.0
      %695 = vmatprep.mubr.f32.mxu0 0.0
      %696 = vmatmul.mubr.f32.gmra.mxu0 %v596
      %v697 = vpop.f32.mrf.mxu0
      %v698 = vadd.f32 %v518, %v697
      %v699 = vpop.f32.mrf.mxu0
      %700 = vmatprep.mubr.f32.mxu0 0.0
      %701 = vmatmul.mubr.f32.gmra.mxu0 %v598
      %v702 = vpop.f32.mrf.mxu0
      %v703 = vadd.f32 %v523, %v702
      %v704 = vpop.f32.mrf.mxu0
      %705 = vmatprep.mubr.f32.mxu0 0.0
      %706 = vmatmul.mubr.f32.gmra.mxu0 %v600
      %v707 = vpop.f32.mrf.mxu0
      %v708 = vadd.f32 %v528, %v707
      %v709 = vpop.f32.mrf.mxu0
      %710 = vmatprep.mubr.f32.mxu0 0.0
      %711 = vmatmul.mubr.f32.gmra.mxu0 %v602
      %v712 = vpop.f32.mrf.mxu0
      %v713 = vadd.f32 %v533, %v712
      %v714 = vpop.f32.mrf.mxu0
      %715 = vmatprep.mubr.f32.mxu0 0.0
      %716 = vmatmul.mubr.f32.gmra.mxu0 %v604
      %v717 = vpop.f32.mrf.mxu0
      %v718 = vadd.f32 %v538, %v717
      %v719 = vpop.f32.mrf.mxu0
      %720 = vmatprep.mubr.f32.mxu0 0.0
      %721 = vmatmul.mubr.f32.gmra.mxu0 %v606
      %v722 = vpop.f32.mrf.mxu0
      %v723 = vadd.f32 %v543, %v722
      %v724 = vpop.f32.mrf.mxu0
      %725 = vmatprep.mubr.f32.mxu0 0.0
      %726 = vmatmul.mubr.f32.gmra.mxu0 %v608
      %v727 = vpop.f32.mrf.mxu0
      %v728 = vadd.f32 %v548, %v727
      %v729 = vpop.f32.mrf.mxu0
      %730 = vmatprep.mubr.f32.mxu0 0.0
      %731 = vmatmul.mubr.f32.gmra.mxu0 %v610
      %v732 = vpop.f32.mrf.mxu0
      %v733 = vadd.f32 %v553, %v732
      %v734 = vpop.f32.mrf.mxu0
      %735 = vmatprep.mubr.f32.mxu0 0.0
      %736 = vmatmul.mubr.f32.gmra.mxu0 %v612
      %v737 = vpop.f32.mrf.mxu0
      %v738 = vadd.f32 %v558, %v737
      %v739 = vpop.f32.mrf.mxu0
      %740 = vmatprep.mubr.f32.mxu0 0.0
      %741 = vmatmul.mubr.f32.gmra.mxu0 %v614
      %v742 = vpop.f32.mrf.mxu0
      %v743 = vadd.f32 %v563, %v742
      %v744 = vpop.f32.mrf.mxu0
      %745 = vmatprep.mubr.f32.mxu0 0.0
      %746 = vmatmul.mubr.f32.gmra.mxu0 %v616
      %v747 = vpop.f32.mrf.mxu0
      %v748 = vadd.f32 %v568, %v747
      %v749 = vpop.f32.mrf.mxu0
      %750 = vmatprep.mubr.f32.mxu0 0.0
      %751 = vmatmul.mubr.f32.gmra.mxu0 %v618
      %v752 = vpop.f32.mrf.mxu0
      %v753 = vadd.f32 %v573, %v752
      %v754 = vpop.f32.mrf.mxu0
      %755 = vmatprep.mubr.f32.mxu0 0.0
      %756 = vmatmul.mubr.f32.gmra.mxu0 %v620
      %v757 = vpop.f32.mrf.mxu0
      %v758 = vadd.f32 %v578, %v757
      %v759 = vpop.f32.mrf.mxu0
      %760 = vmatprep.mubr.f32.mxu0 0.0
      %761 = vmatmul.mubr.f32.gmra.mxu0 %v622
      %v762 = vpop.f32.mrf.mxu0
      %v763 = vadd.f32 %v583, %v762
      %v764 = vpop.f32.mrf.mxu0
      %765 = vmatprep.mubr.f32.mxu0 0.0
      %766 = vmatmul.mubr.f32.gmra.mxu0 %v624
      %v767 = vpop.f32.mrf.mxu0
      %v768 = vadd.f32 %v588, %v767
      %v769 = vpop.f32.mrf.mxu0
      %770 = vmatprep.mubr.f32.mxu0 0.0
      %771 = vmatmul.mubr.f32.gmra.mxu0 %v626
      %v772 = vpop.f32.mrf.mxu0
      %v773 = vadd.f32 %v593, %v772
      %v774 = vpop.f32.mrf.mxu0
      %775 = vdwg.mxu0
      %vm776 = vcmask 1045504
      %v777 = vrot.slane %v336, 2
      %v778 = vrot.slane %v294, 2
      %v779 = vsel %vm776, %v777, %v778
      %v780 = vrot.slane %v345, 2
      %v781 = vsel %vm776, %v778, %v780
      %v782 = vrot.slane %v337, 2
      %v783 = vrot.slane %v297, 2
      %v784 = vsel %vm776, %v782, %v783
      %v785 = vrot.slane %v346, 2
      %v786 = vsel %vm776, %v783, %v785
      %v787 = vrot.slane %v338, 2
      %v788 = vrot.slane %v300, 2
      %v789 = vsel %vm776, %v787, %v788
      %v790 = vrot.slane %v347, 2
      %v791 = vsel %vm776, %v788, %v790
      %v792 = vrot.slane %v339, 2
      %v793 = vrot.slane %v303, 2
      %v794 = vsel %vm776, %v792, %v793
      %v795 = vrot.slane %v348, 2
      %v796 = vsel %vm776, %v793, %v795
      %v797 = vrot.slane %v340, 2
      %v798 = vrot.slane %v306, 2
      %v799 = vsel %vm776, %v797, %v798
      %v800 = vrot.slane %v349, 2
      %v801 = vsel %vm776, %v798, %v800
      %v802 = vrot.slane %v341, 2
      %v803 = vrot.slane %v309, 2
      %v804 = vsel %vm776, %v802, %v803
      %v805 = vrot.slane %v350, 2
      %v806 = vsel %vm776, %v803, %v805
      %v807 = vrot.slane %v342, 2
      %v808 = vrot.slane %v312, 2
      %v809 = vsel %vm776, %v807, %v808
      %v810 = vrot.slane %v351, 2
      %v811 = vsel %vm776, %v808, %v810
      %v812 = vrot.slane %v343, 2
      %v813 = vrot.slane %v315, 2
      %v814 = vsel %vm776, %v812, %v813
      %v815 = vrot.slane %v352, 2
      %v816 = vsel %vm776, %v813, %v815
      %s817 = scalar_lea.vmem %s1, 8
      %v818 = vld [vmem:[%s817] sm:$0xf]
      %v819 = vsel %vm414, %v779, 0
      %v821 = vsel %vm414, %v781, 0
      %v823 = vsel %vm414, %v784, 0
      %v825 = vsel %vm414, %v786, 0
      %v827 = vsel %vm414, %v789, 0
      %v829 = vsel %vm414, %v791, 0
      %v831 = vsel %vm414, %v794, 0
      %v833 = vsel %vm414, %v796, 0
      %v835 = vsel %vm414, %v799, 0
      %v837 = vsel %vm414, %v801, 0
      %v839 = vsel %vm414, %v804, 0
      %v841 = vsel %vm414, %v806, 0
      %v843 = vsel %vm414, %v809, 0
      %v845 = vsel %vm414, %v811, 0
      %v847 = vsel %vm414, %v814, 0
      %v849 = vsel %vm414, %v816, 0
      %v852 = vsel %vm447, %v818, 0
      %854 = vmatprep.subr.mxu0 0.0
      %855 = vmatpush1.msra.mxu0 0.0
      %856 = vmatprep.subr.mxu0 0.0
      %857 = vmatpush1.msra.mxu0 0.0
      %858 = vmatprep.subr.mxu0 0.0
      %859 = vmatpush1.msra.mxu0 0.0
      %860 = vmatprep.subr.mxu0 0.0
      %861 = vmatpush1.msra.mxu0 0.0
      %862 = vmatprep.subr.mxu0 0.0
      %863 = vmatpush1.msra.mxu0 0.0
      %864 = vmatprep.subr.mxu0 0.0
      %865 = vmatpush1.msra.mxu0 0.0
      %866 = vmatprep.subr.mxu0 0.0
      %867 = vmatpush1.msra.mxu0 0.0
      %868 = vmatprep.subr.mxu0 0.0
      %869 = vmatpush1.msra.mxu0 0.0
      %870 = vmatprep.subr.mxu0 0.0
      %871 = vmatpush1.msra.mxu0 0.0
      %872 = vmatprep.subr.mxu0 0.0
      %873 = vmatpush1.msra.mxu0 0.0
      %874 = vmatprep.subr.mxu0 0.0
      %875 = vmatpush1.msra.mxu0 0.0
      %876 = vmatprep.subr.mxu0 0.0
      %877 = vmatpush1.msra.mxu0 0.0
      %878 = vmatprep.subr.mxu0 0.0
      %879 = vmatpush1.msra.mxu0 0.0
      %880 = vmatprep.subr.mxu0 0.0
      %881 = vmatpush1.msra.mxu0 0.0
      %882 = vmatprep.subr.mxu0 0.0
      %883 = vmatpush1.msra.mxu0 0.0
      %884 = vmatprep.subr.mxu0 0.0
      %885 = vmatpush1.msra.mxu0 %v852
      %886 = vmatprep.subr.mxu0 0.0
      %887 = vmatpush2.msra.mxu0 0.0
      %888 = vmatprep.subr.mxu0 0.0
      %889 = vmatpush2.msra.mxu0 0.0
      %890 = vmatprep.subr.mxu0 0.0
      %891 = vmatpush2.msra.mxu0 0.0
      %892 = vmatprep.subr.mxu0 0.0
      %893 = vmatpush2.msra.mxu0 0.0
      %894 = vmatprep.subr.mxu0 0.0
      %895 = vmatpush2.msra.mxu0 0.0
      %896 = vmatprep.subr.mxu0 0.0
      %897 = vmatpush2.msra.mxu0 0.0
      %898 = vmatprep.subr.mxu0 0.0
      %899 = vmatpush2.msra.mxu0 0.0
      %900 = vmatprep.subr.mxu0 0.0
      %901 = vmatpush2.msra.mxu0 0.0
      %902 = vmatprep.subr.mxu0 0.0
      %903 = vmatpush2.msra.mxu0 0.0
      %904 = vmatprep.subr.mxu0 0.0
      %905 = vmatpush2.msra.mxu0 0.0
      %906 = vmatprep.subr.mxu0 0.0
      %907 = vmatpush2.msra.mxu0 0.0
      %908 = vmatprep.subr.mxu0 0.0
      %909 = vmatpush2.msra.mxu0 0.0
      %910 = vmatprep.subr.mxu0 0.0
      %911 = vmatpush2.msra.mxu0 0.0
      %912 = vmatprep.subr.mxu0 0.0
      %913 = vmatpush2.msra.mxu0 0.0
      %914 = vmatprep.subr.mxu0 0.0
      %915 = vmatpush2.msra.mxu0 0.0
      %916 = vmatprep.subr.mxu0 0.0
      %917 = vmatpush2.msra.mxu0 0.0
      %918 = vmatprep.mubr.f32.mxu0 0.0
      %919 = vmatmul.mubr.f32.gmra.mxu0 %v819
      %v920 = vpop.f32.mrf.mxu0
      %v921 = vadd.f32 0.0, %v920
      %v922 = vpop.f32.mrf.mxu0
      %923 = vmatprep.mubr.f32.mxu0 0.0
      %924 = vmatmul.mubr.f32.gmra.mxu0 %v821
      %v925 = vpop.f32.mrf.mxu0
      %v926 = vadd.f32 0.0, %v925
      %v927 = vpop.f32.mrf.mxu0
      %928 = vmatprep.mubr.f32.mxu0 0.0
      %929 = vmatmul.mubr.f32.gmra.mxu0 %v823
      %v930 = vpop.f32.mrf.mxu0
      %v931 = vadd.f32 0.0, %v930
      %v932 = vpop.f32.mrf.mxu0
      %933 = vmatprep.mubr.f32.mxu0 0.0
      %934 = vmatmul.mubr.f32.gmra.mxu0 %v825
      %v935 = vpop.f32.mrf.mxu0
      %v936 = vadd.f32 0.0, %v935
      %v937 = vpop.f32.mrf.mxu0
      %938 = vmatprep.mubr.f32.mxu0 0.0
      %939 = vmatmul.mubr.f32.gmra.mxu0 %v827
      %v940 = vpop.f32.mrf.mxu0
      %v941 = vadd.f32 0.0, %v940
      %v942 = vpop.f32.mrf.mxu0
      %943 = vmatprep.mubr.f32.mxu0 0.0
      %944 = vmatmul.mubr.f32.gmra.mxu0 %v829
      %v945 = vpop.f32.mrf.mxu0
      %v946 = vadd.f32 0.0, %v945
      %v947 = vpop.f32.mrf.mxu0
      %948 = vmatprep.mubr.f32.mxu0 0.0
      %949 = vmatmul.mubr.f32.gmra.mxu0 %v831
      %v950 = vpop.f32.mrf.mxu0
      %v951 = vadd.f32 0.0, %v950
      %v952 = vpop.f32.mrf.mxu0
      %953 = vmatprep.mubr.f32.mxu0 0.0
      %954 = vmatmul.mubr.f32.gmra.mxu0 %v833
      %v955 = vpop.f32.mrf.mxu0
      %v956 = vadd.f32 0.0, %v955
      %v957 = vpop.f32.mrf.mxu0
      %958 = vmatprep.mubr.f32.mxu0 0.0
      %959 = vmatmul.mubr.f32.gmra.mxu0 %v835
      %v960 = vpop.f32.mrf.mxu0
      %v961 = vadd.f32 0.0, %v960
      %v962 = vpop.f32.mrf.mxu0
      %963 = vmatprep.mubr.f32.mxu0 0.0
      %964 = vmatmul.mubr.f32.gmra.mxu0 %v837
      %v965 = vpop.f32.mrf.mxu0
      %v966 = vadd.f32 0.0, %v965
      %v967 = vpop.f32.mrf.mxu0
      %968 = vmatprep.mubr.f32.mxu0 0.0
      %969 = vmatmul.mubr.f32.gmra.mxu0 %v839
      %v970 = vpop.f32.mrf.mxu0
      %v971 = vadd.f32 0.0, %v970
      %v972 = vpop.f32.mrf.mxu0
      %973 = vmatprep.mubr.f32.mxu0 0.0
      %974 = vmatmul.mubr.f32.gmra.mxu0 %v841
      %v975 = vpop.f32.mrf.mxu0
      %v976 = vadd.f32 0.0, %v975
      %v977 = vpop.f32.mrf.mxu0
      %978 = vmatprep.mubr.f32.mxu0 0.0
      %979 = vmatmul.mubr.f32.gmra.mxu0 %v843
      %v980 = vpop.f32.mrf.mxu0
      %v981 = vadd.f32 0.0, %v980
      %v982 = vpop.f32.mrf.mxu0
      %983 = vmatprep.mubr.f32.mxu0 0.0
      %984 = vmatmul.mubr.f32.gmra.mxu0 %v845
      %v985 = vpop.f32.mrf.mxu0
      %v986 = vadd.f32 0.0, %v985
      %v987 = vpop.f32.mrf.mxu0
      %988 = vmatprep.mubr.f32.mxu0 0.0
      %989 = vmatmul.mubr.f32.gmra.mxu0 %v847
      %v990 = vpop.f32.mrf.mxu0
      %v991 = vadd.f32 0.0, %v990
      %v992 = vpop.f32.mrf.mxu0
      %993 = vmatprep.mubr.f32.mxu0 0.0
      %994 = vmatmul.mubr.f32.gmra.mxu0 %v849
      %v995 = vpop.f32.mrf.mxu0
      %v996 = vadd.f32 0.0, %v995
      %v997 = vpop.f32.mrf.mxu0
      %998 = vdwg.mxu0
      %v999 = vadd.f32 %v698, %v921
      %v1000 = vadd.f32 %v703, %v926
      %v1001 = vadd.f32 %v708, %v931
      %v1002 = vadd.f32 %v713, %v936
      %v1003 = vadd.f32 %v718, %v941
      %v1004 = vadd.f32 %v723, %v946
      %v1005 = vadd.f32 %v728, %v951
      %v1006 = vadd.f32 %v733, %v956
      %v1007 = vadd.f32 %v738, %v961
      %v1008 = vadd.f32 %v743, %v966
      %v1009 = vadd.f32 %v748, %v971
      %v1010 = vadd.f32 %v753, %v976
      %v1011 = vadd.f32 %v758, %v981
      %v1012 = vadd.f32 %v763, %v986
      %v1013 = vadd.f32 %v768, %v991
      %v1014 = vadd.f32 %v773, %v996
      %s1015 = scalar_lea.vmem %s1, 12
      %v1016 = vld [vmem:[%s1015] sm:$0xf]
      %v1018 = vsel %vm414, %v344, 0
      %v1020 = vsel %vm414, %v318, 0
      %v1023 = vsel %vm447, %v1016, 0
      %1025 = vmatprep.subr.mxu0 0.0
      %1026 = vmatpush1.msra.mxu0 0.0
      %1027 = vmatprep.subr.mxu0 0.0
      %1028 = vmatpush1.msra.mxu0 0.0
      %1029 = vmatprep.subr.mxu0 0.0
      %1030 = vmatpush1.msra.mxu0 0.0
      %1031 = vmatprep.subr.mxu0 0.0
      %1032 = vmatpush1.msra.mxu0 0.0
      %1033 = vmatprep.subr.mxu0 0.0
      %1034 = vmatpush1.msra.mxu0 0.0
      %1035 = vmatprep.subr.mxu0 0.0
      %1036 = vmatpush1.msra.mxu0 0.0
      %1037 = vmatprep.subr.mxu0 0.0
      %1038 = vmatpush1.msra.mxu0 0.0
      %1039 = vmatprep.subr.mxu0 0.0
      %1040 = vmatpush1.msra.mxu0 0.0
      %1041 = vmatprep.subr.mxu0 0.0
      %1042 = vmatpush1.msra.mxu0 0.0
      %1043 = vmatprep.subr.mxu0 0.0
      %1044 = vmatpush1.msra.mxu0 0.0
      %1045 = vmatprep.subr.mxu0 0.0
      %1046 = vmatpush1.msra.mxu0 0.0
      %1047 = vmatprep.subr.mxu0 0.0
      %1048 = vmatpush1.msra.mxu0 0.0
      %1049 = vmatprep.subr.mxu0 0.0
      %1050 = vmatpush1.msra.mxu0 0.0
      %1051 = vmatprep.subr.mxu0 0.0
      %1052 = vmatpush1.msra.mxu0 0.0
      %1053 = vmatprep.subr.mxu0 0.0
      %1054 = vmatpush1.msra.mxu0 0.0
      %1055 = vmatprep.subr.mxu0 0.0
      %1056 = vmatpush1.msra.mxu0 %v1023
      %1057 = vmatprep.subr.mxu0 0.0
      %1058 = vmatpush2.msra.mxu0 0.0
      %1059 = vmatprep.subr.mxu0 0.0
      %1060 = vmatpush2.msra.mxu0 0.0
      %1061 = vmatprep.subr.mxu0 0.0
      %1062 = vmatpush2.msra.mxu0 0.0
      %1063 = vmatprep.subr.mxu0 0.0
      %1064 = vmatpush2.msra.mxu0 0.0
      %1065 = vmatprep.subr.mxu0 0.0
      %1066 = vmatpush2.msra.mxu0 0.0
      %1067 = vmatprep.subr.mxu0 0.0
      %1068 = vmatpush2.msra.mxu0 0.0
      %1069 = vmatprep.subr.mxu0 0.0
      %1070 = vmatpush2.msra.mxu0 0.0
      %1071 = vmatprep.subr.mxu0 0.0
      %1072 = vmatpush2.msra.mxu0 0.0
      %1073 = vmatprep.subr.mxu0 0.0
      %1074 = vmatpush2.msra.mxu0 0.0
      %1075 = vmatprep.subr.mxu0 0.0
      %1076 = vmatpush2.msra.mxu0 0.0
      %1077 = vmatprep.subr.mxu0 0.0
      %1078 = vmatpush2.msra.mxu0 0.0
      %1079 = vmatprep.subr.mxu0 0.0
      %1080 = vmatpush2.msra.mxu0 0.0
      %1081 = vmatprep.subr.mxu0 0.0
      %1082 = vmatpush2.msra.mxu0 0.0
      %1083 = vmatprep.subr.mxu0 0.0
      %1084 = vmatpush2.msra.mxu0 0.0
      %1085 = vmatprep.subr.mxu0 0.0
      %1086 = vmatpush2.msra.mxu0 0.0
      %1087 = vmatprep.subr.mxu0 0.0
      %1088 = vmatpush2.msra.mxu0 0.0
      %1089 = vmatprep.mubr.f32.mxu0 0.0
      %1090 = vmatmul.mubr.f32.gmra.mxu0 %v600
      %v1091 = vpop.f32.mrf.mxu0
      %v1092 = vadd.f32 0.0, %v1091
      %v1093 = vpop.f32.mrf.mxu0
      %1094 = vmatprep.mubr.f32.mxu0 0.0
      %1095 = vmatmul.mubr.f32.gmra.mxu0 %v602
      %v1096 = vpop.f32.mrf.mxu0
      %v1097 = vadd.f32 0.0, %v1096
      %v1098 = vpop.f32.mrf.mxu0
      %1099 = vmatprep.mubr.f32.mxu0 0.0
      %1100 = vmatmul.mubr.f32.gmra.mxu0 %v604
      %v1101 = vpop.f32.mrf.mxu0
      %v1102 = vadd.f32 0.0, %v1101
      %v1103 = vpop.f32.mrf.mxu0
      %1104 = vmatprep.mubr.f32.mxu0 0.0
      %1105 = vmatmul.mubr.f32.gmra.mxu0 %v606
      %v1106 = vpop.f32.mrf.mxu0
      %v1107 = vadd.f32 0.0, %v1106
      %v1108 = vpop.f32.mrf.mxu0
      %1109 = vmatprep.mubr.f32.mxu0 0.0
      %1110 = vmatmul.mubr.f32.gmra.mxu0 %v608
      %v1111 = vpop.f32.mrf.mxu0
      %v1112 = vadd.f32 0.0, %v1111
      %v1113 = vpop.f32.mrf.mxu0
      %1114 = vmatprep.mubr.f32.mxu0 0.0
      %1115 = vmatmul.mubr.f32.gmra.mxu0 %v610
      %v1116 = vpop.f32.mrf.mxu0
      %v1117 = vadd.f32 0.0, %v1116
      %v1118 = vpop.f32.mrf.mxu0
      %1119 = vmatprep.mubr.f32.mxu0 0.0
      %1120 = vmatmul.mubr.f32.gmra.mxu0 %v612
      %v1121 = vpop.f32.mrf.mxu0
      %v1122 = vadd.f32 0.0, %v1121
      %v1123 = vpop.f32.mrf.mxu0
      %1124 = vmatprep.mubr.f32.mxu0 0.0
      %1125 = vmatmul.mubr.f32.gmra.mxu0 %v614
      %v1126 = vpop.f32.mrf.mxu0
      %v1127 = vadd.f32 0.0, %v1126
      %v1128 = vpop.f32.mrf.mxu0
      %1129 = vmatprep.mubr.f32.mxu0 0.0
      %1130 = vmatmul.mubr.f32.gmra.mxu0 %v616
      %v1131 = vpop.f32.mrf.mxu0
      %v1132 = vadd.f32 0.0, %v1131
      %v1133 = vpop.f32.mrf.mxu0
      %1134 = vmatprep.mubr.f32.mxu0 0.0
      %1135 = vmatmul.mubr.f32.gmra.mxu0 %v618
      %v1136 = vpop.f32.mrf.mxu0
      %v1137 = vadd.f32 0.0, %v1136
      %v1138 = vpop.f32.mrf.mxu0
      %1139 = vmatprep.mubr.f32.mxu0 0.0
      %1140 = vmatmul.mubr.f32.gmra.mxu0 %v620
      %v1141 = vpop.f32.mrf.mxu0
      %v1142 = vadd.f32 0.0, %v1141
      %v1143 = vpop.f32.mrf.mxu0
      %1144 = vmatprep.mubr.f32.mxu0 0.0
      %1145 = vmatmul.mubr.f32.gmra.mxu0 %v622
      %v1146 = vpop.f32.mrf.mxu0
      %v1147 = vadd.f32 0.0, %v1146
      %v1148 = vpop.f32.mrf.mxu0
      %1149 = vmatprep.mubr.f32.mxu0 0.0
      %1150 = vmatmul.mubr.f32.gmra.mxu0 %v624
      %v1151 = vpop.f32.mrf.mxu0
      %v1152 = vadd.f32 0.0, %v1151
      %v1153 = vpop.f32.mrf.mxu0
      %1154 = vmatprep.mubr.f32.mxu0 0.0
      %1155 = vmatmul.mubr.f32.gmra.mxu0 %v626
      %v1156 = vpop.f32.mrf.mxu0
      %v1157 = vadd.f32 0.0, %v1156
      %v1158 = vpop.f32.mrf.mxu0
      %1159 = vmatprep.mubr.f32.mxu0 0.0
      %1160 = vmatmul.mubr.f32.gmra.mxu0 %v1018
      %v1161 = vpop.f32.mrf.mxu0
      %v1162 = vadd.f32 0.0, %v1161
      %v1163 = vpop.f32.mrf.mxu0
      %1164 = vmatprep.mubr.f32.mxu0 0.0
      %1165 = vmatmul.mubr.f32.gmra.mxu0 %v1020
      %v1166 = vpop.f32.mrf.mxu0
      %v1167 = vadd.f32 0.0, %v1166
      %v1168 = vpop.f32.mrf.mxu0
      %1169 = vdwg.mxu0
      %v1170 = vadd.f32 %v999, %v1092
      %v1171 = vadd.f32 %v1000, %v1097
      %v1172 = vadd.f32 %v1001, %v1102
      %v1173 = vadd.f32 %v1002, %v1107
      %v1174 = vadd.f32 %v1003, %v1112
      %v1175 = vadd.f32 %v1004, %v1117
      %v1176 = vadd.f32 %v1005, %v1122
      %v1177 = vadd.f32 %v1006, %v1127
      %v1178 = vadd.f32 %v1007, %v1132
      %v1179 = vadd.f32 %v1008, %v1137
      %v1180 = vadd.f32 %v1009, %v1142
      %v1181 = vadd.f32 %v1010, %v1147
      %v1182 = vadd.f32 %v1011, %v1152
      %v1183 = vadd.f32 %v1012, %v1157
      %v1184 = vadd.f32 %v1013, %v1162
      %v1185 = vadd.f32 %v1014, %v1167
      %v1187 = vrot.slane %v344, 1
      %v1188 = vrot.slane %v318, 1
      %v1189 = vsel %vm371, %v1187, %v1188
      %v1190 = vrot.slane %v353, 1
      %v1191 = vsel %vm371, %v1188, %v1190
      %s1192 = scalar_lea.vmem %s1, 16
      %v1193 = vld [vmem:[%s1192] sm:$0xf]
      %v1194 = vsel %vm414, %v1189, 0
      %v1196 = vsel %vm414, %v1191, 0
      %v1199 = vsel %vm447, %v1193, 0
      %1201 = vmatprep.subr.mxu0 0.0
      %1202 = vmatpush1.msra.mxu0 0.0
      %1203 = vmatprep.subr.mxu0 0.0
      %1204 = vmatpush1.msra.mxu0 0.0
      %1205 = vmatprep.subr.mxu0 0.0
      %1206 = vmatpush1.msra.mxu0 0.0
      %1207 = vmatprep.subr.mxu0 0.0
      %1208 = vmatpush1.msra.mxu0 0.0
      %1209 = vmatprep.subr.mxu0 0.0
      %1210 = vmatpush1.msra.mxu0 0.0
      %1211 = vmatprep.subr.mxu0 0.0
      %1212 = vmatpush1.msra.mxu0 0.0
      %1213 = vmatprep.subr.mxu0 0.0
      %1214 = vmatpush1.msra.mxu0 0.0
      %1215 = vmatprep.subr.mxu0 0.0
      %1216 = vmatpush1.msra.mxu0 0.0
      %1217 = vmatprep.subr.mxu0 0.0
      %1218 = vmatpush1.msra.mxu0 0.0
      %1219 = vmatprep.subr.mxu0 0.0
      %1220 = vmatpush1.msra.mxu0 0.0
      %1221 = vmatprep.subr.mxu0 0.0
      %1222 = vmatpush1.msra.mxu0 0.0
      %1223 = vmatprep.subr.mxu0 0.0
      %1224 = vmatpush1.msra.mxu0 0.0
      %1225 = vmatprep.subr.mxu0 0.0
      %1226 = vmatpush1.msra.mxu0 0.0
      %1227 = vmatprep.subr.mxu0 0.0
      %1228 = vmatpush1.msra.mxu0 0.0
      %1229 = vmatprep.subr.mxu0 0.0
      %1230 = vmatpush1.msra.mxu0 0.0
      %1231 = vmatprep.subr.mxu0 0.0
      %1232 = vmatpush1.msra.mxu0 %v1199
      %1233 = vmatprep.subr.mxu0 0.0
      %1234 = vmatpush2.msra.mxu0 0.0
      %1235 = vmatprep.subr.mxu0 0.0
      %1236 = vmatpush2.msra.mxu0 0.0
      %1237 = vmatprep.subr.mxu0 0.0
      %1238 = vmatpush2.msra.mxu0 0.0
      %1239 = vmatprep.subr.mxu0 0.0
      %1240 = vmatpush2.msra.mxu0 0.0
      %1241 = vmatprep.subr.mxu0 0.0
      %1242 = vmatpush2.msra.mxu0 0.0
      %1243 = vmatprep.subr.mxu0 0.0
      %1244 = vmatpush2.msra.mxu0 0.0
      %1245 = vmatprep.subr.mxu0 0.0
      %1246 = vmatpush2.msra.mxu0 0.0
      %1247 = vmatprep.subr.mxu0 0.0
      %1248 = vmatpush2.msra.mxu0 0.0
      %1249 = vmatprep.subr.mxu0 0.0
      %1250 = vmatpush2.msra.mxu0 0.0
      %1251 = vmatprep.subr.mxu0 0.0
      %1252 = vmatpush2.msra.mxu0 0.0
      %1253 = vmatprep.subr.mxu0 0.0
      %1254 = vmatpush2.msra.mxu0 0.0
      %1255 = vmatprep.subr.mxu0 0.0
      %1256 = vmatpush2.msra.mxu0 0.0
      %1257 = vmatprep.subr.mxu0 0.0
      %1258 = vmatpush2.msra.mxu0 0.0
      %1259 = vmatprep.subr.mxu0 0.0
      %1260 = vmatpush2.msra.mxu0 0.0
      %1261 = vmatprep.subr.mxu0 0.0
      %1262 = vmatpush2.msra.mxu0 0.0
      %1263 = vmatprep.subr.mxu0 0.0
      %1264 = vmatpush2.msra.mxu0 0.0
      %1265 = vmatprep.mubr.f32.mxu0 0.0
      %1266 = vmatmul.mubr.f32.gmra.mxu0 %v419
      %v1267 = vpop.f32.mrf.mxu0
      %v1268 = vadd.f32 0.0, %v1267
      %v1269 = vpop.f32.mrf.mxu0
      %1270 = vmatprep.mubr.f32.mxu0 0.0
      %1271 = vmatmul.mubr.f32.gmra.mxu0 %v421
      %v1272 = vpop.f32.mrf.mxu0
      %v1273 = vadd.f32 0.0, %v1272
      %v1274 = vpop.f32.mrf.mxu0
      %1275 = vmatprep.mubr.f32.mxu0 0.0
      %1276 = vmatmul.mubr.f32.gmra.mxu0 %v423
      %v1277 = vpop.f32.mrf.mxu0
      %v1278 = vadd.f32 0.0, %v1277
      %v1279 = vpop.f32.mrf.mxu0
      %1280 = vmatprep.mubr.f32.mxu0 0.0
      %1281 = vmatmul.mubr.f32.gmra.mxu0 %v425
      %v1282 = vpop.f32.mrf.mxu0
      %v1283 = vadd.f32 0.0, %v1282
      %v1284 = vpop.f32.mrf.mxu0
      %1285 = vmatprep.mubr.f32.mxu0 0.0
      %1286 = vmatmul.mubr.f32.gmra.mxu0 %v427
      %v1287 = vpop.f32.mrf.mxu0
      %v1288 = vadd.f32 0.0, %v1287
      %v1289 = vpop.f32.mrf.mxu0
      %1290 = vmatprep.mubr.f32.mxu0 0.0
      %1291 = vmatmul.mubr.f32.gmra.mxu0 %v429
      %v1292 = vpop.f32.mrf.mxu0
      %v1293 = vadd.f32 0.0, %v1292
      %v1294 = vpop.f32.mrf.mxu0
      %1295 = vmatprep.mubr.f32.mxu0 0.0
      %1296 = vmatmul.mubr.f32.gmra.mxu0 %v431
      %v1297 = vpop.f32.mrf.mxu0
      %v1298 = vadd.f32 0.0, %v1297
      %v1299 = vpop.f32.mrf.mxu0
      %1300 = vmatprep.mubr.f32.mxu0 0.0
      %1301 = vmatmul.mubr.f32.gmra.mxu0 %v433
      %v1302 = vpop.f32.mrf.mxu0
      %v1303 = vadd.f32 0.0, %v1302
      %v1304 = vpop.f32.mrf.mxu0
      %1305 = vmatprep.mubr.f32.mxu0 0.0
      %1306 = vmatmul.mubr.f32.gmra.mxu0 %v435
      %v1307 = vpop.f32.mrf.mxu0
      %v1308 = vadd.f32 0.0, %v1307
      %v1309 = vpop.f32.mrf.mxu0
      %1310 = vmatprep.mubr.f32.mxu0 0.0
      %1311 = vmatmul.mubr.f32.gmra.mxu0 %v437
      %v1312 = vpop.f32.mrf.mxu0
      %v1313 = vadd.f32 0.0, %v1312
      %v1314 = vpop.f32.mrf.mxu0
      %1315 = vmatprep.mubr.f32.mxu0 0.0
      %1316 = vmatmul.mubr.f32.gmra.mxu0 %v439
      %v1317 = vpop.f32.mrf.mxu0
      %v1318 = vadd.f32 0.0, %v1317
      %v1319 = vpop.f32.mrf.mxu0
      %1320 = vmatprep.mubr.f32.mxu0 0.0
      %1321 = vmatmul.mubr.f32.gmra.mxu0 %v441
      %v1322 = vpop.f32.mrf.mxu0
      %v1323 = vadd.f32 0.0, %v1322
      %v1324 = vpop.f32.mrf.mxu0
      %1325 = vmatprep.mubr.f32.mxu0 0.0
      %1326 = vmatmul.mubr.f32.gmra.mxu0 %v443
      %v1327 = vpop.f32.mrf.mxu0
      %v1328 = vadd.f32 0.0, %v1327
      %v1329 = vpop.f32.mrf.mxu0
      %1330 = vmatprep.mubr.f32.mxu0 0.0
      %1331 = vmatmul.mubr.f32.gmra.mxu0 %v445
      %v1332 = vpop.f32.mrf.mxu0
      %v1333 = vadd.f32 0.0, %v1332
      %v1334 = vpop.f32.mrf.mxu0
      %1335 = vmatprep.mubr.f32.mxu0 0.0
      %1336 = vmatmul.mubr.f32.gmra.mxu0 %v1194
      %v1337 = vpop.f32.mrf.mxu0
      %v1338 = vadd.f32 0.0, %v1337
      %v1339 = vpop.f32.mrf.mxu0
      %1340 = vmatprep.mubr.f32.mxu0 0.0
      %1341 = vmatmul.mubr.f32.gmra.mxu0 %v1196
      %v1342 = vpop.f32.mrf.mxu0
      %v1343 = vadd.f32 0.0, %v1342
      %v1344 = vpop.f32.mrf.mxu0
      %1345 = vdwg.mxu0
      %v1346 = vadd.f32 %v1170, %v1268
      %v1347 = vadd.f32 %v1171, %v1273
      %v1348 = vadd.f32 %v1172, %v1278
      %v1349 = vadd.f32 %v1173, %v1283
      %v1350 = vadd.f32 %v1174, %v1288
      %v1351 = vadd.f32 %v1175, %v1293
      %v1352 = vadd.f32 %v1176, %v1298
      %v1353 = vadd.f32 %v1177, %v1303
      %v1354 = vadd.f32 %v1178, %v1308
      %v1355 = vadd.f32 %v1179, %v1313
      %v1356 = vadd.f32 %v1180, %v1318
      %v1357 = vadd.f32 %v1181, %v1323
      %v1358 = vadd.f32 %v1182, %v1328
      %v1359 = vadd.f32 %v1183, %v1333
      %v1360 = vadd.f32 %v1184, %v1338
      %v1361 = vadd.f32 %v1185, %v1343
      %v1362 = vrot.slane %v344, 2
      %v1363 = vrot.slane %v318, 2
      %v1364 = vsel %vm776, %v1362, %v1363
      %v1365 = vrot.slane %v353, 2
      %v1366 = vsel %vm776, %v1363, %v1365
      %s1367 = scalar_lea.vmem %s1, 20
      %v1368 = vld [vmem:[%s1367] sm:$0xf]
      %v1369 = vsel %vm414, %v1364, 0
      %v1371 = vsel %vm414, %v1366, 0
      %v1374 = vsel %vm447, %v1368, 0
      %1376 = vmatprep.subr.mxu0 0.0
      %1377 = vmatpush1.msra.mxu0 0.0
      %1378 = vmatprep.subr.mxu0 0.0
      %1379 = vmatpush1.msra.mxu0 0.0
      %1380 = vmatprep.subr.mxu0 0.0
      %1381 = vmatpush1.msra.mxu0 0.0
      %1382 = vmatprep.subr.mxu0 0.0
      %1383 = vmatpush1.msra.mxu0 0.0
      %1384 = vmatprep.subr.mxu0 0.0
      %1385 = vmatpush1.msra.mxu0 0.0
      %1386 = vmatprep.subr.mxu0 0.0
      %1387 = vmatpush1.msra.mxu0 0.0
      %1388 = vmatprep.subr.mxu0 0.0
      %1389 = vmatpush1.msra.mxu0 0.0
      %1390 = vmatprep.subr.mxu0 0.0
      %1391 = vmatpush1.msra.mxu0 0.0
      %1392 = vmatprep.subr.mxu0 0.0
      %1393 = vmatpush1.msra.mxu0 0.0
      %1394 = vmatprep.subr.mxu0 0.0
      %1395 = vmatpush1.msra.mxu0 0.0
      %1396 = vmatprep.subr.mxu0 0.0
      %1397 = vmatpush1.msra.mxu0 0.0
      %1398 = vmatprep.subr.mxu0 0.0
      %1399 = vmatpush1.msra.mxu0 0.0
      %1400 = vmatprep.subr.mxu0 0.0
      %1401 = vmatpush1.msra.mxu0 0.0
      %1402 = vmatprep.subr.mxu0 0.0
      %1403 = vmatpush1.msra.mxu0 0.0
      %1404 = vmatprep.subr.mxu0 0.0
      %1405 = vmatpush1.msra.mxu0 0.0
      %1406 = vmatprep.subr.mxu0 0.0
      %1407 = vmatpush1.msra.mxu0 %v1374
      %1408 = vmatprep.subr.mxu0 0.0
      %1409 = vmatpush2.msra.mxu0 0.0
      %1410 = vmatprep.subr.mxu0 0.0
      %1411 = vmatpush2.msra.mxu0 0.0
      %1412 = vmatprep.subr.mxu0 0.0
      %1413 = vmatpush2.msra.mxu0 0.0
      %1414 = vmatprep.subr.mxu0 0.0
      %1415 = vmatpush2.msra.mxu0 0.0
      %1416 = vmatprep.subr.mxu0 0.0
      %1417 = vmatpush2.msra.mxu0 0.0
      %1418 = vmatprep.subr.mxu0 0.0
      %1419 = vmatpush2.msra.mxu0 0.0
      %1420 = vmatprep.subr.mxu0 0.0
      %1421 = vmatpush2.msra.mxu0 0.0
      %1422 = vmatprep.subr.mxu0 0.0
      %1423 = vmatpush2.msra.mxu0 0.0
      %1424 = vmatprep.subr.mxu0 0.0
      %1425 = vmatpush2.msra.mxu0 0.0
      %1426 = vmatprep.subr.mxu0 0.0
      %1427 = vmatpush2.msra.mxu0 0.0
      %1428 = vmatprep.subr.mxu0 0.0
      %1429 = vmatpush2.msra.mxu0 0.0
      %1430 = vmatprep.subr.mxu0 0.0
      %1431 = vmatpush2.msra.mxu0 0.0
      %1432 = vmatprep.subr.mxu0 0.0
      %1433 = vmatpush2.msra.mxu0 0.0
      %1434 = vmatprep.subr.mxu0 0.0
      %1435 = vmatpush2.msra.mxu0 0.0
      %1436 = vmatprep.subr.mxu0 0.0
      %1437 = vmatpush2.msra.mxu0 0.0
      %1438 = vmatprep.subr.mxu0 0.0
      %1439 = vmatpush2.msra.mxu0 0.0
      %1440 = vmatprep.mubr.f32.mxu0 0.0
      %1441 = vmatmul.mubr.f32.gmra.mxu0 %v823
      %v1442 = vpop.f32.mrf.mxu0
      %v1443 = vadd.f32 0.0, %v1442
      %v1444 = vpop.f32.mrf.mxu0
      %1445 = vmatprep.mubr.f32.mxu0 0.0
      %1446 = vmatmul.mubr.f32.gmra.mxu0 %v825
      %v1447 = vpop.f32.mrf.mxu0
      %v1448 = vadd.f32 0.0, %v1447
      %v1449 = vpop.f32.mrf.mxu0
      %1450 = vmatprep.mubr.f32.mxu0 0.0
      %1451 = vmatmul.mubr.f32.gmra.mxu0 %v827
      %v1452 = vpop.f32.mrf.mxu0
      %v1453 = vadd.f32 0.0, %v1452
      %v1454 = vpop.f32.mrf.mxu0
      %1455 = vmatprep.mubr.f32.mxu0 0.0
      %1456 = vmatmul.mubr.f32.gmra.mxu0 %v829
      %v1457 = vpop.f32.mrf.mxu0
      %v1458 = vadd.f32 0.0, %v1457
      %v1459 = vpop.f32.mrf.mxu0
      %1460 = vmatprep.mubr.f32.mxu0 0.0
      %1461 = vmatmul.mubr.f32.gmra.mxu0 %v831
      %v1462 = vpop.f32.mrf.mxu0
      %v1463 = vadd.f32 0.0, %v1462
      %v1464 = vpop.f32.mrf.mxu0
      %1465 = vmatprep.mubr.f32.mxu0 0.0
      %1466 = vmatmul.mubr.f32.gmra.mxu0 %v833
      %v1467 = vpop.f32.mrf.mxu0
      %v1468 = vadd.f32 0.0, %v1467
      %v1469 = vpop.f32.mrf.mxu0
      %1470 = vmatprep.mubr.f32.mxu0 0.0
      %1471 = vmatmul.mubr.f32.gmra.mxu0 %v835
      %v1472 = vpop.f32.mrf.mxu0
      %v1473 = vadd.f32 0.0, %v1472
      %v1474 = vpop.f32.mrf.mxu0
      %1475 = vmatprep.mubr.f32.mxu0 0.0
      %1476 = vmatmul.mubr.f32.gmra.mxu0 %v837
      %v1477 = vpop.f32.mrf.mxu0
      %v1478 = vadd.f32 0.0, %v1477
      %v1479 = vpop.f32.mrf.mxu0
      %1480 = vmatprep.mubr.f32.mxu0 0.0
      %1481 = vmatmul.mubr.f32.gmra.mxu0 %v839
      %v1482 = vpop.f32.mrf.mxu0
      %v1483 = vadd.f32 0.0, %v1482
      %v1484 = vpop.f32.mrf.mxu0
      %1485 = vmatprep.mubr.f32.mxu0 0.0
      %1486 = vmatmul.mubr.f32.gmra.mxu0 %v841
      %v1487 = vpop.f32.mrf.mxu0
      %v1488 = vadd.f32 0.0, %v1487
      %v1489 = vpop.f32.mrf.mxu0
      %1490 = vmatprep.mubr.f32.mxu0 0.0
      %1491 = vmatmul.mubr.f32.gmra.mxu0 %v843
      %v1492 = vpop.f32.mrf.mxu0
      %v1493 = vadd.f32 0.0, %v1492
      %v1494 = vpop.f32.mrf.mxu0
      %1495 = vmatprep.mubr.f32.mxu0 0.0
      %1496 = vmatmul.mubr.f32.gmra.mxu0 %v845
      %v1497 = vpop.f32.mrf.mxu0
      %v1498 = vadd.f32 0.0, %v1497
      %v1499 = vpop.f32.mrf.mxu0
      %1500 = vmatprep.mubr.f32.mxu0 0.0
      %1501 = vmatmul.mubr.f32.gmra.mxu0 %v847
      %v1502 = vpop.f32.mrf.mxu0
      %v1503 = vadd.f32 0.0, %v1502
      %v1504 = vpop.f32.mrf.mxu0
      %1505 = vmatprep.mubr.f32.mxu0 0.0
      %1506 = vmatmul.mubr.f32.gmra.mxu0 %v849
      %v1507 = vpop.f32.mrf.mxu0
      %v1508 = vadd.f32 0.0, %v1507
      %v1509 = vpop.f32.mrf.mxu0
      %1510 = vmatprep.mubr.f32.mxu0 0.0
      %1511 = vmatmul.mubr.f32.gmra.mxu0 %v1369
      %v1512 = vpop.f32.mrf.mxu0
      %v1513 = vadd.f32 0.0, %v1512
      %v1514 = vpop.f32.mrf.mxu0
      %1515 = vmatprep.mubr.f32.mxu0 0.0
      %1516 = vmatmul.mubr.f32.gmra.mxu0 %v1371
      %v1517 = vpop.f32.mrf.mxu0
      %v1518 = vadd.f32 0.0, %v1517
      %v1519 = vpop.f32.mrf.mxu0
      %1520 = vdwg.mxu0
      %v1521 = vadd.f32 %v1346, %v1443
      %v1522 = vadd.f32 %v1347, %v1448
      %v1523 = vadd.f32 %v1348, %v1453
      %v1524 = vadd.f32 %v1349, %v1458
      %v1525 = vadd.f32 %v1350, %v1463
      %v1526 = vadd.f32 %v1351, %v1468
      %v1527 = vadd.f32 %v1352, %v1473
      %v1528 = vadd.f32 %v1353, %v1478
      %v1529 = vadd.f32 %v1354, %v1483
      %v1530 = vadd.f32 %v1355, %v1488
      %v1531 = vadd.f32 %v1356, %v1493
      %v1532 = vadd.f32 %v1357, %v1498
      %v1533 = vadd.f32 %v1358, %v1503
      %v1534 = vadd.f32 %v1359, %v1508
      %v1535 = vadd.f32 %v1360, %v1513
      %v1536 = vadd.f32 %v1361, %v1518
      %s1537 = scalar_lea.vmem %s1, 24
      %v1538 = vld [vmem:[%s1537] sm:$0xf]
      %v1540 = vsel %vm447, %v1538, 0
      %1542 = vmatprep.subr.mxu0 0.0
      %1543 = vmatpush1.msra.mxu0 0.0
      %1544 = vmatprep.subr.mxu0 0.0
      %1545 = vmatpush1.msra.mxu0 0.0
      %1546 = vmatprep.subr.mxu0 0.0
      %1547 = vmatpush1.msra.mxu0 0.0
      %1548 = vmatprep.subr.mxu0 0.0
      %1549 = vmatpush1.msra.mxu0 0.0
      %1550 = vmatprep.subr.mxu0 0.0
      %1551 = vmatpush1.msra.mxu0 0.0
      %1552 = vmatprep.subr.mxu0 0.0
      %1553 = vmatpush1.msra.mxu0 0.0
      %1554 = vmatprep.subr.mxu0 0.0
      %1555 = vmatpush1.msra.mxu0 0.0
      %1556 = vmatprep.subr.mxu0 0.0
      %1557 = vmatpush1.msra.mxu0 0.0
      %1558 = vmatprep.subr.mxu0 0.0
      %1559 = vmatpush1.msra.mxu0 0.0
      %1560 = vmatprep.subr.mxu0 0.0
      %1561 = vmatpush1.msra.mxu0 0.0
      %1562 = vmatprep.subr.mxu0 0.0
      %1563 = vmatpush1.msra.mxu0 0.0
      %1564 = vmatprep.subr.mxu0 0.0
      %1565 = vmatpush1.msra.mxu0 0.0
      %1566 = vmatprep.subr.mxu0 0.0
      %1567 = vmatpush1.msra.mxu0 0.0
      %1568 = vmatprep.subr.mxu0 0.0
      %1569 = vmatpush1.msra.mxu0 0.0
      %1570 = vmatprep.subr.mxu0 0.0
      %1571 = vmatpush1.msra.mxu0 0.0
      %1572 = vmatprep.subr.mxu0 0.0
      %1573 = vmatpush1.msra.mxu0 %v1540
      %1574 = vmatprep.subr.mxu0 0.0
      %1575 = vmatpush2.msra.mxu0 0.0
      %1576 = vmatprep.subr.mxu0 0.0
      %1577 = vmatpush2.msra.mxu0 0.0
      %1578 = vmatprep.subr.mxu0 0.0
      %1579 = vmatpush2.msra.mxu0 0.0
      %1580 = vmatprep.subr.mxu0 0.0
      %1581 = vmatpush2.msra.mxu0 0.0
      %1582 = vmatprep.subr.mxu0 0.0
      %1583 = vmatpush2.msra.mxu0 0.0
      %1584 = vmatprep.subr.mxu0 0.0
      %1585 = vmatpush2.msra.mxu0 0.0
      %1586 = vmatprep.subr.mxu0 0.0
      %1587 = vmatpush2.msra.mxu0 0.0
      %1588 = vmatprep.subr.mxu0 0.0
      %1589 = vmatpush2.msra.mxu0 0.0
      %1590 = vmatprep.subr.mxu0 0.0
      %1591 = vmatpush2.msra.mxu0 0.0
      %1592 = vmatprep.subr.mxu0 0.0
      %1593 = vmatpush2.msra.mxu0 0.0
      %1594 = vmatprep.subr.mxu0 0.0
      %1595 = vmatpush2.msra.mxu0 0.0
      %1596 = vmatprep.subr.mxu0 0.0
      %1597 = vmatpush2.msra.mxu0 0.0
      %1598 = vmatprep.subr.mxu0 0.0
      %1599 = vmatpush2.msra.mxu0 0.0
      %1600 = vmatprep.subr.mxu0 0.0
      %1601 = vmatpush2.msra.mxu0 0.0
      %1602 = vmatprep.subr.mxu0 0.0
      %1603 = vmatpush2.msra.mxu0 0.0
      %1604 = vmatprep.subr.mxu0 0.0
      %1605 = vmatpush2.msra.mxu0 0.0
      %1606 = vmatprep.mubr.f32.mxu0 0.0
      %1607 = vmatmul.mubr.f32.gmra.mxu0 %v604
      %v1608 = vpop.f32.mrf.mxu0
      %v1609 = vadd.f32 0.0, %v1608
      %v1610 = vpop.f32.mrf.mxu0
      %1611 = vmatprep.mubr.f32.mxu0 0.0
      %1612 = vmatmul.mubr.f32.gmra.mxu0 %v606
      %v1613 = vpop.f32.mrf.mxu0
      %v1614 = vadd.f32 0.0, %v1613
      %v1615 = vpop.f32.mrf.mxu0
      %1616 = vmatprep.mubr.f32.mxu0 0.0
      %1617 = vmatmul.mubr.f32.gmra.mxu0 %v608
      %v1618 = vpop.f32.mrf.mxu0
      %v1619 = vadd.f32 0.0, %v1618
      %v1620 = vpop.f32.mrf.mxu0
      %1621 = vmatprep.mubr.f32.mxu0 0.0
      %1622 = vmatmul.mubr.f32.gmra.mxu0 %v610
      %v1623 = vpop.f32.mrf.mxu0
      %v1624 = vadd.f32 0.0, %v1623
      %v1625 = vpop.f32.mrf.mxu0
      %1626 = vmatprep.mubr.f32.mxu0 0.0
      %1627 = vmatmul.mubr.f32.gmra.mxu0 %v612
      %v1628 = vpop.f32.mrf.mxu0
      %v1629 = vadd.f32 0.0, %v1628
      %v1630 = vpop.f32.mrf.mxu0
      %1631 = vmatprep.mubr.f32.mxu0 0.0
      %1632 = vmatmul.mubr.f32.gmra.mxu0 %v614
      %v1633 = vpop.f32.mrf.mxu0
      %v1634 = vadd.f32 0.0, %v1633
      %v1635 = vpop.f32.mrf.mxu0
      %1636 = vmatprep.mubr.f32.mxu0 0.0
      %1637 = vmatmul.mubr.f32.gmra.mxu0 %v616
      %v1638 = vpop.f32.mrf.mxu0
      %v1639 = vadd.f32 0.0, %v1638
      %v1640 = vpop.f32.mrf.mxu0
      %1641 = vmatprep.mubr.f32.mxu0 0.0
      %1642 = vmatmul.mubr.f32.gmra.mxu0 %v618
      %v1643 = vpop.f32.mrf.mxu0
      %v1644 = vadd.f32 0.0, %v1643
      %v1645 = vpop.f32.mrf.mxu0
      %1646 = vmatprep.mubr.f32.mxu0 0.0
      %1647 = vmatmul.mubr.f32.gmra.mxu0 %v620
      %v1648 = vpop.f32.mrf.mxu0
      %v1649 = vadd.f32 0.0, %v1648
      %v1650 = vpop.f32.mrf.mxu0
      %1651 = vmatprep.mubr.f32.mxu0 0.0
      %1652 = vmatmul.mubr.f32.gmra.mxu0 %v622
      %v1653 = vpop.f32.mrf.mxu0
      %v1654 = vadd.f32 0.0, %v1653
      %v1655 = vpop.f32.mrf.mxu0
      %1656 = vmatprep.mubr.f32.mxu0 0.0
      %1657 = vmatmul.mubr.f32.gmra.mxu0 %v624
      %v1658 = vpop.f32.mrf.mxu0
      %v1659 = vadd.f32 0.0, %v1658
      %v1660 = vpop.f32.mrf.mxu0
      %1661 = vmatprep.mubr.f32.mxu0 0.0
      %1662 = vmatmul.mubr.f32.gmra.mxu0 %v626
      %v1663 = vpop.f32.mrf.mxu0
      %v1664 = vadd.f32 0.0, %v1663
      %v1665 = vpop.f32.mrf.mxu0
      %1666 = vmatprep.mubr.f32.mxu0 0.0
      %1667 = vmatmul.mubr.f32.gmra.mxu0 %v1018
      %v1668 = vpop.f32.mrf.mxu0
      %v1669 = vadd.f32 0.0, %v1668
      %v1670 = vpop.f32.mrf.mxu0
      %1671 = vmatprep.mubr.f32.mxu0 0.0
      %1672 = vmatmul.mubr.f32.gmra.mxu0 %v1020
      %v1673 = vpop.f32.mrf.mxu0
      %v1674 = vadd.f32 0.0, %v1673
      %v1675 = vpop.f32.mrf.mxu0
      %1676 = vmatprep.mubr.f32.mxu0 0.0
      %1677 = vmatmul.mubr.f32.gmra.mxu0 %v596
      %v1678 = vpop.f32.mrf.mxu0
      %v1679 = vadd.f32 0.0, %v1678
      %v1680 = vpop.f32.mrf.mxu0
      %1681 = vmatprep.mubr.f32.mxu0 0.0
      %1682 = vmatmul.mubr.f32.gmra.mxu0 %v598
      %v1683 = vpop.f32.mrf.mxu0
      %v1684 = vadd.f32 0.0, %v1683
      %v1685 = vpop.f32.mrf.mxu0
      %1686 = vdwg.mxu0
      %v1687 = vadd.f32 %v1521, %v1609
      %v1688 = vadd.f32 %v1522, %v1614
      %v1689 = vadd.f32 %v1523, %v1619
      %v1690 = vadd.f32 %v1524, %v1624
      %v1691 = vadd.f32 %v1525, %v1629
      %v1692 = vadd.f32 %v1526, %v1634
      %v1693 = vadd.f32 %v1527, %v1639
      %v1694 = vadd.f32 %v1528, %v1644
      %v1695 = vadd.f32 %v1529, %v1649
      %v1696 = vadd.f32 %v1530, %v1654
      %v1697 = vadd.f32 %v1531, %v1659
      %v1698 = vadd.f32 %v1532, %v1664
      %v1699 = vadd.f32 %v1533, %v1669
      %v1700 = vadd.f32 %v1534, %v1674
      %v1701 = vadd.f32 %v1535, %v1679
      %v1702 = vadd.f32 %v1536, %v1684
      %s1703 = scalar_lea.vmem %s1, 28
      %v1704 = vld [vmem:[%s1703] sm:$0xf]
      %v1706 = vsel %vm447, %v1704, 0
      %1708 = vmatprep.subr.mxu0 0.0
      %1709 = vmatpush1.msra.mxu0 0.0
      %1710 = vmatprep.subr.mxu0 0.0
      %1711 = vmatpush1.msra.mxu0 0.0
      %1712 = vmatprep.subr.mxu0 0.0
      %1713 = vmatpush1.msra.mxu0 0.0
      %1714 = vmatprep.subr.mxu0 0.0
      %1715 = vmatpush1.msra.mxu0 0.0
      %1716 = vmatprep.subr.mxu0 0.0
      %1717 = vmatpush1.msra.mxu0 0.0
      %1718 = vmatprep.subr.mxu0 0.0
      %1719 = vmatpush1.msra.mxu0 0.0
      %1720 = vmatprep.subr.mxu0 0.0
      %1721 = vmatpush1.msra.mxu0 0.0
      %1722 = vmatprep.subr.mxu0 0.0
      %1723 = vmatpush1.msra.mxu0 0.0
      %1724 = vmatprep.subr.mxu0 0.0
      %1725 = vmatpush1.msra.mxu0 0.0
      %1726 = vmatprep.subr.mxu0 0.0
      %1727 = vmatpush1.msra.mxu0 0.0
      %1728 = vmatprep.subr.mxu0 0.0
      %1729 = vmatpush1.msra.mxu0 0.0
      %1730 = vmatprep.subr.mxu0 0.0
      %1731 = vmatpush1.msra.mxu0 0.0
      %1732 = vmatprep.subr.mxu0 0.0
      %1733 = vmatpush1.msra.mxu0 0.0
      %1734 = vmatprep.subr.mxu0 0.0
      %1735 = vmatpush1.msra.mxu0 0.0
      %1736 = vmatprep.subr.mxu0 0.0
      %1737 = vmatpush1.msra.mxu0 0.0
      %1738 = vmatprep.subr.mxu0 0.0
      %1739 = vmatpush1.msra.mxu0 %v1706
      %1740 = vmatprep.subr.mxu0 0.0
      %1741 = vmatpush2.msra.mxu0 0.0
      %1742 = vmatprep.subr.mxu0 0.0
      %1743 = vmatpush2.msra.mxu0 0.0
      %1744 = vmatprep.subr.mxu0 0.0
      %1745 = vmatpush2.msra.mxu0 0.0
      %1746 = vmatprep.subr.mxu0 0.0
      %1747 = vmatpush2.msra.mxu0 0.0
      %1748 = vmatprep.subr.mxu0 0.0
      %1749 = vmatpush2.msra.mxu0 0.0
      %1750 = vmatprep.subr.mxu0 0.0
      %1751 = vmatpush2.msra.mxu0 0.0
      %1752 = vmatprep.subr.mxu0 0.0
      %1753 = vmatpush2.msra.mxu0 0.0
      %1754 = vmatprep.subr.mxu0 0.0
      %1755 = vmatpush2.msra.mxu0 0.0
      %1756 = vmatprep.subr.mxu0 0.0
      %1757 = vmatpush2.msra.mxu0 0.0
      %1758 = vmatprep.subr.mxu0 0.0
      %1759 = vmatpush2.msra.mxu0 0.0
      %1760 = vmatprep.subr.mxu0 0.0
      %1761 = vmatpush2.msra.mxu0 0.0
      %1762 = vmatprep.subr.mxu0 0.0
      %1763 = vmatpush2.msra.mxu0 0.0
      %1764 = vmatprep.subr.mxu0 0.0
      %1765 = vmatpush2.msra.mxu0 0.0
      %1766 = vmatprep.subr.mxu0 0.0
      %1767 = vmatpush2.msra.mxu0 0.0
      %1768 = vmatprep.subr.mxu0 0.0
      %1769 = vmatpush2.msra.mxu0 0.0
      %1770 = vmatprep.subr.mxu0 0.0
      %1771 = vmatpush2.msra.mxu0 0.0
      %1772 = vmatprep.mubr.f32.mxu0 0.0
      %1773 = vmatmul.mubr.f32.gmra.mxu0 %v423
      %v1774 = vpop.f32.mrf.mxu0
      %v1775 = vadd.f32 0.0, %v1774
      %v1776 = vpop.f32.mrf.mxu0
      %1777 = vmatprep.mubr.f32.mxu0 0.0
      %1778 = vmatmul.mubr.f32.gmra.mxu0 %v425
      %v1779 = vpop.f32.mrf.mxu0
      %v1780 = vadd.f32 0.0, %v1779
      %v1781 = vpop.f32.mrf.mxu0
      %1782 = vmatprep.mubr.f32.mxu0 0.0
      %1783 = vmatmul.mubr.f32.gmra.mxu0 %v427
      %v1784 = vpop.f32.mrf.mxu0
      %v1785 = vadd.f32 0.0, %v1784
      %v1786 = vpop.f32.mrf.mxu0
      %1787 = vmatprep.mubr.f32.mxu0 0.0
      %1788 = vmatmul.mubr.f32.gmra.mxu0 %v429
      %v1789 = vpop.f32.mrf.mxu0
      %v1790 = vadd.f32 0.0, %v1789
      %v1791 = vpop.f32.mrf.mxu0
      %1792 = vmatprep.mubr.f32.mxu0 0.0
      %1793 = vmatmul.mubr.f32.gmra.mxu0 %v431
      %v1794 = vpop.f32.mrf.mxu0
      %v1795 = vadd.f32 0.0, %v1794
      %v1796 = vpop.f32.mrf.mxu0
      %1797 = vmatprep.mubr.f32.mxu0 0.0
      %1798 = vmatmul.mubr.f32.gmra.mxu0 %v433
      %v1799 = vpop.f32.mrf.mxu0
      %v1800 = vadd.f32 0.0, %v1799
      %v1801 = vpop.f32.mrf.mxu0
      %1802 = vmatprep.mubr.f32.mxu0 0.0
      %1803 = vmatmul.mubr.f32.gmra.mxu0 %v435
      %v1804 = vpop.f32.mrf.mxu0
      %v1805 = vadd.f32 0.0, %v1804
      %v1806 = vpop.f32.mrf.mxu0
      %1807 = vmatprep.mubr.f32.mxu0 0.0
      %1808 = vmatmul.mubr.f32.gmra.mxu0 %v437
      %v1809 = vpop.f32.mrf.mxu0
      %v1810 = vadd.f32 0.0, %v1809
      %v1811 = vpop.f32.mrf.mxu0
      %1812 = vmatprep.mubr.f32.mxu0 0.0
      %1813 = vmatmul.mubr.f32.gmra.mxu0 %v439
      %v1814 = vpop.f32.mrf.mxu0
      %v1815 = vadd.f32 0.0, %v1814
      %v1816 = vpop.f32.mrf.mxu0
      %1817 = vmatprep.mubr.f32.mxu0 0.0
      %1818 = vmatmul.mubr.f32.gmra.mxu0 %v441
      %v1819 = vpop.f32.mrf.mxu0
      %v1820 = vadd.f32 0.0, %v1819
      %v1821 = vpop.f32.mrf.mxu0
      %1822 = vmatprep.mubr.f32.mxu0 0.0
      %1823 = vmatmul.mubr.f32.gmra.mxu0 %v443
      %v1824 = vpop.f32.mrf.mxu0
      %v1825 = vadd.f32 0.0, %v1824
      %v1826 = vpop.f32.mrf.mxu0
      %1827 = vmatprep.mubr.f32.mxu0 0.0
      %1828 = vmatmul.mubr.f32.gmra.mxu0 %v445
      %v1829 = vpop.f32.mrf.mxu0
      %v1830 = vadd.f32 0.0, %v1829
      %v1831 = vpop.f32.mrf.mxu0
      %1832 = vmatprep.mubr.f32.mxu0 0.0
      %1833 = vmatmul.mubr.f32.gmra.mxu0 %v1194
      %v1834 = vpop.f32.mrf.mxu0
      %v1835 = vadd.f32 0.0, %v1834
      %v1836 = vpop.f32.mrf.mxu0
      %1837 = vmatprep.mubr.f32.mxu0 0.0
      %1838 = vmatmul.mubr.f32.gmra.mxu0 %v1196
      %v1839 = vpop.f32.mrf.mxu0
      %v1840 = vadd.f32 0.0, %v1839
      %v1841 = vpop.f32.mrf.mxu0
      %1842 = vmatprep.mubr.f32.mxu0 0.0
      %1843 = vmatmul.mubr.f32.gmra.mxu0 %v415
      %v1844 = vpop.f32.mrf.mxu0
      %v1845 = vadd.f32 0.0, %v1844
      %v1846 = vpop.f32.mrf.mxu0
      %1847 = vmatprep.mubr.f32.mxu0 0.0
      %1848 = vmatmul.mubr.f32.gmra.mxu0 %v417
      %v1849 = vpop.f32.mrf.mxu0
      %v1850 = vadd.f32 0.0, %v1849
      %v1851 = vpop.f32.mrf.mxu0
      %1852 = vdwg.mxu0
      %v1853 = vadd.f32 %v1687, %v1775
      %v1854 = vadd.f32 %v1688, %v1780
      %v1855 = vadd.f32 %v1689, %v1785
      %v1856 = vadd.f32 %v1690, %v1790
      %v1857 = vadd.f32 %v1691, %v1795
      %v1858 = vadd.f32 %v1692, %v1800
      %v1859 = vadd.f32 %v1693, %v1805
      %v1860 = vadd.f32 %v1694, %v1810
      %v1861 = vadd.f32 %v1695, %v1815
      %v1862 = vadd.f32 %v1696, %v1820
      %v1863 = vadd.f32 %v1697, %v1825
      %v1864 = vadd.f32 %v1698, %v1830
      %v1865 = vadd.f32 %v1699, %v1835
      %v1866 = vadd.f32 %v1700, %v1840
      %v1867 = vadd.f32 %v1701, %v1845
      %v1868 = vadd.f32 %v1702, %v1850
      %s1869 = scalar_lea.vmem %s1, 32
      %v1870 = vld [vmem:[%s1869] sm:$0xf]
      %v1872 = vsel %vm447, %v1870, 0
      %1874 = vmatprep.subr.mxu0 0.0
      %1875 = vmatpush1.msra.mxu0 0.0
      %1876 = vmatprep.subr.mxu0 0.0
      %1877 = vmatpush1.msra.mxu0 0.0
      %1878 = vmatprep.subr.mxu0 0.0
      %1879 = vmatpush1.msra.mxu0 0.0
      %1880 = vmatprep.subr.mxu0 0.0
      %1881 = vmatpush1.msra.mxu0 0.0
      %1882 = vmatprep.subr.mxu0 0.0
      %1883 = vmatpush1.msra.mxu0 0.0
      %1884 = vmatprep.subr.mxu0 0.0
      %1885 = vmatpush1.msra.mxu0 0.0
      %1886 = vmatprep.subr.mxu0 0.0
      %1887 = vmatpush1.msra.mxu0 0.0
      %1888 = vmatprep.subr.mxu0 0.0
      %1889 = vmatpush1.msra.mxu0 0.0
      %1890 = vmatprep.subr.mxu0 0.0
      %1891 = vmatpush1.msra.mxu0 0.0
      %1892 = vmatprep.subr.mxu0 0.0
      %1893 = vmatpush1.msra.mxu0 0.0
      %1894 = vmatprep.subr.mxu0 0.0
      %1895 = vmatpush1.msra.mxu0 0.0
      %1896 = vmatprep.subr.mxu0 0.0
      %1897 = vmatpush1.msra.mxu0 0.0
      %1898 = vmatprep.subr.mxu0 0.0
      %1899 = vmatpush1.msra.mxu0 0.0
      %1900 = vmatprep.subr.mxu0 0.0
      %1901 = vmatpush1.msra.mxu0 0.0
      %1902 = vmatprep.subr.mxu0 0.0
      %1903 = vmatpush1.msra.mxu0 0.0
      %1904 = vmatprep.subr.mxu0 0.0
      %1905 = vmatpush1.msra.mxu0 %v1872
      %1906 = vmatprep.subr.mxu0 0.0
      %1907 = vmatpush2.msra.mxu0 0.0
      %1908 = vmatprep.subr.mxu0 0.0
      %1909 = vmatpush2.msra.mxu0 0.0
      %1910 = vmatprep.subr.mxu0 0.0
      %1911 = vmatpush2.msra.mxu0 0.0
      %1912 = vmatprep.subr.mxu0 0.0
      %1913 = vmatpush2.msra.mxu0 0.0
      %1914 = vmatprep.subr.mxu0 0.0
      %1915 = vmatpush2.msra.mxu0 0.0
      %1916 = vmatprep.subr.mxu0 0.0
      %1917 = vmatpush2.msra.mxu0 0.0
      %1918 = vmatprep.subr.mxu0 0.0
      %1919 = vmatpush2.msra.mxu0 0.0
      %1920 = vmatprep.subr.mxu0 0.0
      %1921 = vmatpush2.msra.mxu0 0.0
      %1922 = vmatprep.subr.mxu0 0.0
      %1923 = vmatpush2.msra.mxu0 0.0
      %1924 = vmatprep.subr.mxu0 0.0
      %1925 = vmatpush2.msra.mxu0 0.0
      %1926 = vmatprep.subr.mxu0 0.0
      %1927 = vmatpush2.msra.mxu0 0.0
      %1928 = vmatprep.subr.mxu0 0.0
      %1929 = vmatpush2.msra.mxu0 0.0
      %1930 = vmatprep.subr.mxu0 0.0
      %1931 = vmatpush2.msra.mxu0 0.0
      %1932 = vmatprep.subr.mxu0 0.0
      %1933 = vmatpush2.msra.mxu0 0.0
      %1934 = vmatprep.subr.mxu0 0.0
      %1935 = vmatpush2.msra.mxu0 0.0
      %1936 = vmatprep.subr.mxu0 0.0
      %1937 = vmatpush2.msra.mxu0 0.0
      %1938 = vmatprep.mubr.f32.mxu0 0.0
      %1939 = vmatmul.mubr.f32.gmra.mxu0 %v827
      %v1940 = vpop.f32.mrf.mxu0
      %v1941 = vadd.f32 0.0, %v1940
      %v1942 = vpop.f32.mrf.mxu0
      %1943 = vmatprep.mubr.f32.mxu0 0.0
      %1944 = vmatmul.mubr.f32.gmra.mxu0 %v829
      %v1945 = vpop.f32.mrf.mxu0
      %v1946 = vadd.f32 0.0, %v1945
      %v1947 = vpop.f32.mrf.mxu0
      %1948 = vmatprep.mubr.f32.mxu0 0.0
      %1949 = vmatmul.mubr.f32.gmra.mxu0 %v831
      %v1950 = vpop.f32.mrf.mxu0
      %v1951 = vadd.f32 0.0, %v1950
      %v1952 = vpop.f32.mrf.mxu0
      %1953 = vmatprep.mubr.f32.mxu0 0.0
      %1954 = vmatmul.mubr.f32.gmra.mxu0 %v833
      %v1955 = vpop.f32.mrf.mxu0
      %v1956 = vadd.f32 0.0, %v1955
      %v1957 = vpop.f32.mrf.mxu0
      %1958 = vmatprep.mubr.f32.mxu0 0.0
      %1959 = vmatmul.mubr.f32.gmra.mxu0 %v835
      %v1960 = vpop.f32.mrf.mxu0
      %v1961 = vadd.f32 0.0, %v1960
      %v1962 = vpop.f32.mrf.mxu0
      %1963 = vmatprep.mubr.f32.mxu0 0.0
      %1964 = vmatmul.mubr.f32.gmra.mxu0 %v837
      %v1965 = vpop.f32.mrf.mxu0
      %v1966 = vadd.f32 0.0, %v1965
      %v1967 = vpop.f32.mrf.mxu0
      %1968 = vmatprep.mubr.f32.mxu0 0.0
      %1969 = vmatmul.mubr.f32.gmra.mxu0 %v839
      %v1970 = vpop.f32.mrf.mxu0
      %v1971 = vadd.f32 0.0, %v1970
      %v1972 = vpop.f32.mrf.mxu0
      %1973 = vmatprep.mubr.f32.mxu0 0.0
      %1974 = vmatmul.mubr.f32.gmra.mxu0 %v841
      %v1975 = vpop.f32.mrf.mxu0
      %v1976 = vadd.f32 0.0, %v1975
      %v1977 = vpop.f32.mrf.mxu0
      %1978 = vmatprep.mubr.f32.mxu0 0.0
      %1979 = vmatmul.mubr.f32.gmra.mxu0 %v843
      %v1980 = vpop.f32.mrf.mxu0
      %v1981 = vadd.f32 0.0, %v1980
      %v1982 = vpop.f32.mrf.mxu0
      %1983 = vmatprep.mubr.f32.mxu0 0.0
      %1984 = vmatmul.mubr.f32.gmra.mxu0 %v845
      %v1985 = vpop.f32.mrf.mxu0
      %v1986 = vadd.f32 0.0, %v1985
      %v1987 = vpop.f32.mrf.mxu0
      %1988 = vmatprep.mubr.f32.mxu0 0.0
      %1989 = vmatmul.mubr.f32.gmra.mxu0 %v847
      %v1990 = vpop.f32.mrf.mxu0
      %v1991 = vadd.f32 0.0, %v1990
      %v1992 = vpop.f32.mrf.mxu0
      %1993 = vmatprep.mubr.f32.mxu0 0.0
      %1994 = vmatmul.mubr.f32.gmra.mxu0 %v849
      %v1995 = vpop.f32.mrf.mxu0
      %v1996 = vadd.f32 0.0, %v1995
      %v1997 = vpop.f32.mrf.mxu0
      %1998 = vmatprep.mubr.f32.mxu0 0.0
      %1999 = vmatmul.mubr.f32.gmra.mxu0 %v1369
      %v2000 = vpop.f32.mrf.mxu0
      %v2001 = vadd.f32 0.0, %v2000
      %v2002 = vpop.f32.mrf.mxu0
      %2003 = vmatprep.mubr.f32.mxu0 0.0
      %2004 = vmatmul.mubr.f32.gmra.mxu0 %v1371
      %v2005 = vpop.f32.mrf.mxu0
      %v2006 = vadd.f32 0.0, %v2005
      %v2007 = vpop.f32.mrf.mxu0
      %2008 = vmatprep.mubr.f32.mxu0 0.0
      %2009 = vmatmul.mubr.f32.gmra.mxu0 %v819
      %v2010 = vpop.f32.mrf.mxu0
      %v2011 = vadd.f32 0.0, %v2010
      %v2012 = vpop.f32.mrf.mxu0
      %2013 = vmatprep.mubr.f32.mxu0 0.0
      %2014 = vmatmul.mubr.f32.gmra.mxu0 %v821
      %v2015 = vpop.f32.mrf.mxu0
      %v2016 = vadd.f32 0.0, %v2015
      %v2017 = vpop.f32.mrf.mxu0
      %2018 = vdwg.mxu0
      %v2019 = vadd.f32 %v1853, %v1941
      %v2020 = vadd.f32 %v1854, %v1946
      %v2021 = vadd.f32 %v1855, %v1951
      %v2022 = vadd.f32 %v1856, %v1956
      %v2023 = vadd.f32 %v1857, %v1961
      %v2024 = vadd.f32 %v1858, %v1966
      %v2025 = vadd.f32 %v1859, %v1971
      %v2026 = vadd.f32 %v1860, %v1976
      %v2027 = vadd.f32 %v1861, %v1981
      %v2028 = vadd.f32 %v1862, %v1986
      %v2029 = vadd.f32 %v1863, %v1991
      %v2030 = vadd.f32 %v1864, %v1996
      %v2031 = vadd.f32 %v1865, %v2001
      %v2032 = vadd.f32 %v1866, %v2006
      %v2033 = vadd.f32 %v1867, %v2011
      %v2034 = vadd.f32 %v1868, %v2016
      %v2036 = vlaneseq
      %v2037 = vshrl.u32 %v2036, 7
      %v2038 = vsub.s32 0, %v2037
      %v2039 = vrot.slane %v273, %v2038
      %v2041 = vadd.f32 %v2019, %v2039
      %v2042 = vadd.f32 %v2020, %v2039
      %v2043 = vadd.f32 %v2021, %v2039
      %v2044 = vadd.f32 %v2022, %v2039
      %v2045 = vadd.f32 %v2023, %v2039
      %v2046 = vadd.f32 %v2024, %v2039
      %v2047 = vadd.f32 %v2025, %v2039
      %v2048 = vadd.f32 %v2026, %v2039
      %v2049 = vadd.f32 %v2027, %v2039
      %v2050 = vadd.f32 %v2028, %v2039
      %v2051 = vadd.f32 %v2029, %v2039
      %v2052 = vadd.f32 %v2030, %v2039
      %v2053 = vadd.f32 %v2031, %v2039
      %v2054 = vadd.f32 %v2032, %v2039
      %v2055 = vadd.f32 %v2033, %v2039
      %v2056 = vadd.f32 %v2034, %v2039
      %vm2057 = vcmp.gt.f32.partialorder %v2041, 0.0
      %vm2058 = vcmp.gt.f32.partialorder %v2042, 0.0
      %vm2059 = vcmp.gt.f32.partialorder %v2043, 0.0
      %vm2060 = vcmp.gt.f32.partialorder %v2044, 0.0
      %vm2061 = vcmp.gt.f32.partialorder %v2045, 0.0
      %vm2062 = vcmp.gt.f32.partialorder %v2046, 0.0
      %vm2063 = vcmp.gt.f32.partialorder %v2047, 0.0
      %vm2064 = vcmp.gt.f32.partialorder %v2048, 0.0
      %vm2065 = vcmp.gt.f32.partialorder %v2049, 0.0
      %vm2066 = vcmp.gt.f32.partialorder %v2050, 0.0
      %vm2067 = vcmp.gt.f32.partialorder %v2051, 0.0
      %vm2068 = vcmp.gt.f32.partialorder %v2052, 0.0
      %vm2069 = vcmp.gt.f32.partialorder %v2053, 0.0
      %vm2070 = vcmp.gt.f32.partialorder %v2054, 0.0
      %vm2071 = vcmp.gt.f32.partialorder %v2055, 0.0
      %vm2072 = vcmp.gt.f32.partialorder %v2056, 0.0
      %v2073 = vmul.f32 %v2041, 0.01
      %v2074 = vmul.f32 %v2042, 0.01
      %v2075 = vmul.f32 %v2043, 0.01
      %v2076 = vmul.f32 %v2044, 0.01
      %v2077 = vmul.f32 %v2045, 0.01
      %v2078 = vmul.f32 %v2046, 0.01
      %v2079 = vmul.f32 %v2047, 0.01
      %v2080 = vmul.f32 %v2048, 0.01
      %v2081 = vmul.f32 %v2049, 0.01
      %v2082 = vmul.f32 %v2050, 0.01
      %v2083 = vmul.f32 %v2051, 0.01
      %v2084 = vmul.f32 %v2052, 0.01
      %v2085 = vmul.f32 %v2053, 0.01
      %v2086 = vmul.f32 %v2054, 0.01
      %v2087 = vmul.f32 %v2055, 0.01
      %v2088 = vmul.f32 %v2056, 0.01
      %v2089 = vsel %vm2057, %v2041, %v2073
      %v2090 = vsel %vm2058, %v2042, %v2074
      %v2091 = vsel %vm2059, %v2043, %v2075
      %v2092 = vsel %vm2060, %v2044, %v2076
      %v2093 = vsel %vm2061, %v2045, %v2077
      %v2094 = vsel %vm2062, %v2046, %v2078
      %v2095 = vsel %vm2063, %v2047, %v2079
      %v2096 = vsel %vm2064, %v2048, %v2080
      %v2097 = vsel %vm2065, %v2049, %v2081
      %v2098 = vsel %vm2066, %v2050, %v2082
      %v2099 = vsel %vm2067, %v2051, %v2083
      %v2100 = vsel %vm2068, %v2052, %v2084
      %v2101 = vsel %vm2069, %v2053, %v2085
      %v2102 = vsel %vm2070, %v2054, %v2086
      %v2103 = vsel %vm2071, %v2055, %v2087
      %v2104 = vsel %vm2072, %v2056, %v2088
      %v2121 = vrot.slane %v2089, 7
      %v2122 = vrot.slane %v2090, 7
      %v2123 = vsel %vm292, %v2121, %v2122
      %v2124 = vrot.slane %v2091, 7
      %v2125 = vrot.slane %v2092, 7
      %v2126 = vsel %vm292, %v2124, %v2125
      %v2127 = vrot.slane %v2093, 7
      %v2128 = vrot.slane %v2094, 7
      %v2129 = vsel %vm292, %v2127, %v2128
      %v2130 = vrot.slane %v2095, 7
      %v2131 = vrot.slane %v2096, 7
      %v2132 = vsel %vm292, %v2130, %v2131
      %v2133 = vrot.slane %v2097, 7
      %v2134 = vrot.slane %v2098, 7
      %v2135 = vsel %vm292, %v2133, %v2134
      %v2136 = vrot.slane %v2099, 7
      %v2137 = vrot.slane %v2100, 7
      %v2138 = vsel %vm292, %v2136, %v2137
      %v2139 = vrot.slane %v2101, 7
      %v2140 = vrot.slane %v2102, 7
      %v2141 = vsel %vm292, %v2139, %v2140
      %v2142 = vrot.slane %v2103, 7
      %v2143 = vrot.slane %v2104, 7
      %v2144 = vsel %vm292, %v2142, %v2143
      %v2161 = vsel %vm292, 0.0, %v2121
      %v2162 = vsel %vm292, 0.0, %v2124
      %v2163 = vsel %vm292, 0.0, %v2127
      %v2164 = vsel %vm292, 0.0, %v2130
      %v2165 = vsel %vm292, 0.0, %v2133
      %v2166 = vsel %vm292, 0.0, %v2136
      %v2167 = vsel %vm292, 0.0, %v2139
      %v2168 = vsel %vm292, 0.0, %v2142
      %v2169 = vsel %vm292, %v2122, 0.0
      %v2170 = vsel %vm292, %v2125, 0.0
      %v2171 = vsel %vm292, %v2128, 0.0
      %v2172 = vsel %vm292, %v2131, 0.0
      %v2173 = vsel %vm292, %v2134, 0.0
      %v2174 = vsel %vm292, %v2137, 0.0
      %v2175 = vsel %vm292, %v2140, 0.0
      %v2176 = vsel %vm292, %v2143, 0.0
      %v2177 = vld [vmem:[%s3] sm:$0xff]
      %v2192 = vrot.slane %v2161, 1
      %v2193 = vrot.slane %v2123, 1
      %v2194 = vsel %vm371, %v2192, %v2193
      %v2195 = vrot.slane %v2169, 1
      %v2196 = vsel %vm371, %v2193, %v2195
      %v2197 = vrot.slane %v2162, 1
      %v2198 = vrot.slane %v2126, 1
      %v2199 = vsel %vm371, %v2197, %v2198
      %v2200 = vrot.slane %v2170, 1
      %v2201 = vsel %vm371, %v2198, %v2200
      %v2202 = vrot.slane %v2163, 1
      %v2203 = vrot.slane %v2129, 1
      %v2204 = vsel %vm371, %v2202, %v2203
      %v2205 = vrot.slane %v2171, 1
      %v2206 = vsel %vm371, %v2203, %v2205
      %v2207 = vrot.slane %v2164, 1
      %v2208 = vrot.slane %v2132, 1
      %v2209 = vsel %vm371, %v2207, %v2208
      %v2210 = vrot.slane %v2172, 1
      %v2211 = vsel %vm371, %v2208, %v2210
      %v2212 = vrot.slane %v2165, 1
      %v2213 = vrot.slane %v2135, 1
      %v2214 = vsel %vm371, %v2212, %v2213
      %v2215 = vrot.slane %v2173, 1
      %v2216 = vsel %vm371, %v2213, %v2215
      %v2217 = vrot.slane %v2166, 1
      %v2218 = vrot.slane %v2138, 1
      %v2219 = vsel %vm371, %v2217, %v2218
      %v2220 = vrot.slane %v2174, 1
      %v2221 = vsel %vm371, %v2218, %v2220
      %v2222 = vrot.slane %v2167, 1
      %v2223 = vrot.slane %v2141, 1
      %v2224 = vsel %vm371, %v2222, %v2223
      %v2225 = vrot.slane %v2175, 1
      %v2226 = vsel %vm371, %v2223, %v2225
      %s2227 = scalar_lea.vmem %s3, 8
      %v2228 = vld [vmem:[%s2227] sm:$0xff]
      %vm2229 = vcmask 64512
      %v2230 = vsel %vm2229, %v374, 0
      %v2232 = vsel %vm2229, %v376, 0
      %v2234 = vsel %vm2229, %v2194, 0
      %v2236 = vsel %vm2229, %v2196, 0
      %v2238 = vsel %vm2229, %v2199, 0
      %v2240 = vsel %vm2229, %v2201, 0
      %v2242 = vsel %vm2229, %v2204, 0
      %v2244 = vsel %vm2229, %v2206, 0
      %v2246 = vsel %vm2229, %v2209, 0
      %v2248 = vsel %vm2229, %v2211, 0
      %v2250 = vsel %vm2229, %v2214, 0
      %v2252 = vsel %vm2229, %v2216, 0
      %v2254 = vsel %vm2229, %v2219, 0
      %v2256 = vsel %vm2229, %v2221, 0
      %v2258 = vsel %vm2229, %v2224, 0
      %v2260 = vsel %vm2229, %v2226, 0
      %2262 = vmatprep.subr.mxu0 0.0
      %2263 = vmatpush1.msra.mxu0 0.0
      %2264 = vmatprep.subr.mxu0 0.0
      %2265 = vmatpush1.msra.mxu0 0.0
      %2266 = vmatprep.subr.mxu0 0.0
      %2267 = vmatpush1.msra.mxu0 0.0
      %2268 = vmatprep.subr.mxu0 0.0
      %2269 = vmatpush1.msra.mxu0 0.0
      %2270 = vmatprep.subr.mxu0 0.0
      %2271 = vmatpush1.msra.mxu0 0.0
      %2272 = vmatprep.subr.mxu0 0.0
      %2273 = vmatpush1.msra.mxu0 0.0
      %2274 = vmatprep.subr.mxu0 0.0
      %2275 = vmatpush1.msra.mxu0 0.0
      %2276 = vmatprep.subr.mxu0 0.0
      %2277 = vmatpush1.msra.mxu0 0.0
      %2278 = vmatprep.subr.mxu0 0.0
      %2279 = vmatpush1.msra.mxu0 0.0
      %2280 = vmatprep.subr.mxu0 0.0
      %2281 = vmatpush1.msra.mxu0 0.0
      %2282 = vmatprep.subr.mxu0 0.0
      %2283 = vmatpush1.msra.mxu0 0.0
      %2284 = vmatprep.subr.mxu0 0.0
      %2285 = vmatpush1.msra.mxu0 0.0
      %2286 = vmatprep.subr.mxu0 0.0
      %2287 = vmatpush1.msra.mxu0 0.0
      %2288 = vmatprep.subr.mxu0 0.0
      %2289 = vmatpush1.msra.mxu0 0.0
      %2290 = vmatprep.subr.mxu0 0.0
      %2291 = vmatpush1.msra.mxu0 0.0
      %2292 = vmatprep.subr.mxu0 0.0
      %2293 = vmatpush1.msra.mxu0 %v2228
      %2294 = vmatprep.subr.mxu0 0.0
      %2295 = vmatpush2.msra.mxu0 0.0
      %2296 = vmatprep.subr.mxu0 0.0
      %2297 = vmatpush2.msra.mxu0 0.0
      %2298 = vmatprep.subr.mxu0 0.0
      %2299 = vmatpush2.msra.mxu0 0.0
      %2300 = vmatprep.subr.mxu0 0.0
      %2301 = vmatpush2.msra.mxu0 0.0
      %2302 = vmatprep.subr.mxu0 0.0
      %2303 = vmatpush2.msra.mxu0 0.0
      %2304 = vmatprep.subr.mxu0 0.0
      %2305 = vmatpush2.msra.mxu0 0.0
      %2306 = vmatprep.subr.mxu0 0.0
      %2307 = vmatpush2.msra.mxu0 0.0
      %2308 = vmatprep.subr.mxu0 0.0
      %2309 = vmatpush2.msra.mxu0 0.0
      %2310 = vmatprep.subr.mxu0 0.0
      %2311 = vmatpush2.msra.mxu0 0.0
      %2312 = vmatprep.subr.mxu0 0.0
      %2313 = vmatpush2.msra.mxu0 0.0
      %2314 = vmatprep.subr.mxu0 0.0
      %2315 = vmatpush2.msra.mxu0 0.0
      %2316 = vmatprep.subr.mxu0 0.0
      %2317 = vmatpush2.msra.mxu0 0.0
      %2318 = vmatprep.subr.mxu0 0.0
      %2319 = vmatpush2.msra.mxu0 0.0
      %2320 = vmatprep.subr.mxu0 0.0
      %2321 = vmatpush2.msra.mxu0 0.0
      %2322 = vmatprep.subr.mxu0 0.0
      %2323 = vmatpush2.msra.mxu0 0.0
      %2324 = vmatprep.subr.mxu0 0.0
      %2325 = vmatpush2.msra.mxu0 0.0
      %2326 = vmatprep.mubr.f32.mxu0 0.0
      %2327 = vmatmul.mubr.f32.gmra.mxu0 %v2230
      %v2328 = vpop.f32.mrf.mxu0
      %v2329 = vadd.f32 0.0, %v2328
      %v2330 = vpop.f32.mrf.mxu0
      %2331 = vmatprep.mubr.f32.mxu0 0.0
      %2332 = vmatmul.mubr.f32.gmra.mxu0 %v2232
      %v2333 = vpop.f32.mrf.mxu0
      %v2334 = vadd.f32 0.0, %v2333
      %v2335 = vpop.f32.mrf.mxu0
      %2336 = vmatprep.mubr.f32.mxu0 0.0
      %2337 = vmatmul.mubr.f32.gmra.mxu0 %v2234
      %v2338 = vpop.f32.mrf.mxu0
      %v2339 = vadd.f32 0.0, %v2338
      %v2340 = vpop.f32.mrf.mxu0
      %2341 = vmatprep.mubr.f32.mxu0 0.0
      %2342 = vmatmul.mubr.f32.gmra.mxu0 %v2236
      %v2343 = vpop.f32.mrf.mxu0
      %v2344 = vadd.f32 0.0, %v2343
      %v2345 = vpop.f32.mrf.mxu0
      %2346 = vmatprep.mubr.f32.mxu0 0.0
      %2347 = vmatmul.mubr.f32.gmra.mxu0 %v2238
      %v2348 = vpop.f32.mrf.mxu0
      %v2349 = vadd.f32 0.0, %v2348
      %v2350 = vpop.f32.mrf.mxu0
      %2351 = vmatprep.mubr.f32.mxu0 0.0
      %2352 = vmatmul.mubr.f32.gmra.mxu0 %v2240
      %v2353 = vpop.f32.mrf.mxu0
      %v2354 = vadd.f32 0.0, %v2353
      %v2355 = vpop.f32.mrf.mxu0
      %2356 = vmatprep.mubr.f32.mxu0 0.0
      %2357 = vmatmul.mubr.f32.gmra.mxu0 %v2242
      %v2358 = vpop.f32.mrf.mxu0
      %v2359 = vadd.f32 0.0, %v2358
      %v2360 = vpop.f32.mrf.mxu0
      %2361 = vmatprep.mubr.f32.mxu0 0.0
      %2362 = vmatmul.mubr.f32.gmra.mxu0 %v2244
      %v2363 = vpop.f32.mrf.mxu0
      %v2364 = vadd.f32 0.0, %v2363
      %v2365 = vpop.f32.mrf.mxu0
      %2366 = vmatprep.mubr.f32.mxu0 0.0
      %2367 = vmatmul.mubr.f32.gmra.mxu0 %v2246
      %v2368 = vpop.f32.mrf.mxu0
      %v2369 = vadd.f32 0.0, %v2368
      %v2370 = vpop.f32.mrf.mxu0
      %2371 = vmatprep.mubr.f32.mxu0 0.0
      %2372 = vmatmul.mubr.f32.gmra.mxu0 %v2248
      %v2373 = vpop.f32.mrf.mxu0
      %v2374 = vadd.f32 0.0, %v2373
      %v2375 = vpop.f32.mrf.mxu0
      %2376 = vmatprep.mubr.f32.mxu0 0.0
      %2377 = vmatmul.mubr.f32.gmra.mxu0 %v2250
      %v2378 = vpop.f32.mrf.mxu0
      %v2379 = vadd.f32 0.0, %v2378
      %v2380 = vpop.f32.mrf.mxu0
      %2381 = vmatprep.mubr.f32.mxu0 0.0
      %2382 = vmatmul.mubr.f32.gmra.mxu0 %v2252
      %v2383 = vpop.f32.mrf.mxu0
      %v2384 = vadd.f32 0.0, %v2383
      %v2385 = vpop.f32.mrf.mxu0
      %2386 = vmatprep.mubr.f32.mxu0 0.0
      %2387 = vmatmul.mubr.f32.gmra.mxu0 %v2254
      %v2388 = vpop.f32.mrf.mxu0
      %v2389 = vadd.f32 0.0, %v2388
      %v2390 = vpop.f32.mrf.mxu0
      %2391 = vmatprep.mubr.f32.mxu0 0.0
      %2392 = vmatmul.mubr.f32.gmra.mxu0 %v2256
      %v2393 = vpop.f32.mrf.mxu0
      %v2394 = vadd.f32 0.0, %v2393
      %v2395 = vpop.f32.mrf.mxu0
      %2396 = vmatprep.mubr.f32.mxu0 0.0
      %2397 = vmatmul.mubr.f32.gmra.mxu0 %v2258
      %v2398 = vpop.f32.mrf.mxu0
      %v2399 = vadd.f32 0.0, %v2398
      %v2400 = vpop.f32.mrf.mxu0
      %2401 = vmatprep.mubr.f32.mxu0 0.0
      %2402 = vmatmul.mubr.f32.gmra.mxu0 %v2260
      %v2403 = vpop.f32.mrf.mxu0
      %v2404 = vadd.f32 0.0, %v2403
      %v2405 = vpop.f32.mrf.mxu0
      %2406 = vdwg.mxu0
      %v2407 = vsel %vm2229, %v336, 0
      %v2409 = vsel %vm2229, %v294, 0
      %v2411 = vsel %vm2229, %v2161, 0
      %v2413 = vsel %vm2229, %v2123, 0
      %v2415 = vsel %vm2229, %v2162, 0
      %v2417 = vsel %vm2229, %v2126, 0
      %v2419 = vsel %vm2229, %v2163, 0
      %v2421 = vsel %vm2229, %v2129, 0
      %v2423 = vsel %vm2229, %v2164, 0
      %v2425 = vsel %vm2229, %v2132, 0
      %v2427 = vsel %vm2229, %v2165, 0
      %v2429 = vsel %vm2229, %v2135, 0
      %v2431 = vsel %vm2229, %v2166, 0
      %v2433 = vsel %vm2229, %v2138, 0
      %v2435 = vsel %vm2229, %v2167, 0
      %v2437 = vsel %vm2229, %v2141, 0
      %2439 = vmatprep.subr.mxu0 0.0
      %2440 = vmatpush1.msra.mxu0 0.0
      %2441 = vmatprep.subr.mxu0 0.0
      %2442 = vmatpush1.msra.mxu0 0.0
      %2443 = vmatprep.subr.mxu0 0.0
      %2444 = vmatpush1.msra.mxu0 0.0
      %2445 = vmatprep.subr.mxu0 0.0
      %2446 = vmatpush1.msra.mxu0 0.0
      %2447 = vmatprep.subr.mxu0 0.0
      %2448 = vmatpush1.msra.mxu0 0.0
      %2449 = vmatprep.subr.mxu0 0.0
      %2450 = vmatpush1.msra.mxu0 0.0
      %2451 = vmatprep.subr.mxu0 0.0
      %2452 = vmatpush1.msra.mxu0 0.0
      %2453 = vmatprep.subr.mxu0 0.0
      %2454 = vmatpush1.msra.mxu0 0.0
      %2455 = vmatprep.subr.mxu0 0.0
      %2456 = vmatpush1.msra.mxu0 0.0
      %2457 = vmatprep.subr.mxu0 0.0
      %2458 = vmatpush1.msra.mxu0 0.0
      %2459 = vmatprep.subr.mxu0 0.0
      %2460 = vmatpush1.msra.mxu0 0.0
      %2461 = vmatprep.subr.mxu0 0.0
      %2462 = vmatpush1.msra.mxu0 0.0
      %2463 = vmatprep.subr.mxu0 0.0
      %2464 = vmatpush1.msra.mxu0 0.0
      %2465 = vmatprep.subr.mxu0 0.0
      %2466 = vmatpush1.msra.mxu0 0.0
      %2467 = vmatprep.subr.mxu0 0.0
      %2468 = vmatpush1.msra.mxu0 0.0
      %2469 = vmatprep.subr.mxu0 0.0
      %2470 = vmatpush1.msra.mxu0 %v2177
      %2471 = vmatprep.subr.mxu0 0.0
      %2472 = vmatpush2.msra.mxu0 0.0
      %2473 = vmatprep.subr.mxu0 0.0
      %2474 = vmatpush2.msra.mxu0 0.0
      %2475 = vmatprep.subr.mxu0 0.0
      %2476 = vmatpush2.msra.mxu0 0.0
      %2477 = vmatprep.subr.mxu0 0.0
      %2478 = vmatpush2.msra.mxu0 0.0
      %2479 = vmatprep.subr.mxu0 0.0
      %2480 = vmatpush2.msra.mxu0 0.0
      %2481 = vmatprep.subr.mxu0 0.0
      %2482 = vmatpush2.msra.mxu0 0.0
      %2483 = vmatprep.subr.mxu0 0.0
      %2484 = vmatpush2.msra.mxu0 0.0
      %2485 = vmatprep.subr.mxu0 0.0
      %2486 = vmatpush2.msra.mxu0 0.0
      %2487 = vmatprep.subr.mxu0 0.0
      %2488 = vmatpush2.msra.mxu0 0.0
      %2489 = vmatprep.subr.mxu0 0.0
      %2490 = vmatpush2.msra.mxu0 0.0
      %2491 = vmatprep.subr.mxu0 0.0
      %2492 = vmatpush2.msra.mxu0 0.0
      %2493 = vmatprep.subr.mxu0 0.0
      %2494 = vmatpush2.msra.mxu0 0.0
      %2495 = vmatprep.subr.mxu0 0.0
      %2496 = vmatpush2.msra.mxu0 0.0
      %2497 = vmatprep.subr.mxu0 0.0
      %2498 = vmatpush2.msra.mxu0 0.0
      %2499 = vmatprep.subr.mxu0 0.0
      %2500 = vmatpush2.msra.mxu0 0.0
      %2501 = vmatprep.subr.mxu0 0.0
      %2502 = vmatpush2.msra.mxu0 0.0
      %2503 = vmatprep.mubr.f32.mxu0 0.0
      %2504 = vmatmul.mubr.f32.gmra.mxu0 %v2407
      %v2505 = vpop.f32.mrf.mxu0
      %v2506 = vadd.f32 %v2329, %v2505
      %v2507 = vpop.f32.mrf.mxu0
      %2508 = vmatprep.mubr.f32.mxu0 0.0
      %2509 = vmatmul.mubr.f32.gmra.mxu0 %v2409
      %v2510 = vpop.f32.mrf.mxu0
      %v2511 = vadd.f32 %v2334, %v2510
      %v2512 = vpop.f32.mrf.mxu0
      %2513 = vmatprep.mubr.f32.mxu0 0.0
      %2514 = vmatmul.mubr.f32.gmra.mxu0 %v2411
      %v2515 = vpop.f32.mrf.mxu0
      %v2516 = vadd.f32 %v2339, %v2515
      %v2517 = vpop.f32.mrf.mxu0
      %2518 = vmatprep.mubr.f32.mxu0 0.0
      %2519 = vmatmul.mubr.f32.gmra.mxu0 %v2413
      %v2520 = vpop.f32.mrf.mxu0
      %v2521 = vadd.f32 %v2344, %v2520
      %v2522 = vpop.f32.mrf.mxu0
      %2523 = vmatprep.mubr.f32.mxu0 0.0
      %2524 = vmatmul.mubr.f32.gmra.mxu0 %v2415
      %v2525 = vpop.f32.mrf.mxu0
      %v2526 = vadd.f32 %v2349, %v2525
      %v2527 = vpop.f32.mrf.mxu0
      %2528 = vmatprep.mubr.f32.mxu0 0.0
      %2529 = vmatmul.mubr.f32.gmra.mxu0 %v2417
      %v2530 = vpop.f32.mrf.mxu0
      %v2531 = vadd.f32 %v2354, %v2530
      %v2532 = vpop.f32.mrf.mxu0
      %2533 = vmatprep.mubr.f32.mxu0 0.0
      %2534 = vmatmul.mubr.f32.gmra.mxu0 %v2419
      %v2535 = vpop.f32.mrf.mxu0
      %v2536 = vadd.f32 %v2359, %v2535
      %v2537 = vpop.f32.mrf.mxu0
      %2538 = vmatprep.mubr.f32.mxu0 0.0
      %2539 = vmatmul.mubr.f32.gmra.mxu0 %v2421
      %v2540 = vpop.f32.mrf.mxu0
      %v2541 = vadd.f32 %v2364, %v2540
      %v2542 = vpop.f32.mrf.mxu0
      %2543 = vmatprep.mubr.f32.mxu0 0.0
      %2544 = vmatmul.mubr.f32.gmra.mxu0 %v2423
      %v2545 = vpop.f32.mrf.mxu0
      %v2546 = vadd.f32 %v2369, %v2545
      %v2547 = vpop.f32.mrf.mxu0
      %2548 = vmatprep.mubr.f32.mxu0 0.0
      %2549 = vmatmul.mubr.f32.gmra.mxu0 %v2425
      %v2550 = vpop.f32.mrf.mxu0
      %v2551 = vadd.f32 %v2374, %v2550
      %v2552 = vpop.f32.mrf.mxu0
      %2553 = vmatprep.mubr.f32.mxu0 0.0
      %2554 = vmatmul.mubr.f32.gmra.mxu0 %v2427
      %v2555 = vpop.f32.mrf.mxu0
      %v2556 = vadd.f32 %v2379, %v2555
      %v2557 = vpop.f32.mrf.mxu0
      %2558 = vmatprep.mubr.f32.mxu0 0.0
      %2559 = vmatmul.mubr.f32.gmra.mxu0 %v2429
      %v2560 = vpop.f32.mrf.mxu0
      %v2561 = vadd.f32 %v2384, %v2560
      %v2562 = vpop.f32.mrf.mxu0
      %2563 = vmatprep.mubr.f32.mxu0 0.0
      %2564 = vmatmul.mubr.f32.gmra.mxu0 %v2431
      %v2565 = vpop.f32.mrf.mxu0
      %v2566 = vadd.f32 %v2389, %v2565
      %v2567 = vpop.f32.mrf.mxu0
      %2568 = vmatprep.mubr.f32.mxu0 0.0
      %2569 = vmatmul.mubr.f32.gmra.mxu0 %v2433
      %v2570 = vpop.f32.mrf.mxu0
      %v2571 = vadd.f32 %v2394, %v2570
      %v2572 = vpop.f32.mrf.mxu0
      %2573 = vmatprep.mubr.f32.mxu0 0.0
      %2574 = vmatmul.mubr.f32.gmra.mxu0 %v2435
      %v2575 = vpop.f32.mrf.mxu0
      %v2576 = vadd.f32 %v2399, %v2575
      %v2577 = vpop.f32.mrf.mxu0
      %2578 = vmatprep.mubr.f32.mxu0 0.0
      %2579 = vmatmul.mubr.f32.gmra.mxu0 %v2437
      %v2580 = vpop.f32.mrf.mxu0
      %v2581 = vadd.f32 %v2404, %v2580
      %v2582 = vpop.f32.mrf.mxu0
      %2583 = vdwg.mxu0
      %v2584 = vrot.slane %v2161, 2
      %v2585 = vrot.slane %v2123, 2
      %v2586 = vsel %vm776, %v2584, %v2585
      %v2587 = vrot.slane %v2169, 2
      %v2588 = vsel %vm776, %v2585, %v2587
      %v2589 = vrot.slane %v2162, 2
      %v2590 = vrot.slane %v2126, 2
      %v2591 = vsel %vm776, %v2589, %v2590
      %v2592 = vrot.slane %v2170, 2
      %v2593 = vsel %vm776, %v2590, %v2592
      %v2594 = vrot.slane %v2163, 2
      %v2595 = vrot.slane %v2129, 2
      %v2596 = vsel %vm776, %v2594, %v2595
      %v2597 = vrot.slane %v2171, 2
      %v2598 = vsel %vm776, %v2595, %v2597
      %v2599 = vrot.slane %v2164, 2
      %v2600 = vrot.slane %v2132, 2
      %v2601 = vsel %vm776, %v2599, %v2600
      %v2602 = vrot.slane %v2172, 2
      %v2603 = vsel %vm776, %v2600, %v2602
      %v2604 = vrot.slane %v2165, 2
      %v2605 = vrot.slane %v2135, 2
      %v2606 = vsel %vm776, %v2604, %v2605
      %v2607 = vrot.slane %v2173, 2
      %v2608 = vsel %vm776, %v2605, %v2607
      %v2609 = vrot.slane %v2166, 2
      %v2610 = vrot.slane %v2138, 2
      %v2611 = vsel %vm776, %v2609, %v2610
      %v2612 = vrot.slane %v2174, 2
      %v2613 = vsel %vm776, %v2610, %v2612
      %v2614 = vrot.slane %v2167, 2
      %v2615 = vrot.slane %v2141, 2
      %v2616 = vsel %vm776, %v2614, %v2615
      %v2617 = vrot.slane %v2175, 2
      %v2618 = vsel %vm776, %v2615, %v2617
      %s2619 = scalar_lea.vmem %s3, 16
      %v2620 = vld [vmem:[%s2619] sm:$0xff]
      %v2621 = vsel %vm2229, %v779, 0
      %v2623 = vsel %vm2229, %v781, 0
      %v2625 = vsel %vm2229, %v2586, 0
      %v2627 = vsel %vm2229, %v2588, 0
      %v2629 = vsel %vm2229, %v2591, 0
      %v2631 = vsel %vm2229, %v2593, 0
      %v2633 = vsel %vm2229, %v2596, 0
      %v2635 = vsel %vm2229, %v2598, 0
      %v2637 = vsel %vm2229, %v2601, 0
      %v2639 = vsel %vm2229, %v2603, 0
      %v2641 = vsel %vm2229, %v2606, 0
      %v2643 = vsel %vm2229, %v2608, 0
      %v2645 = vsel %vm2229, %v2611, 0
      %v2647 = vsel %vm2229, %v2613, 0
      %v2649 = vsel %vm2229, %v2616, 0
      %v2651 = vsel %vm2229, %v2618, 0
      %2653 = vmatprep.subr.mxu0 0.0
      %2654 = vmatpush1.msra.mxu0 0.0
      %2655 = vmatprep.subr.mxu0 0.0
      %2656 = vmatpush1.msra.mxu0 0.0
      %2657 = vmatprep.subr.mxu0 0.0
      %2658 = vmatpush1.msra.mxu0 0.0
      %2659 = vmatprep.subr.mxu0 0.0
      %2660 = vmatpush1.msra.mxu0 0.0
      %2661 = vmatprep.subr.mxu0 0.0
      %2662 = vmatpush1.msra.mxu0 0.0
      %2663 = vmatprep.subr.mxu0 0.0
      %2664 = vmatpush1.msra.mxu0 0.0
      %2665 = vmatprep.subr.mxu0 0.0
      %2666 = vmatpush1.msra.mxu0 0.0
      %2667 = vmatprep.subr.mxu0 0.0
      %2668 = vmatpush1.msra.mxu0 0.0
      %2669 = vmatprep.subr.mxu0 0.0
      %2670 = vmatpush1.msra.mxu0 0.0
      %2671 = vmatprep.subr.mxu0 0.0
      %2672 = vmatpush1.msra.mxu0 0.0
      %2673 = vmatprep.subr.mxu0 0.0
      %2674 = vmatpush1.msra.mxu0 0.0
      %2675 = vmatprep.subr.mxu0 0.0
      %2676 = vmatpush1.msra.mxu0 0.0
      %2677 = vmatprep.subr.mxu0 0.0
      %2678 = vmatpush1.msra.mxu0 0.0
      %2679 = vmatprep.subr.mxu0 0.0
      %2680 = vmatpush1.msra.mxu0 0.0
      %2681 = vmatprep.subr.mxu0 0.0
      %2682 = vmatpush1.msra.mxu0 0.0
      %2683 = vmatprep.subr.mxu0 0.0
      %2684 = vmatpush1.msra.mxu0 %v2620
      %2685 = vmatprep.subr.mxu0 0.0
      %2686 = vmatpush2.msra.mxu0 0.0
      %2687 = vmatprep.subr.mxu0 0.0
      %2688 = vmatpush2.msra.mxu0 0.0
      %2689 = vmatprep.subr.mxu0 0.0
      %2690 = vmatpush2.msra.mxu0 0.0
      %2691 = vmatprep.subr.mxu0 0.0
      %2692 = vmatpush2.msra.mxu0 0.0
      %2693 = vmatprep.subr.mxu0 0.0
      %2694 = vmatpush2.msra.mxu0 0.0
      %2695 = vmatprep.subr.mxu0 0.0
      %2696 = vmatpush2.msra.mxu0 0.0
      %2697 = vmatprep.subr.mxu0 0.0
      %2698 = vmatpush2.msra.mxu0 0.0
      %2699 = vmatprep.subr.mxu0 0.0
      %2700 = vmatpush2.msra.mxu0 0.0
      %2701 = vmatprep.subr.mxu0 0.0
      %2702 = vmatpush2.msra.mxu0 0.0
      %2703 = vmatprep.subr.mxu0 0.0
      %2704 = vmatpush2.msra.mxu0 0.0
      %2705 = vmatprep.subr.mxu0 0.0
      %2706 = vmatpush2.msra.mxu0 0.0
      %2707 = vmatprep.subr.mxu0 0.0
      %2708 = vmatpush2.msra.mxu0 0.0
      %2709 = vmatprep.subr.mxu0 0.0
      %2710 = vmatpush2.msra.mxu0 0.0
      %2711 = vmatprep.subr.mxu0 0.0
      %2712 = vmatpush2.msra.mxu0 0.0
      %2713 = vmatprep.subr.mxu0 0.0
      %2714 = vmatpush2.msra.mxu0 0.0
      %2715 = vmatprep.subr.mxu0 0.0
      %2716 = vmatpush2.msra.mxu0 0.0
      %2717 = vmatprep.mubr.f32.mxu0 0.0
      %2718 = vmatmul.mubr.f32.gmra.mxu0 %v2621
      %v2719 = vpop.f32.mrf.mxu0
      %v2720 = vadd.f32 0.0, %v2719
      %v2721 = vpop.f32.mrf.mxu0
      %2722 = vmatprep.mubr.f32.mxu0 0.0
      %2723 = vmatmul.mubr.f32.gmra.mxu0 %v2623
      %v2724 = vpop.f32.mrf.mxu0
      %v2725 = vadd.f32 0.0, %v2724
      %v2726 = vpop.f32.mrf.mxu0
      %2727 = vmatprep.mubr.f32.mxu0 0.0
      %2728 = vmatmul.mubr.f32.gmra.mxu0 %v2625
      %v2729 = vpop.f32.mrf.mxu0
      %v2730 = vadd.f32 0.0, %v2729
      %v2731 = vpop.f32.mrf.mxu0
      %2732 = vmatprep.mubr.f32.mxu0 0.0
      %2733 = vmatmul.mubr.f32.gmra.mxu0 %v2627
      %v2734 = vpop.f32.mrf.mxu0
      %v2735 = vadd.f32 0.0, %v2734
      %v2736 = vpop.f32.mrf.mxu0
      %2737 = vmatprep.mubr.f32.mxu0 0.0
      %2738 = vmatmul.mubr.f32.gmra.mxu0 %v2629
      %v2739 = vpop.f32.mrf.mxu0
      %v2740 = vadd.f32 0.0, %v2739
      %v2741 = vpop.f32.mrf.mxu0
      %2742 = vmatprep.mubr.f32.mxu0 0.0
      %2743 = vmatmul.mubr.f32.gmra.mxu0 %v2631
      %v2744 = vpop.f32.mrf.mxu0
      %v2745 = vadd.f32 0.0, %v2744
      %v2746 = vpop.f32.mrf.mxu0
      %2747 = vmatprep.mubr.f32.mxu0 0.0
      %2748 = vmatmul.mubr.f32.gmra.mxu0 %v2633
      %v2749 = vpop.f32.mrf.mxu0
      %v2750 = vadd.f32 0.0, %v2749
      %v2751 = vpop.f32.mrf.mxu0
      %2752 = vmatprep.mubr.f32.mxu0 0.0
      %2753 = vmatmul.mubr.f32.gmra.mxu0 %v2635
      %v2754 = vpop.f32.mrf.mxu0
      %v2755 = vadd.f32 0.0, %v2754
      %v2756 = vpop.f32.mrf.mxu0
      %2757 = vmatprep.mubr.f32.mxu0 0.0
      %2758 = vmatmul.mubr.f32.gmra.mxu0 %v2637
      %v2759 = vpop.f32.mrf.mxu0
      %v2760 = vadd.f32 0.0, %v2759
      %v2761 = vpop.f32.mrf.mxu0
      %2762 = vmatprep.mubr.f32.mxu0 0.0
      %2763 = vmatmul.mubr.f32.gmra.mxu0 %v2639
      %v2764 = vpop.f32.mrf.mxu0
      %v2765 = vadd.f32 0.0, %v2764
      %v2766 = vpop.f32.mrf.mxu0
      %2767 = vmatprep.mubr.f32.mxu0 0.0
      %2768 = vmatmul.mubr.f32.gmra.mxu0 %v2641
      %v2769 = vpop.f32.mrf.mxu0
      %v2770 = vadd.f32 0.0, %v2769
      %v2771 = vpop.f32.mrf.mxu0
      %2772 = vmatprep.mubr.f32.mxu0 0.0
      %2773 = vmatmul.mubr.f32.gmra.mxu0 %v2643
      %v2774 = vpop.f32.mrf.mxu0
      %v2775 = vadd.f32 0.0, %v2774
      %v2776 = vpop.f32.mrf.mxu0
      %2777 = vmatprep.mubr.f32.mxu0 0.0
      %2778 = vmatmul.mubr.f32.gmra.mxu0 %v2645
      %v2779 = vpop.f32.mrf.mxu0
      %v2780 = vadd.f32 0.0, %v2779
      %v2781 = vpop.f32.mrf.mxu0
      %2782 = vmatprep.mubr.f32.mxu0 0.0
      %2783 = vmatmul.mubr.f32.gmra.mxu0 %v2647
      %v2784 = vpop.f32.mrf.mxu0
      %v2785 = vadd.f32 0.0, %v2784
      %v2786 = vpop.f32.mrf.mxu0
      %2787 = vmatprep.mubr.f32.mxu0 0.0
      %2788 = vmatmul.mubr.f32.gmra.mxu0 %v2649
      %v2789 = vpop.f32.mrf.mxu0
      %v2790 = vadd.f32 0.0, %v2789
      %v2791 = vpop.f32.mrf.mxu0
      %2792 = vmatprep.mubr.f32.mxu0 0.0
      %2793 = vmatmul.mubr.f32.gmra.mxu0 %v2651
      %v2794 = vpop.f32.mrf.mxu0
      %v2795 = vadd.f32 0.0, %v2794
      %v2796 = vpop.f32.mrf.mxu0
      %2797 = vdwg.mxu0
      %v2798 = vadd.f32 %v2506, %v2720
      %v2799 = vadd.f32 %v2511, %v2725
      %v2800 = vadd.f32 %v2516, %v2730
      %v2801 = vadd.f32 %v2521, %v2735
      %v2802 = vadd.f32 %v2526, %v2740
      %v2803 = vadd.f32 %v2531, %v2745
      %v2804 = vadd.f32 %v2536, %v2750
      %v2805 = vadd.f32 %v2541, %v2755
      %v2806 = vadd.f32 %v2546, %v2760
      %v2807 = vadd.f32 %v2551, %v2765
      %v2808 = vadd.f32 %v2556, %v2770
      %v2809 = vadd.f32 %v2561, %v2775
      %v2810 = vadd.f32 %v2566, %v2780
      %v2811 = vadd.f32 %v2571, %v2785
      %v2812 = vadd.f32 %v2576, %v2790
      %v2813 = vadd.f32 %v2581, %v2795
      %s2814 = scalar_lea.vmem %s3, 24
      %v2815 = vld [vmem:[%s2814] sm:$0xff]
      %v2817 = vsel %vm2229, %v2168, 0
      %v2819 = vsel %vm2229, %v2144, 0
      %2821 = vmatprep.subr.mxu0 0.0
      %2822 = vmatpush1.msra.mxu0 0.0
      %2823 = vmatprep.subr.mxu0 0.0
      %2824 = vmatpush1.msra.mxu0 0.0
      %2825 = vmatprep.subr.mxu0 0.0
      %2826 = vmatpush1.msra.mxu0 0.0
      %2827 = vmatprep.subr.mxu0 0.0
      %2828 = vmatpush1.msra.mxu0 0.0
      %2829 = vmatprep.subr.mxu0 0.0
      %2830 = vmatpush1.msra.mxu0 0.0
      %2831 = vmatprep.subr.mxu0 0.0
      %2832 = vmatpush1.msra.mxu0 0.0
      %2833 = vmatprep.subr.mxu0 0.0
      %2834 = vmatpush1.msra.mxu0 0.0
      %2835 = vmatprep.subr.mxu0 0.0
      %2836 = vmatpush1.msra.mxu0 0.0
      %2837 = vmatprep.subr.mxu0 0.0
      %2838 = vmatpush1.msra.mxu0 0.0
      %2839 = vmatprep.subr.mxu0 0.0
      %2840 = vmatpush1.msra.mxu0 0.0
      %2841 = vmatprep.subr.mxu0 0.0
      %2842 = vmatpush1.msra.mxu0 0.0
      %2843 = vmatprep.subr.mxu0 0.0
      %2844 = vmatpush1.msra.mxu0 0.0
      %2845 = vmatprep.subr.mxu0 0.0
      %2846 = vmatpush1.msra.mxu0 0.0
      %2847 = vmatprep.subr.mxu0 0.0
      %2848 = vmatpush1.msra.mxu0 0.0
      %2849 = vmatprep.subr.mxu0 0.0
      %2850 = vmatpush1.msra.mxu0 0.0
      %2851 = vmatprep.subr.mxu0 0.0
      %2852 = vmatpush1.msra.mxu0 %v2815
      %2853 = vmatprep.subr.mxu0 0.0
      %2854 = vmatpush2.msra.mxu0 0.0
      %2855 = vmatprep.subr.mxu0 0.0
      %2856 = vmatpush2.msra.mxu0 0.0
      %2857 = vmatprep.subr.mxu0 0.0
      %2858 = vmatpush2.msra.mxu0 0.0
      %2859 = vmatprep.subr.mxu0 0.0
      %2860 = vmatpush2.msra.mxu0 0.0
      %2861 = vmatprep.subr.mxu0 0.0
      %2862 = vmatpush2.msra.mxu0 0.0
      %2863 = vmatprep.subr.mxu0 0.0
      %2864 = vmatpush2.msra.mxu0 0.0
      %2865 = vmatprep.subr.mxu0 0.0
      %2866 = vmatpush2.msra.mxu0 0.0
      %2867 = vmatprep.subr.mxu0 0.0
      %2868 = vmatpush2.msra.mxu0 0.0
      %2869 = vmatprep.subr.mxu0 0.0
      %2870 = vmatpush2.msra.mxu0 0.0
      %2871 = vmatprep.subr.mxu0 0.0
      %2872 = vmatpush2.msra.mxu0 0.0
      %2873 = vmatprep.subr.mxu0 0.0
      %2874 = vmatpush2.msra.mxu0 0.0
      %2875 = vmatprep.subr.mxu0 0.0
      %2876 = vmatpush2.msra.mxu0 0.0
      %2877 = vmatprep.subr.mxu0 0.0
      %2878 = vmatpush2.msra.mxu0 0.0
      %2879 = vmatprep.subr.mxu0 0.0
      %2880 = vmatpush2.msra.mxu0 0.0
      %2881 = vmatprep.subr.mxu0 0.0
      %2882 = vmatpush2.msra.mxu0 0.0
      %2883 = vmatprep.subr.mxu0 0.0
      %2884 = vmatpush2.msra.mxu0 0.0
      %2885 = vmatprep.mubr.f32.mxu0 0.0
      %2886 = vmatmul.mubr.f32.gmra.mxu0 %v2411
      %v2887 = vpop.f32.mrf.mxu0
      %v2888 = vadd.f32 0.0, %v2887
      %v2889 = vpop.f32.mrf.mxu0
      %2890 = vmatprep.mubr.f32.mxu0 0.0
      %2891 = vmatmul.mubr.f32.gmra.mxu0 %v2413
      %v2892 = vpop.f32.mrf.mxu0
      %v2893 = vadd.f32 0.0, %v2892
      %v2894 = vpop.f32.mrf.mxu0
      %2895 = vmatprep.mubr.f32.mxu0 0.0
      %2896 = vmatmul.mubr.f32.gmra.mxu0 %v2415
      %v2897 = vpop.f32.mrf.mxu0
      %v2898 = vadd.f32 0.0, %v2897
      %v2899 = vpop.f32.mrf.mxu0
      %2900 = vmatprep.mubr.f32.mxu0 0.0
      %2901 = vmatmul.mubr.f32.gmra.mxu0 %v2417
      %v2902 = vpop.f32.mrf.mxu0
      %v2903 = vadd.f32 0.0, %v2902
      %v2904 = vpop.f32.mrf.mxu0
      %2905 = vmatprep.mubr.f32.mxu0 0.0
      %2906 = vmatmul.mubr.f32.gmra.mxu0 %v2419
      %v2907 = vpop.f32.mrf.mxu0
      %v2908 = vadd.f32 0.0, %v2907
      %v2909 = vpop.f32.mrf.mxu0
      %2910 = vmatprep.mubr.f32.mxu0 0.0
      %2911 = vmatmul.mubr.f32.gmra.mxu0 %v2421
      %v2912 = vpop.f32.mrf.mxu0
      %v2913 = vadd.f32 0.0, %v2912
      %v2914 = vpop.f32.mrf.mxu0
      %2915 = vmatprep.mubr.f32.mxu0 0.0
      %2916 = vmatmul.mubr.f32.gmra.mxu0 %v2423
      %v2917 = vpop.f32.mrf.mxu0
      %v2918 = vadd.f32 0.0, %v2917
      %v2919 = vpop.f32.mrf.mxu0
      %2920 = vmatprep.mubr.f32.mxu0 0.0
      %2921 = vmatmul.mubr.f32.gmra.mxu0 %v2425
      %v2922 = vpop.f32.mrf.mxu0
      %v2923 = vadd.f32 0.0, %v2922
      %v2924 = vpop.f32.mrf.mxu0
      %2925 = vmatprep.mubr.f32.mxu0 0.0
      %2926 = vmatmul.mubr.f32.gmra.mxu0 %v2427
      %v2927 = vpop.f32.mrf.mxu0
      %v2928 = vadd.f32 0.0, %v2927
      %v2929 = vpop.f32.mrf.mxu0
      %2930 = vmatprep.mubr.f32.mxu0 0.0
      %2931 = vmatmul.mubr.f32.gmra.mxu0 %v2429
      %v2932 = vpop.f32.mrf.mxu0
      %v2933 = vadd.f32 0.0, %v2932
      %v2934 = vpop.f32.mrf.mxu0
      %2935 = vmatprep.mubr.f32.mxu0 0.0
      %2936 = vmatmul.mubr.f32.gmra.mxu0 %v2431
      %v2937 = vpop.f32.mrf.mxu0
      %v2938 = vadd.f32 0.0, %v2937
      %v2939 = vpop.f32.mrf.mxu0
      %2940 = vmatprep.mubr.f32.mxu0 0.0
      %2941 = vmatmul.mubr.f32.gmra.mxu0 %v2433
      %v2942 = vpop.f32.mrf.mxu0
      %v2943 = vadd.f32 0.0, %v2942
      %v2944 = vpop.f32.mrf.mxu0
      %2945 = vmatprep.mubr.f32.mxu0 0.0
      %2946 = vmatmul.mubr.f32.gmra.mxu0 %v2435
      %v2947 = vpop.f32.mrf.mxu0
      %v2948 = vadd.f32 0.0, %v2947
      %v2949 = vpop.f32.mrf.mxu0
      %2950 = vmatprep.mubr.f32.mxu0 0.0
      %2951 = vmatmul.mubr.f32.gmra.mxu0 %v2437
      %v2952 = vpop.f32.mrf.mxu0
      %v2953 = vadd.f32 0.0, %v2952
      %v2954 = vpop.f32.mrf.mxu0
      %2955 = vmatprep.mubr.f32.mxu0 0.0
      %2956 = vmatmul.mubr.f32.gmra.mxu0 %v2817
      %v2957 = vpop.f32.mrf.mxu0
      %v2958 = vadd.f32 0.0, %v2957
      %v2959 = vpop.f32.mrf.mxu0
      %2960 = vmatprep.mubr.f32.mxu0 0.0
      %2961 = vmatmul.mubr.f32.gmra.mxu0 %v2819
      %v2962 = vpop.f32.mrf.mxu0
      %v2963 = vadd.f32 0.0, %v2962
      %v2964 = vpop.f32.mrf.mxu0
      %2965 = vdwg.mxu0
      %v2966 = vadd.f32 %v2798, %v2888
      %v2967 = vadd.f32 %v2799, %v2893
      %v2968 = vadd.f32 %v2800, %v2898
      %v2969 = vadd.f32 %v2801, %v2903
      %v2970 = vadd.f32 %v2802, %v2908
      %v2971 = vadd.f32 %v2803, %v2913
      %v2972 = vadd.f32 %v2804, %v2918
      %v2973 = vadd.f32 %v2805, %v2923
      %v2974 = vadd.f32 %v2806, %v2928
      %v2975 = vadd.f32 %v2807, %v2933
      %v2976 = vadd.f32 %v2808, %v2938
      %v2977 = vadd.f32 %v2809, %v2943
      %v2978 = vadd.f32 %v2810, %v2948
      %v2979 = vadd.f32 %v2811, %v2953
      %v2980 = vadd.f32 %v2812, %v2958
      %v2981 = vadd.f32 %v2813, %v2963
      %v2983 = vrot.slane %v2168, 1
      %v2984 = vrot.slane %v2144, 1
      %v2985 = vsel %vm371, %v2983, %v2984
      %v2986 = vrot.slane %v2176, 1
      %v2987 = vsel %vm371, %v2984, %v2986
      %s2988 = scalar_lea.vmem %s3, 32
      %v2989 = vld [vmem:[%s2988] sm:$0xff]
      %v2990 = vsel %vm2229, %v2985, 0
      %v2992 = vsel %vm2229, %v2987, 0
      %2994 = vmatprep.subr.mxu0 0.0
      %2995 = vmatpush1.msra.mxu0 0.0
      %2996 = vmatprep.subr.mxu0 0.0
      %2997 = vmatpush1.msra.mxu0 0.0
      %2998 = vmatprep.subr.mxu0 0.0
      %2999 = vmatpush1.msra.mxu0 0.0
      %3000 = vmatprep.subr.mxu0 0.0
      %3001 = vmatpush1.msra.mxu0 0.0
      %3002 = vmatprep.subr.mxu0 0.0
      %3003 = vmatpush1.msra.mxu0 0.0
      %3004 = vmatprep.subr.mxu0 0.0
      %3005 = vmatpush1.msra.mxu0 0.0
      %3006 = vmatprep.subr.mxu0 0.0
      %3007 = vmatpush1.msra.mxu0 0.0
      %3008 = vmatprep.subr.mxu0 0.0
      %3009 = vmatpush1.msra.mxu0 0.0
      %3010 = vmatprep.subr.mxu0 0.0
      %3011 = vmatpush1.msra.mxu0 0.0
      %3012 = vmatprep.subr.mxu0 0.0
      %3013 = vmatpush1.msra.mxu0 0.0
      %3014 = vmatprep.subr.mxu0 0.0
      %3015 = vmatpush1.msra.mxu0 0.0
      %3016 = vmatprep.subr.mxu0 0.0
      %3017 = vmatpush1.msra.mxu0 0.0
      %3018 = vmatprep.subr.mxu0 0.0
      %3019 = vmatpush1.msra.mxu0 0.0
      %3020 = vmatprep.subr.mxu0 0.0
      %3021 = vmatpush1.msra.mxu0 0.0
      %3022 = vmatprep.subr.mxu0 0.0
      %3023 = vmatpush1.msra.mxu0 0.0
      %3024 = vmatprep.subr.mxu0 0.0
      %3025 = vmatpush1.msra.mxu0 %v2989
      %3026 = vmatprep.subr.mxu0 0.0
      %3027 = vmatpush2.msra.mxu0 0.0
      %3028 = vmatprep.subr.mxu0 0.0
      %3029 = vmatpush2.msra.mxu0 0.0
      %3030 = vmatprep.subr.mxu0 0.0
      %3031 = vmatpush2.msra.mxu0 0.0
      %3032 = vmatprep.subr.mxu0 0.0
      %3033 = vmatpush2.msra.mxu0 0.0
      %3034 = vmatprep.subr.mxu0 0.0
      %3035 = vmatpush2.msra.mxu0 0.0
      %3036 = vmatprep.subr.mxu0 0.0
      %3037 = vmatpush2.msra.mxu0 0.0
      %3038 = vmatprep.subr.mxu0 0.0
      %3039 = vmatpush2.msra.mxu0 0.0
      %3040 = vmatprep.subr.mxu0 0.0
      %3041 = vmatpush2.msra.mxu0 0.0
      %3042 = vmatprep.subr.mxu0 0.0
      %3043 = vmatpush2.msra.mxu0 0.0
      %3044 = vmatprep.subr.mxu0 0.0
      %3045 = vmatpush2.msra.mxu0 0.0
      %3046 = vmatprep.subr.mxu0 0.0
      %3047 = vmatpush2.msra.mxu0 0.0
      %3048 = vmatprep.subr.mxu0 0.0
      %3049 = vmatpush2.msra.mxu0 0.0
      %3050 = vmatprep.subr.mxu0 0.0
      %3051 = vmatpush2.msra.mxu0 0.0
      %3052 = vmatprep.subr.mxu0 0.0
      %3053 = vmatpush2.msra.mxu0 0.0
      %3054 = vmatprep.subr.mxu0 0.0
      %3055 = vmatpush2.msra.mxu0 0.0
      %3056 = vmatprep.subr.mxu0 0.0
      %3057 = vmatpush2.msra.mxu0 0.0
      %3058 = vmatprep.mubr.f32.mxu0 0.0
      %3059 = vmatmul.mubr.f32.gmra.mxu0 %v2234
      %v3060 = vpop.f32.mrf.mxu0
      %v3061 = vadd.f32 0.0, %v3060
      %v3062 = vpop.f32.mrf.mxu0
      %3063 = vmatprep.mubr.f32.mxu0 0.0
      %3064 = vmatmul.mubr.f32.gmra.mxu0 %v2236
      %v3065 = vpop.f32.mrf.mxu0
      %v3066 = vadd.f32 0.0, %v3065
      %v3067 = vpop.f32.mrf.mxu0
      %3068 = vmatprep.mubr.f32.mxu0 0.0
      %3069 = vmatmul.mubr.f32.gmra.mxu0 %v2238
      %v3070 = vpop.f32.mrf.mxu0
      %v3071 = vadd.f32 0.0, %v3070
      %v3072 = vpop.f32.mrf.mxu0
      %3073 = vmatprep.mubr.f32.mxu0 0.0
      %3074 = vmatmul.mubr.f32.gmra.mxu0 %v2240
      %v3075 = vpop.f32.mrf.mxu0
      %v3076 = vadd.f32 0.0, %v3075
      %v3077 = vpop.f32.mrf.mxu0
      %3078 = vmatprep.mubr.f32.mxu0 0.0
      %3079 = vmatmul.mubr.f32.gmra.mxu0 %v2242
      %v3080 = vpop.f32.mrf.mxu0
      %v3081 = vadd.f32 0.0, %v3080
      %v3082 = vpop.f32.mrf.mxu0
      %3083 = vmatprep.mubr.f32.mxu0 0.0
      %3084 = vmatmul.mubr.f32.gmra.mxu0 %v2244
      %v3085 = vpop.f32.mrf.mxu0
      %v3086 = vadd.f32 0.0, %v3085
      %v3087 = vpop.f32.mrf.mxu0
      %3088 = vmatprep.mubr.f32.mxu0 0.0
      %3089 = vmatmul.mubr.f32.gmra.mxu0 %v2246
      %v3090 = vpop.f32.mrf.mxu0
      %v3091 = vadd.f32 0.0, %v3090
      %v3092 = vpop.f32.mrf.mxu0
      %3093 = vmatprep.mubr.f32.mxu0 0.0
      %3094 = vmatmul.mubr.f32.gmra.mxu0 %v2248
      %v3095 = vpop.f32.mrf.mxu0
      %v3096 = vadd.f32 0.0, %v3095
      %v3097 = vpop.f32.mrf.mxu0
      %3098 = vmatprep.mubr.f32.mxu0 0.0
      %3099 = vmatmul.mubr.f32.gmra.mxu0 %v2250
      %v3100 = vpop.f32.mrf.mxu0
      %v3101 = vadd.f32 0.0, %v3100
      %v3102 = vpop.f32.mrf.mxu0
      %3103 = vmatprep.mubr.f32.mxu0 0.0
      %3104 = vmatmul.mubr.f32.gmra.mxu0 %v2252
      %v3105 = vpop.f32.mrf.mxu0
      %v3106 = vadd.f32 0.0, %v3105
      %v3107 = vpop.f32.mrf.mxu0
      %3108 = vmatprep.mubr.f32.mxu0 0.0
      %3109 = vmatmul.mubr.f32.gmra.mxu0 %v2254
      %v3110 = vpop.f32.mrf.mxu0
      %v3111 = vadd.f32 0.0, %v3110
      %v3112 = vpop.f32.mrf.mxu0
      %3113 = vmatprep.mubr.f32.mxu0 0.0
      %3114 = vmatmul.mubr.f32.gmra.mxu0 %v2256
      %v3115 = vpop.f32.mrf.mxu0
      %v3116 = vadd.f32 0.0, %v3115
      %v3117 = vpop.f32.mrf.mxu0
      %3118 = vmatprep.mubr.f32.mxu0 0.0
      %3119 = vmatmul.mubr.f32.gmra.mxu0 %v2258
      %v3120 = vpop.f32.mrf.mxu0
      %v3121 = vadd.f32 0.0, %v3120
      %v3122 = vpop.f32.mrf.mxu0
      %3123 = vmatprep.mubr.f32.mxu0 0.0
      %3124 = vmatmul.mubr.f32.gmra.mxu0 %v2260
      %v3125 = vpop.f32.mrf.mxu0
      %v3126 = vadd.f32 0.0, %v3125
      %v3127 = vpop.f32.mrf.mxu0
      %3128 = vmatprep.mubr.f32.mxu0 0.0
      %3129 = vmatmul.mubr.f32.gmra.mxu0 %v2990
      %v3130 = vpop.f32.mrf.mxu0
      %v3131 = vadd.f32 0.0, %v3130
      %v3132 = vpop.f32.mrf.mxu0
      %3133 = vmatprep.mubr.f32.mxu0 0.0
      %3134 = vmatmul.mubr.f32.gmra.mxu0 %v2992
      %v3135 = vpop.f32.mrf.mxu0
      %v3136 = vadd.f32 0.0, %v3135
      %v3137 = vpop.f32.mrf.mxu0
      %3138 = vdwg.mxu0
      %v3139 = vadd.f32 %v2966, %v3061
      %v3140 = vadd.f32 %v2967, %v3066
      %v3141 = vadd.f32 %v2968, %v3071
      %v3142 = vadd.f32 %v2969, %v3076
      %v3143 = vadd.f32 %v2970, %v3081
      %v3144 = vadd.f32 %v2971, %v3086
      %v3145 = vadd.f32 %v2972, %v3091
      %v3146 = vadd.f32 %v2973, %v3096
      %v3147 = vadd.f32 %v2974, %v3101
      %v3148 = vadd.f32 %v2975, %v3106
      %v3149 = vadd.f32 %v2976, %v3111
      %v3150 = vadd.f32 %v2977, %v3116
      %v3151 = vadd.f32 %v2978, %v3121
      %v3152 = vadd.f32 %v2979, %v3126
      %v3153 = vadd.f32 %v2980, %v3131
      %v3154 = vadd.f32 %v2981, %v3136
      %v3155 = vrot.slane %v2168, 2
      %v3156 = vrot.slane %v2144, 2
      %v3157 = vsel %vm776, %v3155, %v3156
      %v3158 = vrot.slane %v2176, 2
      %v3159 = vsel %vm776, %v3156, %v3158
      %s3160 = scalar_lea.vmem %s3, 40
      %v3161 = vld [vmem:[%s3160] sm:$0xff]
      %v3162 = vsel %vm2229, %v3157, 0
      %v3164 = vsel %vm2229, %v3159, 0
      %3166 = vmatprep.subr.mxu0 0.0
      %3167 = vmatpush1.msra.mxu0 0.0
      %3168 = vmatprep.subr.mxu0 0.0
      %3169 = vmatpush1.msra.mxu0 0.0
      %3170 = vmatprep.subr.mxu0 0.0
      %3171 = vmatpush1.msra.mxu0 0.0
      %3172 = vmatprep.subr.mxu0 0.0
      %3173 = vmatpush1.msra.mxu0 0.0
      %3174 = vmatprep.subr.mxu0 0.0
      %3175 = vmatpush1.msra.mxu0 0.0
      %3176 = vmatprep.subr.mxu0 0.0
      %3177 = vmatpush1.msra.mxu0 0.0
      %3178 = vmatprep.subr.mxu0 0.0
      %3179 = vmatpush1.msra.mxu0 0.0
      %3180 = vmatprep.subr.mxu0 0.0
      %3181 = vmatpush1.msra.mxu0 0.0
      %3182 = vmatprep.subr.mxu0 0.0
      %3183 = vmatpush1.msra.mxu0 0.0
      %3184 = vmatprep.subr.mxu0 0.0
      %3185 = vmatpush1.msra.mxu0 0.0
      %3186 = vmatprep.subr.mxu0 0.0
      %3187 = vmatpush1.msra.mxu0 0.0
      %3188 = vmatprep.subr.mxu0 0.0
      %3189 = vmatpush1.msra.mxu0 0.0
      %3190 = vmatprep.subr.mxu0 0.0
      %3191 = vmatpush1.msra.mxu0 0.0
      %3192 = vmatprep.subr.mxu0 0.0
      %3193 = vmatpush1.msra.mxu0 0.0
      %3194 = vmatprep.subr.mxu0 0.0
      %3195 = vmatpush1.msra.mxu0 0.0
      %3196 = vmatprep.subr.mxu0 0.0
      %3197 = vmatpush1.msra.mxu0 %v3161
      %3198 = vmatprep.subr.mxu0 0.0
      %3199 = vmatpush2.msra.mxu0 0.0
      %3200 = vmatprep.subr.mxu0 0.0
      %3201 = vmatpush2.msra.mxu0 0.0
      %3202 = vmatprep.subr.mxu0 0.0
      %3203 = vmatpush2.msra.mxu0 0.0
      %3204 = vmatprep.subr.mxu0 0.0
      %3205 = vmatpush2.msra.mxu0 0.0
      %3206 = vmatprep.subr.mxu0 0.0
      %3207 = vmatpush2.msra.mxu0 0.0
      %3208 = vmatprep.subr.mxu0 0.0
      %3209 = vmatpush2.msra.mxu0 0.0
      %3210 = vmatprep.subr.mxu0 0.0
      %3211 = vmatpush2.msra.mxu0 0.0
      %3212 = vmatprep.subr.mxu0 0.0
      %3213 = vmatpush2.msra.mxu0 0.0
      %3214 = vmatprep.subr.mxu0 0.0
      %3215 = vmatpush2.msra.mxu0 0.0
      %3216 = vmatprep.subr.mxu0 0.0
      %3217 = vmatpush2.msra.mxu0 0.0
      %3218 = vmatprep.subr.mxu0 0.0
      %3219 = vmatpush2.msra.mxu0 0.0
      %3220 = vmatprep.subr.mxu0 0.0
      %3221 = vmatpush2.msra.mxu0 0.0
      %3222 = vmatprep.subr.mxu0 0.0
      %3223 = vmatpush2.msra.mxu0 0.0
      %3224 = vmatprep.subr.mxu0 0.0
      %3225 = vmatpush2.msra.mxu0 0.0
      %3226 = vmatprep.subr.mxu0 0.0
      %3227 = vmatpush2.msra.mxu0 0.0
      %3228 = vmatprep.subr.mxu0 0.0
      %3229 = vmatpush2.msra.mxu0 0.0
      %3230 = vmatprep.mubr.f32.mxu0 0.0
      %3231 = vmatmul.mubr.f32.gmra.mxu0 %v2625
      %v3232 = vpop.f32.mrf.mxu0
      %v3233 = vadd.f32 0.0, %v3232
      %v3234 = vpop.f32.mrf.mxu0
      %3235 = vmatprep.mubr.f32.mxu0 0.0
      %3236 = vmatmul.mubr.f32.gmra.mxu0 %v2627
      %v3237 = vpop.f32.mrf.mxu0
      %v3238 = vadd.f32 0.0, %v3237
      %v3239 = vpop.f32.mrf.mxu0
      %3240 = vmatprep.mubr.f32.mxu0 0.0
      %3241 = vmatmul.mubr.f32.gmra.mxu0 %v2629
      %v3242 = vpop.f32.mrf.mxu0
      %v3243 = vadd.f32 0.0, %v3242
      %v3244 = vpop.f32.mrf.mxu0
      %3245 = vmatprep.mubr.f32.mxu0 0.0
      %3246 = vmatmul.mubr.f32.gmra.mxu0 %v2631
      %v3247 = vpop.f32.mrf.mxu0
      %v3248 = vadd.f32 0.0, %v3247
      %v3249 = vpop.f32.mrf.mxu0
      %3250 = vmatprep.mubr.f32.mxu0 0.0
      %3251 = vmatmul.mubr.f32.gmra.mxu0 %v2633
      %v3252 = vpop.f32.mrf.mxu0
      %v3253 = vadd.f32 0.0, %v3252
      %v3254 = vpop.f32.mrf.mxu0
      %3255 = vmatprep.mubr.f32.mxu0 0.0
      %3256 = vmatmul.mubr.f32.gmra.mxu0 %v2635
      %v3257 = vpop.f32.mrf.mxu0
      %v3258 = vadd.f32 0.0, %v3257
      %v3259 = vpop.f32.mrf.mxu0
      %3260 = vmatprep.mubr.f32.mxu0 0.0
      %3261 = vmatmul.mubr.f32.gmra.mxu0 %v2637
      %v3262 = vpop.f32.mrf.mxu0
      %v3263 = vadd.f32 0.0, %v3262
      %v3264 = vpop.f32.mrf.mxu0
      %3265 = vmatprep.mubr.f32.mxu0 0.0
      %3266 = vmatmul.mubr.f32.gmra.mxu0 %v2639
      %v3267 = vpop.f32.mrf.mxu0
      %v3268 = vadd.f32 0.0, %v3267
      %v3269 = vpop.f32.mrf.mxu0
      %3270 = vmatprep.mubr.f32.mxu0 0.0
      %3271 = vmatmul.mubr.f32.gmra.mxu0 %v2641
      %v3272 = vpop.f32.mrf.mxu0
      %v3273 = vadd.f32 0.0, %v3272
      %v3274 = vpop.f32.mrf.mxu0
      %3275 = vmatprep.mubr.f32.mxu0 0.0
      %3276 = vmatmul.mubr.f32.gmra.mxu0 %v2643
      %v3277 = vpop.f32.mrf.mxu0
      %v3278 = vadd.f32 0.0, %v3277
      %v3279 = vpop.f32.mrf.mxu0
      %3280 = vmatprep.mubr.f32.mxu0 0.0
      %3281 = vmatmul.mubr.f32.gmra.mxu0 %v2645
      %v3282 = vpop.f32.mrf.mxu0
      %v3283 = vadd.f32 0.0, %v3282
      %v3284 = vpop.f32.mrf.mxu0
      %3285 = vmatprep.mubr.f32.mxu0 0.0
      %3286 = vmatmul.mubr.f32.gmra.mxu0 %v2647
      %v3287 = vpop.f32.mrf.mxu0
      %v3288 = vadd.f32 0.0, %v3287
      %v3289 = vpop.f32.mrf.mxu0
      %3290 = vmatprep.mubr.f32.mxu0 0.0
      %3291 = vmatmul.mubr.f32.gmra.mxu0 %v2649
      %v3292 = vpop.f32.mrf.mxu0
      %v3293 = vadd.f32 0.0, %v3292
      %v3294 = vpop.f32.mrf.mxu0
      %3295 = vmatprep.mubr.f32.mxu0 0.0
      %3296 = vmatmul.mubr.f32.gmra.mxu0 %v2651
      %v3297 = vpop.f32.mrf.mxu0
      %v3298 = vadd.f32 0.0, %v3297
      %v3299 = vpop.f32.mrf.mxu0
      %3300 = vmatprep.mubr.f32.mxu0 0.0
      %3301 = vmatmul.mubr.f32.gmra.mxu0 %v3162
      %v3302 = vpop.f32.mrf.mxu0
      %v3303 = vadd.f32 0.0, %v3302
      %v3304 = vpop.f32.mrf.mxu0
      %3305 = vmatprep.mubr.f32.mxu0 0.0
      %3306 = vmatmul.mubr.f32.gmra.mxu0 %v3164
      %v3307 = vpop.f32.mrf.mxu0
      %v3308 = vadd.f32 0.0, %v3307
      %v3309 = vpop.f32.mrf.mxu0
      %3310 = vdwg.mxu0
      %v3311 = vadd.f32 %v3139, %v3233
      %v3312 = vadd.f32 %v3140, %v3238
      %v3313 = vadd.f32 %v3141, %v3243
      %v3314 = vadd.f32 %v3142, %v3248
      %v3315 = vadd.f32 %v3143, %v3253
      %v3316 = vadd.f32 %v3144, %v3258
      %v3317 = vadd.f32 %v3145, %v3263
      %v3318 = vadd.f32 %v3146, %v3268
      %v3319 = vadd.f32 %v3147, %v3273
      %v3320 = vadd.f32 %v3148, %v3278
      %v3321 = vadd.f32 %v3149, %v3283
      %v3322 = vadd.f32 %v3150, %v3288
      %v3323 = vadd.f32 %v3151, %v3293
      %v3324 = vadd.f32 %v3152, %v3298
      %v3325 = vadd.f32 %v3153, %v3303
      %v3326 = vadd.f32 %v3154, %v3308
      %s3327 = scalar_lea.vmem %s3, 48
      %v3328 = vld [vmem:[%s3327] sm:$0xff]
      %3329 = vmatprep.subr.mxu0 0.0
      %3330 = vmatpush1.msra.mxu0 0.0
      %3331 = vmatprep.subr.mxu0 0.0
      %3332 = vmatpush1.msra.mxu0 0.0
      %3333 = vmatprep.subr.mxu0 0.0
      %3334 = vmatpush1.msra.mxu0 0.0
      %3335 = vmatprep.subr.mxu0 0.0
      %3336 = vmatpush1.msra.mxu0 0.0
      %3337 = vmatprep.subr.mxu0 0.0
      %3338 = vmatpush1.msra.mxu0 0.0
      %3339 = vmatprep.subr.mxu0 0.0
      %3340 = vmatpush1.msra.mxu0 0.0
      %3341 = vmatprep.subr.mxu0 0.0
      %3342 = vmatpush1.msra.mxu0 0.0
      %3343 = vmatprep.subr.mxu0 0.0
      %3344 = vmatpush1.msra.mxu0 0.0
      %3345 = vmatprep.subr.mxu0 0.0
      %3346 = vmatpush1.msra.mxu0 0.0
      %3347 = vmatprep.subr.mxu0 0.0
      %3348 = vmatpush1.msra.mxu0 0.0
      %3349 = vmatprep.subr.mxu0 0.0
      %3350 = vmatpush1.msra.mxu0 0.0
      %3351 = vmatprep.subr.mxu0 0.0
      %3352 = vmatpush1.msra.mxu0 0.0
      %3353 = vmatprep.subr.mxu0 0.0
      %3354 = vmatpush1.msra.mxu0 0.0
      %3355 = vmatprep.subr.mxu0 0.0
      %3356 = vmatpush1.msra.mxu0 0.0
      %3357 = vmatprep.subr.mxu0 0.0
      %3358 = vmatpush1.msra.mxu0 0.0
      %3359 = vmatprep.subr.mxu0 0.0
      %3360 = vmatpush1.msra.mxu0 %v3328
      %3361 = vmatprep.subr.mxu0 0.0
      %3362 = vmatpush2.msra.mxu0 0.0
      %3363 = vmatprep.subr.mxu0 0.0
      %3364 = vmatpush2.msra.mxu0 0.0
      %3365 = vmatprep.subr.mxu0 0.0
      %3366 = vmatpush2.msra.mxu0 0.0
      %3367 = vmatprep.subr.mxu0 0.0
      %3368 = vmatpush2.msra.mxu0 0.0
      %3369 = vmatprep.subr.mxu0 0.0
      %3370 = vmatpush2.msra.mxu0 0.0
      %3371 = vmatprep.subr.mxu0 0.0
      %3372 = vmatpush2.msra.mxu0 0.0
      %3373 = vmatprep.subr.mxu0 0.0
      %3374 = vmatpush2.msra.mxu0 0.0
      %3375 = vmatprep.subr.mxu0 0.0
      %3376 = vmatpush2.msra.mxu0 0.0
      %3377 = vmatprep.subr.mxu0 0.0
      %3378 = vmatpush2.msra.mxu0 0.0
      %3379 = vmatprep.subr.mxu0 0.0
      %3380 = vmatpush2.msra.mxu0 0.0
      %3381 = vmatprep.subr.mxu0 0.0
      %3382 = vmatpush2.msra.mxu0 0.0
      %3383 = vmatprep.subr.mxu0 0.0
      %3384 = vmatpush2.msra.mxu0 0.0
      %3385 = vmatprep.subr.mxu0 0.0
      %3386 = vmatpush2.msra.mxu0 0.0
      %3387 = vmatprep.subr.mxu0 0.0
      %3388 = vmatpush2.msra.mxu0 0.0
      %3389 = vmatprep.subr.mxu0 0.0
      %3390 = vmatpush2.msra.mxu0 0.0
      %3391 = vmatprep.subr.mxu0 0.0
      %3392 = vmatpush2.msra.mxu0 0.0
      %3393 = vmatprep.mubr.f32.mxu0 0.0
      %3394 = vmatmul.mubr.f32.gmra.mxu0 %v2415
      %v3395 = vpop.f32.mrf.mxu0
      %v3396 = vadd.f32 0.0, %v3395
      %v3397 = vpop.f32.mrf.mxu0
      %3398 = vmatprep.mubr.f32.mxu0 0.0
      %3399 = vmatmul.mubr.f32.gmra.mxu0 %v2417
      %v3400 = vpop.f32.mrf.mxu0
      %v3401 = vadd.f32 0.0, %v3400
      %v3402 = vpop.f32.mrf.mxu0
      %3403 = vmatprep.mubr.f32.mxu0 0.0
      %3404 = vmatmul.mubr.f32.gmra.mxu0 %v2419
      %v3405 = vpop.f32.mrf.mxu0
      %v3406 = vadd.f32 0.0, %v3405
      %v3407 = vpop.f32.mrf.mxu0
      %3408 = vmatprep.mubr.f32.mxu0 0.0
      %3409 = vmatmul.mubr.f32.gmra.mxu0 %v2421
      %v3410 = vpop.f32.mrf.mxu0
      %v3411 = vadd.f32 0.0, %v3410
      %v3412 = vpop.f32.mrf.mxu0
      %3413 = vmatprep.mubr.f32.mxu0 0.0
      %3414 = vmatmul.mubr.f32.gmra.mxu0 %v2423
      %v3415 = vpop.f32.mrf.mxu0
      %v3416 = vadd.f32 0.0, %v3415
      %v3417 = vpop.f32.mrf.mxu0
      %3418 = vmatprep.mubr.f32.mxu0 0.0
      %3419 = vmatmul.mubr.f32.gmra.mxu0 %v2425
      %v3420 = vpop.f32.mrf.mxu0
      %v3421 = vadd.f32 0.0, %v3420
      %v3422 = vpop.f32.mrf.mxu0
      %3423 = vmatprep.mubr.f32.mxu0 0.0
      %3424 = vmatmul.mubr.f32.gmra.mxu0 %v2427
      %v3425 = vpop.f32.mrf.mxu0
      %v3426 = vadd.f32 0.0, %v3425
      %v3427 = vpop.f32.mrf.mxu0
      %3428 = vmatprep.mubr.f32.mxu0 0.0
      %3429 = vmatmul.mubr.f32.gmra.mxu0 %v2429
      %v3430 = vpop.f32.mrf.mxu0
      %v3431 = vadd.f32 0.0, %v3430
      %v3432 = vpop.f32.mrf.mxu0
      %3433 = vmatprep.mubr.f32.mxu0 0.0
      %3434 = vmatmul.mubr.f32.gmra.mxu0 %v2431
      %v3435 = vpop.f32.mrf.mxu0
      %v3436 = vadd.f32 0.0, %v3435
      %v3437 = vpop.f32.mrf.mxu0
      %3438 = vmatprep.mubr.f32.mxu0 0.0
      %3439 = vmatmul.mubr.f32.gmra.mxu0 %v2433
      %v3440 = vpop.f32.mrf.mxu0
      %v3441 = vadd.f32 0.0, %v3440
      %v3442 = vpop.f32.mrf.mxu0
      %3443 = vmatprep.mubr.f32.mxu0 0.0
      %3444 = vmatmul.mubr.f32.gmra.mxu0 %v2435
      %v3445 = vpop.f32.mrf.mxu0
      %v3446 = vadd.f32 0.0, %v3445
      %v3447 = vpop.f32.mrf.mxu0
      %3448 = vmatprep.mubr.f32.mxu0 0.0
      %3449 = vmatmul.mubr.f32.gmra.mxu0 %v2437
      %v3450 = vpop.f32.mrf.mxu0
      %v3451 = vadd.f32 0.0, %v3450
      %v3452 = vpop.f32.mrf.mxu0
      %3453 = vmatprep.mubr.f32.mxu0 0.0
      %3454 = vmatmul.mubr.f32.gmra.mxu0 %v2817
      %v3455 = vpop.f32.mrf.mxu0
      %v3456 = vadd.f32 0.0, %v3455
      %v3457 = vpop.f32.mrf.mxu0
      %3458 = vmatprep.mubr.f32.mxu0 0.0
      %3459 = vmatmul.mubr.f32.gmra.mxu0 %v2819
      %v3460 = vpop.f32.mrf.mxu0
      %v3461 = vadd.f32 0.0, %v3460
      %v3462 = vpop.f32.mrf.mxu0
      %3463 = vmatprep.mubr.f32.mxu0 0.0
      %3464 = vmatmul.mubr.f32.gmra.mxu0 %v2407
      %v3465 = vpop.f32.mrf.mxu0
      %v3466 = vadd.f32 0.0, %v3465
      %v3467 = vpop.f32.mrf.mxu0
      %3468 = vmatprep.mubr.f32.mxu0 0.0
      %3469 = vmatmul.mubr.f32.gmra.mxu0 %v2409
      %v3470 = vpop.f32.mrf.mxu0
      %v3471 = vadd.f32 0.0, %v3470
      %v3472 = vpop.f32.mrf.mxu0
      %3473 = vdwg.mxu0
      %v3474 = vadd.f32 %v3311, %v3396
      %v3475 = vadd.f32 %v3312, %v3401
      %v3476 = vadd.f32 %v3313, %v3406
      %v3477 = vadd.f32 %v3314, %v3411
      %v3478 = vadd.f32 %v3315, %v3416
      %v3479 = vadd.f32 %v3316, %v3421
      %v3480 = vadd.f32 %v3317, %v3426
      %v3481 = vadd.f32 %v3318, %v3431
      %v3482 = vadd.f32 %v3319, %v3436
      %v3483 = vadd.f32 %v3320, %v3441
      %v3484 = vadd.f32 %v3321, %v3446
      %v3485 = vadd.f32 %v3322, %v3451
      %v3486 = vadd.f32 %v3323, %v3456
      %v3487 = vadd.f32 %v3324, %v3461
      %v3488 = vadd.f32 %v3325, %v3466
      %v3489 = vadd.f32 %v3326, %v3471
      %s3490 = scalar_lea.vmem %s3, 56
      %v3491 = vld [vmem:[%s3490] sm:$0xff]
      %3492 = vmatprep.subr.mxu0 0.0
      %3493 = vmatpush1.msra.mxu0 0.0
      %3494 = vmatprep.subr.mxu0 0.0
      %3495 = vmatpush1.msra.mxu0 0.0
      %3496 = vmatprep.subr.mxu0 0.0
      %3497 = vmatpush1.msra.mxu0 0.0
      %3498 = vmatprep.subr.mxu0 0.0
      %3499 = vmatpush1.msra.mxu0 0.0
      %3500 = vmatprep.subr.mxu0 0.0
      %3501 = vmatpush1.msra.mxu0 0.0
      %3502 = vmatprep.subr.mxu0 0.0
      %3503 = vmatpush1.msra.mxu0 0.0
      %3504 = vmatprep.subr.mxu0 0.0
      %3505 = vmatpush1.msra.mxu0 0.0
      %3506 = vmatprep.subr.mxu0 0.0
      %3507 = vmatpush1.msra.mxu0 0.0
      %3508 = vmatprep.subr.mxu0 0.0
      %3509 = vmatpush1.msra.mxu0 0.0
      %3510 = vmatprep.subr.mxu0 0.0
      %3511 = vmatpush1.msra.mxu0 0.0
      %3512 = vmatprep.subr.mxu0 0.0
      %3513 = vmatpush1.msra.mxu0 0.0
      %3514 = vmatprep.subr.mxu0 0.0
      %3515 = vmatpush1.msra.mxu0 0.0
      %3516 = vmatprep.subr.mxu0 0.0
      %3517 = vmatpush1.msra.mxu0 0.0
      %3518 = vmatprep.subr.mxu0 0.0
      %3519 = vmatpush1.msra.mxu0 0.0
      %3520 = vmatprep.subr.mxu0 0.0
      %3521 = vmatpush1.msra.mxu0 0.0
      %3522 = vmatprep.subr.mxu0 0.0
      %3523 = vmatpush1.msra.mxu0 %v3491
      %3524 = vmatprep.subr.mxu0 0.0
      %3525 = vmatpush2.msra.mxu0 0.0
      %3526 = vmatprep.subr.mxu0 0.0
      %3527 = vmatpush2.msra.mxu0 0.0
      %3528 = vmatprep.subr.mxu0 0.0
      %3529 = vmatpush2.msra.mxu0 0.0
      %3530 = vmatprep.subr.mxu0 0.0
      %3531 = vmatpush2.msra.mxu0 0.0
      %3532 = vmatprep.subr.mxu0 0.0
      %3533 = vmatpush2.msra.mxu0 0.0
      %3534 = vmatprep.subr.mxu0 0.0
      %3535 = vmatpush2.msra.mxu0 0.0
      %3536 = vmatprep.subr.mxu0 0.0
      %3537 = vmatpush2.msra.mxu0 0.0
      %3538 = vmatprep.subr.mxu0 0.0
      %3539 = vmatpush2.msra.mxu0 0.0
      %3540 = vmatprep.subr.mxu0 0.0
      %3541 = vmatpush2.msra.mxu0 0.0
      %3542 = vmatprep.subr.mxu0 0.0
      %3543 = vmatpush2.msra.mxu0 0.0
      %3544 = vmatprep.subr.mxu0 0.0
      %3545 = vmatpush2.msra.mxu0 0.0
      %3546 = vmatprep.subr.mxu0 0.0
      %3547 = vmatpush2.msra.mxu0 0.0
      %3548 = vmatprep.subr.mxu0 0.0
      %3549 = vmatpush2.msra.mxu0 0.0
      %3550 = vmatprep.subr.mxu0 0.0
      %3551 = vmatpush2.msra.mxu0 0.0
      %3552 = vmatprep.subr.mxu0 0.0
      %3553 = vmatpush2.msra.mxu0 0.0
      %3554 = vmatprep.subr.mxu0 0.0
      %3555 = vmatpush2.msra.mxu0 0.0
      %3556 = vmatprep.mubr.f32.mxu0 0.0
      %3557 = vmatmul.mubr.f32.gmra.mxu0 %v2238
      %v3558 = vpop.f32.mrf.mxu0
      %v3559 = vadd.f32 0.0, %v3558
      %v3560 = vpop.f32.mrf.mxu0
      %3561 = vmatprep.mubr.f32.mxu0 0.0
      %3562 = vmatmul.mubr.f32.gmra.mxu0 %v2240
      %v3563 = vpop.f32.mrf.mxu0
      %v3564 = vadd.f32 0.0, %v3563
      %v3565 = vpop.f32.mrf.mxu0
      %3566 = vmatprep.mubr.f32.mxu0 0.0
      %3567 = vmatmul.mubr.f32.gmra.mxu0 %v2242
      %v3568 = vpop.f32.mrf.mxu0
      %v3569 = vadd.f32 0.0, %v3568
      %v3570 = vpop.f32.mrf.mxu0
      %3571 = vmatprep.mubr.f32.mxu0 0.0
      %3572 = vmatmul.mubr.f32.gmra.mxu0 %v2244
      %v3573 = vpop.f32.mrf.mxu0
      %v3574 = vadd.f32 0.0, %v3573
      %v3575 = vpop.f32.mrf.mxu0
      %3576 = vmatprep.mubr.f32.mxu0 0.0
      %3577 = vmatmul.mubr.f32.gmra.mxu0 %v2246
      %v3578 = vpop.f32.mrf.mxu0
      %v3579 = vadd.f32 0.0, %v3578
      %v3580 = vpop.f32.mrf.mxu0
      %3581 = vmatprep.mubr.f32.mxu0 0.0
      %3582 = vmatmul.mubr.f32.gmra.mxu0 %v2248
      %v3583 = vpop.f32.mrf.mxu0
      %v3584 = vadd.f32 0.0, %v3583
      %v3585 = vpop.f32.mrf.mxu0
      %3586 = vmatprep.mubr.f32.mxu0 0.0
      %3587 = vmatmul.mubr.f32.gmra.mxu0 %v2250
      %v3588 = vpop.f32.mrf.mxu0
      %v3589 = vadd.f32 0.0, %v3588
      %v3590 = vpop.f32.mrf.mxu0
      %3591 = vmatprep.mubr.f32.mxu0 0.0
      %3592 = vmatmul.mubr.f32.gmra.mxu0 %v2252
      %v3593 = vpop.f32.mrf.mxu0
      %v3594 = vadd.f32 0.0, %v3593
      %v3595 = vpop.f32.mrf.mxu0
      %3596 = vmatprep.mubr.f32.mxu0 0.0
      %3597 = vmatmul.mubr.f32.gmra.mxu0 %v2254
      %v3598 = vpop.f32.mrf.mxu0
      %v3599 = vadd.f32 0.0, %v3598
      %v3600 = vpop.f32.mrf.mxu0
      %3601 = vmatprep.mubr.f32.mxu0 0.0
      %3602 = vmatmul.mubr.f32.gmra.mxu0 %v2256
      %v3603 = vpop.f32.mrf.mxu0
      %v3604 = vadd.f32 0.0, %v3603
      %v3605 = vpop.f32.mrf.mxu0
      %3606 = vmatprep.mubr.f32.mxu0 0.0
      %3607 = vmatmul.mubr.f32.gmra.mxu0 %v2258
      %v3608 = vpop.f32.mrf.mxu0
      %v3609 = vadd.f32 0.0, %v3608
      %v3610 = vpop.f32.mrf.mxu0
      %3611 = vmatprep.mubr.f32.mxu0 0.0
      %3612 = vmatmul.mubr.f32.gmra.mxu0 %v2260
      %v3613 = vpop.f32.mrf.mxu0
      %v3614 = vadd.f32 0.0, %v3613
      %v3615 = vpop.f32.mrf.mxu0
      %3616 = vmatprep.mubr.f32.mxu0 0.0
      %3617 = vmatmul.mubr.f32.gmra.mxu0 %v2990
      %v3618 = vpop.f32.mrf.mxu0
      %v3619 = vadd.f32 0.0, %v3618
      %v3620 = vpop.f32.mrf.mxu0
      %3621 = vmatprep.mubr.f32.mxu0 0.0
      %3622 = vmatmul.mubr.f32.gmra.mxu0 %v2992
      %v3623 = vpop.f32.mrf.mxu0
      %v3624 = vadd.f32 0.0, %v3623
      %v3625 = vpop.f32.mrf.mxu0
      %3626 = vmatprep.mubr.f32.mxu0 0.0
      %3627 = vmatmul.mubr.f32.gmra.mxu0 %v2230
      %v3628 = vpop.f32.mrf.mxu0
      %v3629 = vadd.f32 0.0, %v3628
      %v3630 = vpop.f32.mrf.mxu0
      %3631 = vmatprep.mubr.f32.mxu0 0.0
      %3632 = vmatmul.mubr.f32.gmra.mxu0 %v2232
      %v3633 = vpop.f32.mrf.mxu0
      %v3634 = vadd.f32 0.0, %v3633
      %v3635 = vpop.f32.mrf.mxu0
      %3636 = vdwg.mxu0
      %v3637 = vadd.f32 %v3474, %v3559
      %v3638 = vadd.f32 %v3475, %v3564
      %v3639 = vadd.f32 %v3476, %v3569
      %v3640 = vadd.f32 %v3477, %v3574
      %v3641 = vadd.f32 %v3478, %v3579
      %v3642 = vadd.f32 %v3479, %v3584
      %v3643 = vadd.f32 %v3480, %v3589
      %v3644 = vadd.f32 %v3481, %v3594
      %v3645 = vadd.f32 %v3482, %v3599
      %v3646 = vadd.f32 %v3483, %v3604
      %v3647 = vadd.f32 %v3484, %v3609
      %v3648 = vadd.f32 %v3485, %v3614
      %v3649 = vadd.f32 %v3486, %v3619
      %v3650 = vadd.f32 %v3487, %v3624
      %v3651 = vadd.f32 %v3488, %v3629
      %v3652 = vadd.f32 %v3489, %v3634
      %s3653 = scalar_lea.vmem %s3, 64
      %v3654 = vld [vmem:[%s3653] sm:$0xff]
      %3655 = vmatprep.subr.mxu0 0.0
      %3656 = vmatpush1.msra.mxu0 0.0
      %3657 = vmatprep.subr.mxu0 0.0
      %3658 = vmatpush1.msra.mxu0 0.0
      %3659 = vmatprep.subr.mxu0 0.0
      %3660 = vmatpush1.msra.mxu0 0.0
      %3661 = vmatprep.subr.mxu0 0.0
      %3662 = vmatpush1.msra.mxu0 0.0
      %3663 = vmatprep.subr.mxu0 0.0
      %3664 = vmatpush1.msra.mxu0 0.0
      %3665 = vmatprep.subr.mxu0 0.0
      %3666 = vmatpush1.msra.mxu0 0.0
      %3667 = vmatprep.subr.mxu0 0.0
      %3668 = vmatpush1.msra.mxu0 0.0
      %3669 = vmatprep.subr.mxu0 0.0
      %3670 = vmatpush1.msra.mxu0 0.0
      %3671 = vmatprep.subr.mxu0 0.0
      %3672 = vmatpush1.msra.mxu0 0.0
      %3673 = vmatprep.subr.mxu0 0.0
      %3674 = vmatpush1.msra.mxu0 0.0
      %3675 = vmatprep.subr.mxu0 0.0
      %3676 = vmatpush1.msra.mxu0 0.0
      %3677 = vmatprep.subr.mxu0 0.0
      %3678 = vmatpush1.msra.mxu0 0.0
      %3679 = vmatprep.subr.mxu0 0.0
      %3680 = vmatpush1.msra.mxu0 0.0
      %3681 = vmatprep.subr.mxu0 0.0
      %3682 = vmatpush1.msra.mxu0 0.0
      %3683 = vmatprep.subr.mxu0 0.0
      %3684 = vmatpush1.msra.mxu0 0.0
      %3685 = vmatprep.subr.mxu0 0.0
      %3686 = vmatpush1.msra.mxu0 %v3654
      %3687 = vmatprep.subr.mxu0 0.0
      %3688 = vmatpush2.msra.mxu0 0.0
      %3689 = vmatprep.subr.mxu0 0.0
      %3690 = vmatpush2.msra.mxu0 0.0
      %3691 = vmatprep.subr.mxu0 0.0
      %3692 = vmatpush2.msra.mxu0 0.0
      %3693 = vmatprep.subr.mxu0 0.0
      %3694 = vmatpush2.msra.mxu0 0.0
      %3695 = vmatprep.subr.mxu0 0.0
      %3696 = vmatpush2.msra.mxu0 0.0
      %3697 = vmatprep.subr.mxu0 0.0
      %3698 = vmatpush2.msra.mxu0 0.0
      %3699 = vmatprep.subr.mxu0 0.0
      %3700 = vmatpush2.msra.mxu0 0.0
      %3701 = vmatprep.subr.mxu0 0.0
      %3702 = vmatpush2.msra.mxu0 0.0
      %3703 = vmatprep.subr.mxu0 0.0
      %3704 = vmatpush2.msra.mxu0 0.0
      %3705 = vmatprep.subr.mxu0 0.0
      %3706 = vmatpush2.msra.mxu0 0.0
      %3707 = vmatprep.subr.mxu0 0.0
      %3708 = vmatpush2.msra.mxu0 0.0
      %3709 = vmatprep.subr.mxu0 0.0
      %3710 = vmatpush2.msra.mxu0 0.0
      %3711 = vmatprep.subr.mxu0 0.0
      %3712 = vmatpush2.msra.mxu0 0.0
      %3713 = vmatprep.subr.mxu0 0.0
      %3714 = vmatpush2.msra.mxu0 0.0
      %3715 = vmatprep.subr.mxu0 0.0
      %3716 = vmatpush2.msra.mxu0 0.0
      %3717 = vmatprep.subr.mxu0 0.0
      %3718 = vmatpush2.msra.mxu0 0.0
      %3719 = vmatprep.mubr.f32.mxu0 0.0
      %3720 = vmatmul.mubr.f32.gmra.mxu0 %v2629
      %v3721 = vpop.f32.mrf.mxu0
      %v3722 = vadd.f32 0.0, %v3721
      %v3723 = vpop.f32.mrf.mxu0
      %3724 = vmatprep.mubr.f32.mxu0 0.0
      %3725 = vmatmul.mubr.f32.gmra.mxu0 %v2631
      %v3726 = vpop.f32.mrf.mxu0
      %v3727 = vadd.f32 0.0, %v3726
      %v3728 = vpop.f32.mrf.mxu0
      %3729 = vmatprep.mubr.f32.mxu0 0.0
      %3730 = vmatmul.mubr.f32.gmra.mxu0 %v2633
      %v3731 = vpop.f32.mrf.mxu0
      %v3732 = vadd.f32 0.0, %v3731
      %v3733 = vpop.f32.mrf.mxu0
      %3734 = vmatprep.mubr.f32.mxu0 0.0
      %3735 = vmatmul.mubr.f32.gmra.mxu0 %v2635
      %v3736 = vpop.f32.mrf.mxu0
      %v3737 = vadd.f32 0.0, %v3736
      %v3738 = vpop.f32.mrf.mxu0
      %3739 = vmatprep.mubr.f32.mxu0 0.0
      %3740 = vmatmul.mubr.f32.gmra.mxu0 %v2637
      %v3741 = vpop.f32.mrf.mxu0
      %v3742 = vadd.f32 0.0, %v3741
      %v3743 = vpop.f32.mrf.mxu0
      %3744 = vmatprep.mubr.f32.mxu0 0.0
      %3745 = vmatmul.mubr.f32.gmra.mxu0 %v2639
      %v3746 = vpop.f32.mrf.mxu0
      %v3747 = vadd.f32 0.0, %v3746
      %v3748 = vpop.f32.mrf.mxu0
      %3749 = vmatprep.mubr.f32.mxu0 0.0
      %3750 = vmatmul.mubr.f32.gmra.mxu0 %v2641
      %v3751 = vpop.f32.mrf.mxu0
      %v3752 = vadd.f32 0.0, %v3751
      %v3753 = vpop.f32.mrf.mxu0
      %3754 = vmatprep.mubr.f32.mxu0 0.0
      %3755 = vmatmul.mubr.f32.gmra.mxu0 %v2643
      %v3756 = vpop.f32.mrf.mxu0
      %v3757 = vadd.f32 0.0, %v3756
      %v3758 = vpop.f32.mrf.mxu0
      %3759 = vmatprep.mubr.f32.mxu0 0.0
      %3760 = vmatmul.mubr.f32.gmra.mxu0 %v2645
      %v3761 = vpop.f32.mrf.mxu0
      %v3762 = vadd.f32 0.0, %v3761
      %v3763 = vpop.f32.mrf.mxu0
      %3764 = vmatprep.mubr.f32.mxu0 0.0
      %3765 = vmatmul.mubr.f32.gmra.mxu0 %v2647
      %v3766 = vpop.f32.mrf.mxu0
      %v3767 = vadd.f32 0.0, %v3766
      %v3768 = vpop.f32.mrf.mxu0
      %3769 = vmatprep.mubr.f32.mxu0 0.0
      %3770 = vmatmul.mubr.f32.gmra.mxu0 %v2649
      %v3771 = vpop.f32.mrf.mxu0
      %v3772 = vadd.f32 0.0, %v3771
      %v3773 = vpop.f32.mrf.mxu0
      %3774 = vmatprep.mubr.f32.mxu0 0.0
      %3775 = vmatmul.mubr.f32.gmra.mxu0 %v2651
      %v3776 = vpop.f32.mrf.mxu0
      %v3777 = vadd.f32 0.0, %v3776
      %v3778 = vpop.f32.mrf.mxu0
      %3779 = vmatprep.mubr.f32.mxu0 0.0
      %3780 = vmatmul.mubr.f32.gmra.mxu0 %v3162
      %v3781 = vpop.f32.mrf.mxu0
      %v3782 = vadd.f32 0.0, %v3781
      %v3783 = vpop.f32.mrf.mxu0
      %3784 = vmatprep.mubr.f32.mxu0 0.0
      %3785 = vmatmul.mubr.f32.gmra.mxu0 %v3164
      %v3786 = vpop.f32.mrf.mxu0
      %v3787 = vadd.f32 0.0, %v3786
      %v3788 = vpop.f32.mrf.mxu0
      %3789 = vmatprep.mubr.f32.mxu0 0.0
      %3790 = vmatmul.mubr.f32.gmra.mxu0 %v2621
      %v3791 = vpop.f32.mrf.mxu0
      %v3792 = vadd.f32 0.0, %v3791
      %v3793 = vpop.f32.mrf.mxu0
      %3794 = vmatprep.mubr.f32.mxu0 0.0
      %3795 = vmatmul.mubr.f32.gmra.mxu0 %v2623
      %v3796 = vpop.f32.mrf.mxu0
      %v3797 = vadd.f32 0.0, %v3796
      %v3798 = vpop.f32.mrf.mxu0
      %3799 = vdwg.mxu0
      %v3800 = vadd.f32 %v3637, %v3722
      %v3801 = vadd.f32 %v3638, %v3727
      %v3802 = vadd.f32 %v3639, %v3732
      %v3803 = vadd.f32 %v3640, %v3737
      %v3804 = vadd.f32 %v3641, %v3742
      %v3805 = vadd.f32 %v3642, %v3747
      %v3806 = vadd.f32 %v3643, %v3752
      %v3807 = vadd.f32 %v3644, %v3757
      %v3808 = vadd.f32 %v3645, %v3762
      %v3809 = vadd.f32 %v3646, %v3767
      %v3810 = vadd.f32 %v3647, %v3772
      %v3811 = vadd.f32 %v3648, %v3777
      %v3812 = vadd.f32 %v3649, %v3782
      %v3813 = vadd.f32 %v3650, %v3787
      %v3814 = vadd.f32 %v3651, %v3792
      %v3815 = vadd.f32 %v3652, %v3797
      %v3817 = vlaneseq
      %v3818 = vshrl.u32 %v3817, 7
      %v3819 = vsub.s32 0, %v3818
      %v3820 = vrot.slane %v274, %v3819
      %v3822 = vadd.f32 %v3800, %v3820
      %v3823 = vadd.f32 %v3801, %v3820
      %v3824 = vadd.f32 %v3802, %v3820
      %v3825 = vadd.f32 %v3803, %v3820
      %v3826 = vadd.f32 %v3804, %v3820
      %v3827 = vadd.f32 %v3805, %v3820
      %v3828 = vadd.f32 %v3806, %v3820
      %v3829 = vadd.f32 %v3807, %v3820
      %v3830 = vadd.f32 %v3808, %v3820
      %v3831 = vadd.f32 %v3809, %v3820
      %v3832 = vadd.f32 %v3810, %v3820
      %v3833 = vadd.f32 %v3811, %v3820
      %v3834 = vadd.f32 %v3812, %v3820
      %v3835 = vadd.f32 %v3813, %v3820
      %v3836 = vadd.f32 %v3814, %v3820
      %v3837 = vadd.f32 %v3815, %v3820
      %vm3838 = vcmp.gt.f32.partialorder %v3822, 0.0
      %vm3839 = vcmp.gt.f32.partialorder %v3823, 0.0
      %vm3840 = vcmp.gt.f32.partialorder %v3824, 0.0
      %vm3841 = vcmp.gt.f32.partialorder %v3825, 0.0
      %vm3842 = vcmp.gt.f32.partialorder %v3826, 0.0
      %vm3843 = vcmp.gt.f32.partialorder %v3827, 0.0
      %vm3844 = vcmp.gt.f32.partialorder %v3828, 0.0
      %vm3845 = vcmp.gt.f32.partialorder %v3829, 0.0
      %vm3846 = vcmp.gt.f32.partialorder %v3830, 0.0
      %vm3847 = vcmp.gt.f32.partialorder %v3831, 0.0
      %vm3848 = vcmp.gt.f32.partialorder %v3832, 0.0
      %vm3849 = vcmp.gt.f32.partialorder %v3833, 0.0
      %vm3850 = vcmp.gt.f32.partialorder %v3834, 0.0
      %vm3851 = vcmp.gt.f32.partialorder %v3835, 0.0
      %vm3852 = vcmp.gt.f32.partialorder %v3836, 0.0
      %vm3853 = vcmp.gt.f32.partialorder %v3837, 0.0
      %v3854 = vmul.f32 %v3822, 0.01
      %v3855 = vmul.f32 %v3823, 0.01
      %v3856 = vmul.f32 %v3824, 0.01
      %v3857 = vmul.f32 %v3825, 0.01
      %v3858 = vmul.f32 %v3826, 0.01
      %v3859 = vmul.f32 %v3827, 0.01
      %v3860 = vmul.f32 %v3828, 0.01
      %v3861 = vmul.f32 %v3829, 0.01
      %v3862 = vmul.f32 %v3830, 0.01
      %v3863 = vmul.f32 %v3831, 0.01
      %v3864 = vmul.f32 %v3832, 0.01
      %v3865 = vmul.f32 %v3833, 0.01
      %v3866 = vmul.f32 %v3834, 0.01
      %v3867 = vmul.f32 %v3835, 0.01
      %v3868 = vmul.f32 %v3836, 0.01
      %v3869 = vmul.f32 %v3837, 0.01
      %v3870 = vsel %vm3838, %v3822, %v3854
      %v3871 = vsel %vm3839, %v3823, %v3855
      %v3872 = vsel %vm3840, %v3824, %v3856
      %v3873 = vsel %vm3841, %v3825, %v3857
      %v3874 = vsel %vm3842, %v3826, %v3858
      %v3875 = vsel %vm3843, %v3827, %v3859
      %v3876 = vsel %vm3844, %v3828, %v3860
      %v3877 = vsel %vm3845, %v3829, %v3861
      %v3878 = vsel %vm3846, %v3830, %v3862
      %v3879 = vsel %vm3847, %v3831, %v3863
      %v3880 = vsel %vm3848, %v3832, %v3864
      %v3881 = vsel %vm3849, %v3833, %v3865
      %v3882 = vsel %vm3850, %v3834, %v3866
      %v3883 = vsel %vm3851, %v3835, %v3867
      %v3884 = vsel %vm3852, %v3836, %v3868
      %v3885 = vsel %vm3853, %v3837, %v3869
      %3886 = vst.msk [vmem:[%s224] sm:$0xff] %vm2229, %v3870
      %3887 = vst.msk [vmem:[%s224 + $0x8] sm:$0xff] %vm2229, %v3871
      %3888 = vst.msk [vmem:[%s224 + $0x10] sm:$0xff] %vm2229, %v3872
      %3889 = vst.msk [vmem:[%s224 + $0x18] sm:$0xff] %vm2229, %v3873
      %3890 = vst.msk [vmem:[%s224 + $0x20] sm:$0xff] %vm2229, %v3874
      %3891 = vst.msk [vmem:[%s224 + $0x28] sm:$0xff] %vm2229, %v3875
      %3892 = vst.msk [vmem:[%s224 + $0x30] sm:$0xff] %vm2229, %v3876
      %3893 = vst.msk [vmem:[%s224 + $0x38] sm:$0xff] %vm2229, %v3877
      %3894 = vst.msk [vmem:[%s224 + $0x40] sm:$0xff] %vm2229, %v3878
      %3895 = vst.msk [vmem:[%s224 + $0x48] sm:$0xff] %vm2229, %v3879
      %3896 = vst.msk [vmem:[%s224 + $0x50] sm:$0xff] %vm2229, %v3880
      %3897 = vst.msk [vmem:[%s224 + $0x58] sm:$0xff] %vm2229, %v3881
      %3898 = vst.msk [vmem:[%s224 + $0x60] sm:$0xff] %vm2229, %v3882
      %3899 = vst.msk [vmem:[%s224 + $0x68] sm:$0xff] %vm2229, %v3883
      %3900 = vst.msk [vmem:[%s224 + $0x70] sm:$0xff] %vm2229, %v3884
      %3901 = vst.msk [vmem:[%s224 + $0x78] sm:$0xff] %vm2229, %v3885
      %p3902 = scmp.lt.s32.totalorder %s16, 1
      %s3903 = scalar_select %p3902, %s16, 1
      %s3904 = smul.addr %s3903, 16
      %s3905 = smul.addr %s3904, 8
      %s3906 = scalar_lea.vmem %s5, %s3905
      // Predicated region
      $region41: #{tpu_custom_call.1} parent=39 // pred_check
        %p3907 = pneg %p144
      $region42: #{tpu_custom_call.1} parent=39 // pred_check_branch
        %3909 = sbr.rel (%p3907) target = $region44
      $region43: #{tpu_custom_call.1} parent=39 // pred_region
        _
      $region44: #{tpu_custom_call.1} parent=39 // pred_fallthru
        _
    $region40: #{tpu_custom_call.1} parent=5 // pred_fallthru
      _
    %p3910 = scmp.le.s32.totalorder 2, %s11
    // Predicated region
    $region45: #{tpu_custom_call.1} parent=5 // pred_check
      %p3911 = pneg %p3910
    $region46: #{tpu_custom_call.1} parent=5 // pred_check_branch
      %3913 = sbr.rel (%p3911) target = $region48
    $region47: #{tpu_custom_call.1} parent=5 // pred_region
      %s3914 = ssub.s32 %s11, 2
      // Predicated region
      $region49: #{tpu_custom_call.1} parent=47 // pred_check
        %p3915 = pneg %p150
      $region50: #{tpu_custom_call.1} parent=47 // pred_check_branch
        %3917 = sbr.rel (%p3915) target = $region52
      $region51: #{tpu_custom_call.1} parent=47 // pred_region
        %p3918 = scmp.lt.s32.totalorder %s17, 1
        %s3919 = scalar_select %p3918, %s17, 1
        %s3920 = smul.addr %s3919, 16
        %s3921 = smul.addr %s3920, 8
        %s3922 = scalar_lea.vmem %s5, %s3921
      $region52: #{tpu_custom_call.1} parent=47 // pred_fallthru
        _
    $region48: #{tpu_custom_call.1} parent=5 // pred_fallthru
      _
  $region6: #{tpu_custom_call.1} parent=0 // loop_footer
    %s15 = sadd.s32 1, %s11
  $region7: #{tpu_custom_call.1} parent=0 // loop_footer_branch
    %10 = sbr.rel target = $region3
  $region8: #{tpu_custom_call.1} parent=0 // loop_exit
    _

</llo_original>
